<compile_context>
chip_gen: v5e
topology: v5e:2x2
jax: 0.10.0
libtpu: 0.0.40
codegen_flags: <defaults>
</compile_context>

<pallas_src>
import functools

import jax
import jax.numpy as jnp
from jax import lax
from jax.experimental import pallas as pl
from jax.experimental.pallas import tpu as pltpu


# ------------------------------- fused kernel -------------------------------- #

def _rfb_kernel(x_ref, we_ref, be_ref, *rest, H, W, inter, configs):
    """Entire BasicRFB_a forward for one batch element, channel-major (C, H*W).

    x_ref : (1, Cin, H*W)
    we/be : fused entry 1x1 convs (4 branch entries + shortcut), BN scale folded in.
    rest  : 5 x (w (K, Cg_out, Cg_in), b (Cg_out, 1)) spatial convs,
            then (w_lin, b_lin), then o_ref (1, Cout, H*W).
    """
    n_sp = len(configs)
    sp_refs = rest[:2 * n_sp]
    wl_ref, bl_ref, o_ref = rest[2 * n_sp:]
    HW = H * W

    # index vectors for the conv border masks (computed once per grid step).
    i_flat = lax.broadcasted_iota(jnp.int32, (1, HW), 1)
    if (W & (W - 1)) == 0:                       # power-of-two W: cheap column index
        col_idx = jnp.bitwise_and(i_flat, W - 1)
    else:                                        # TODO(synk): slower generic path
        col_idx = i_flat % W

    def spatial_conv(x_cm, li):
        """KHxKW conv (stride 1, zero pad, dilation) + bias + optional ReLU.
        x_cm: (Cg_in, HW) channel-major; taps are lane rolls + border masks, so no
        padded scratch and no per-tap slice/reshape copies."""
        KH, KW, ph, pw, dh, dw, relu = configs[li]
        w_ref = sp_refs[2 * li]                  # (KH*KW, Cg_out, Cg_in), scale folded
        b_ref = sp_refs[2 * li + 1]              # (Cg_out, 1)
        acc = jnp.zeros((w_ref.shape[1], HW), jnp.float32)
        for kh in range(KH):
            for kw in range(KW):
                dy = kh * dh - ph
                dx = kw * dw - pw
                shift = dy * W + dx
                tap = x_cm if shift == 0 else pltpu.roll(
                    x_cm, shift=(-shift) % HW, axis=1)
                terms = []
                if dy > 0:
                    terms.append(i_flat < (H - dy) * W)
                elif dy < 0:
                    terms.append(i_flat >= (-dy) * W)
                if dx > 0:
                    terms.append(col_idx < (W - dx))
                elif dx < 0:
                    terms.append(col_idx >= (-dx))
                if terms:
                    m = terms[0]
                    for t_ in terms[1:]:
                        m = jnp.logical_and(m, t_)
                    tap = jnp.where(m, tap, 0.0)
                acc = acc + jnp.dot(w_ref[kh * KW + kw], tap,
                                    preferred_element_type=jnp.float32)
        y = acc + b_ref[...]
        return jnp.maximum(y, 0.0) if relu else y

    # ---- all five 1x1 convs that read x (branch entries + shortcut): one matmul ----
    x2d = x_ref[0]                                               # (Cin, HW)
    y = jnp.dot(we_ref[...], x2d, preferred_element_type=jnp.float32) + be_ref[...]
    nb = 4 * inter
    t = jnp.maximum(y[:nb, :], 0.0)                              # branch entries (ReLU)
    short = y[nb:, :]                                            # shortcut (no ReLU)

    t0 = t[0 * inter:1 * inter]
    t1 = t[1 * inter:2 * inter]
    t23 = t[2 * inter:4 * inter]                                 # [t2 ; t3] (aligned)

    # ---- branch towers; same-config convs fused via block-diagonal weights ----
    u_a = spatial_conv(t23, 0)                                   # 1x3 p(0,1): [u2 ; u3a]
    u2, u3a = u_a[:inter], u_a[inter:]
    u_b = spatial_conv(jnp.concatenate([t1, u3a], axis=0), 1)    # 3x1 p(1,0): [u1 ; u3b]
    u1, u3b = u_b[:inter], u_b[inter:]
    b12 = spatial_conv(jnp.concatenate([u1, u2], axis=0), 2)     # 3x3 p3 d3 : [b1 ; b2]
    b0 = spatial_conv(t0, 3)                                     # 3x3 p1    : b0
    b3 = spatial_conv(u3b, 4)                                     # 3x3 p5 d5 : b3

    # ---- ConvLinear over the virtual concat (single K=4*inter matmul); residual
    #      `scale` pre-folded into (w_lin, b_lin); shortcut add + final ReLU fused. ----
    bcat = jnp.concatenate([b0, b12, b3], axis=0)                # (4*inter, HW)
    out = jnp.dot(wl_ref[...], bcat, preferred_element_type=jnp.float32)
    o_ref[0] = jnp.maximum(out + bl_ref[...] + short, 0.0)       # (Cout, HW) lane-dense


def _const_spec(arr):
    nd = arr.ndim
    return pl.BlockSpec(arr.shape, lambda n, _nd=nd: (0,) * _nd)


def rfb_forward(x_nchw, packed):
    N, cin, H, W = x_nchw.shape
    inter = packed['inter']
    cout = packed['out_planes']
    sp = packed['sp']
    configs = tuple(cfg for (_, _, cfg) in sp)
    HW = H * W

    x_flat = x_nchw.reshape(N, cin, HW)        # NCHW -> (N, Cin, H*W): pure reshape

    flat = [packed['w_ent'], packed['b_ent']]
    for (w, b, _) in sp:
        flat += [w, b]
    flat += [packed['w_lin'], packed['b_lin']]

    kern = functools.partial(_rfb_kernel, H=H, W=W, inter=inter, configs=configs)

    out = pl.pallas_call(
        kern,
        out_shape=jax.ShapeDtypeStruct((N, cout, HW), jnp.float32),
        grid=(N,),
        in_specs=[pl.BlockSpec((1, cin, HW), lambda n: (n, 0, 0))]
                 + [_const_spec(a) for a in flat],
        out_specs=pl.BlockSpec((1, cout, HW), lambda n: (n, 0, 0)),
        compiler_params=pltpu.CompilerParams(dimension_semantics=("parallel",)),
    )(x_flat, *flat)
    return out.reshape(N, cout, H, W)          # (N, C, H*W) -> NCHW, pure reshape


# -------------------------------- parameters --------------------------------- #

def conv_bn_params(key, cin, cout, kh, kw):
    """Deterministic synthetic Conv2d weight + folded BatchNorm2d (eps=1e-5)."""
    k1, k2, k3, k4, k5 = jax.random.split(key, 5)
    w = jax.random.normal(k1, (kh, kw, cin, cout), jnp.float32) * 0.1
    gamma = jax.random.uniform(k2, (cout,), jnp.float32, 0.5, 1.5)
    beta = jax.random.normal(k3, (cout,), jnp.float32) * 0.1
    mean = jax.random.normal(k4, (cout,), jnp.float32) * 0.1
    var = jax.random.uniform(k5, (cout,), jnp.float32, 0.5, 1.5)
    eps = 1e-5
    s = gamma * lax.rsqrt(var + eps)
    b = beta - mean * s
    return {'w': w.reshape(kh * kw, cin, cout),
            'scale': s.reshape(1, cout),
            'bias': b.reshape(1, cout),
            'kh': kh, 'kw': kw}


def init_rfb(key, in_planes, out_planes):
    inter = in_planes // 4
    ks = jax.random.split(key, 14)
    cb = conv_bn_params
    # each entry: (params, padding, dilation, relu)
    return {
        'branch0': [
            (cb(ks[0], in_planes, inter, 1, 1), (0, 0), (1, 1), True),
            (cb(ks[1], inter, inter, 3, 3), (1, 1), (1, 1), False),
        ],
        'branch1': [
            (cb(ks[2], in_planes, inter, 1, 1), (0, 0), (1, 1), True),
            (cb(ks[3], inter, inter, 3, 1), (1, 0), (1, 1), True),
            (cb(ks[4], inter, inter, 3, 3), (3, 3), (3, 3), False),
        ],
        'branch2': [
            (cb(ks[5], in_planes, inter, 1, 1), (0, 0), (1, 1), True),
            (cb(ks[6], inter, inter, 1, 3), (0, 1), (1, 1), True),
            (cb(ks[7], inter, inter, 3, 3), (3, 3), (3, 3), False),
        ],
        'branch3': [
            (cb(ks[8], in_planes, inter // 2, 1, 1), (0, 0), (1, 1), True),
            (cb(ks[9], inter // 2, (inter // 4) * 3, 1, 3), (0, 1), (1, 1), True),
            (cb(ks[10], (inter // 4) * 3, inter, 3, 1), (1, 0), (1, 1), True),
            (cb(ks[11], inter, inter, 3, 3), (5, 5), (5, 5), False),
        ],
        'convlinear': [(cb(ks[12], 4 * inter, out_planes, 1, 1), (0, 0), (1, 1), False)],
        'shortcut': [(cb(ks[13], in_planes, out_planes, 1, 1), (0, 0), (1, 1), False)],
    }


def _fold_bn_transpose(p, cin_pad, cout_pad):
    """Fold BN scale into the conv weight, flip to (K, Cout, Cin), zero-pad channels."""
    w = p['w'] * p['scale'][0][None, None, :]            # (K, Cin, Cout)
    wT = jnp.transpose(w, (0, 2, 1))                     # (K, Cout, Cin)
    cout, cin = wT.shape[1], wT.shape[2]
    wT = jnp.pad(wT, ((0, 0), (0, cout_pad - cout), (0, cin_pad - cin)))
    b = jnp.pad(p['bias'][0], (0, cout_pad - cout)).reshape(cout_pad, 1)
    return wT, b


def pack_params(params, in_planes, out_planes, scale):
    """Build the fused / channel-padded, channel-major arrays for the Pallas kernel."""
    inter = in_planes // 4

    # fused entry: branch0..3 first 1x1 convs + shortcut; branch Cout padded to `inter`.
    ent = [params['branch0'][0], params['branch1'][0], params['branch2'][0],
           params['branch3'][0], params['shortcut'][0]]
    ws, bs = [], []
    for idx, (p, _pad, _dil, _relu) in enumerate(ent):
        cout_pad = inter if idx < 4 else out_planes
        wT, b = _fold_bn_transpose(p, in_planes, cout_pad)
        ws.append(wT[0])
        bs.append(b)
    w_ent = jnp.concatenate(ws, axis=0)                  # (4*inter + out_planes, Cin)
    b_ent = jnp.concatenate(bs, axis=0)                  # (4*inter + out_planes, 1)

    def cfg_of(p, pad, dil, relu):
        return (p['kh'], p['kw'], pad[0], pad[1], dil[0], dil[1], relu)

    def single(layer):
        p, pad, dil, relu = layer
        w, b = _fold_bn_transpose(p, inter, inter)
        return (w, b, cfg_of(p, pad, dil, relu))

    def fuse_pair(layer_a, layer_b):
        """Two same-config convs -> one 2*inter-channel conv with block-diag weights."""
        (pa, pad_a, dil_a, relu_a) = layer_a
        (pb, pad_b, dil_b, relu_b) = layer_b
        assert (pa['kh'], pa['kw'], pad_a, dil_a, relu_a) == \
               (pb['kh'], pb['kw'], pad_b, dil_b, relu_b)
        wa, ba = _fold_bn_transpose(pa, inter, inter)
        wb, bb = _fold_bn_transpose(pb, inter, inter)
        z = jnp.zeros_like(wa)
        w = jnp.concatenate([jnp.concatenate([wa, z], axis=2),
                             jnp.concatenate([z, wb], axis=2)], axis=1)
        b = jnp.concatenate([ba, bb], axis=0)
        return (w, b, cfg_of(pa, pad_a, dil_a, relu_a))

    sp = [
        fuse_pair(params['branch2'][1], params['branch3'][1]),  # 1x3 p(0,1) relu: [t2;t3]
        fuse_pair(params['branch1'][1], params['branch3'][2]),  # 3x1 p(1,0) relu: [t1;u3a]
        fuse_pair(params['branch1'][2], params['branch2'][2]),  # 3x3 p3 d3      : [u1;u2]
        single(params['branch0'][1]),                           # 3x3 p1         : t0
        single(params['branch3'][3]),                           # 3x3 p5 d5      : u3b
    ]

    # ConvLinear with the residual `scale` folded into its folded-BN affine.
    plin = params['convlinear'][0][0]
    w_lin = jnp.transpose(plin['w'][0] * (plin['scale'][0] * scale)[None, :], (1, 0))
    b_lin = (plin['bias'][0] * scale).reshape(out_planes, 1)

    return dict(w_ent=w_ent, b_ent=b_ent, sp=sp, w_lin=w_lin, b_lin=b_lin,
                inter=inter, out_planes=out_planes)


# -------------------------- pure-JAX reference (check) ------------------------ #

def _ref_conv_bn(x, p, padding, dilation, relu):
    KH, KW = p['kh'], p['kw']
    Cin, Cout = p['w'].shape[1], p['w'].shape[2]
    w = p['w'].reshape(KH, KW, Cin, Cout)
    y = lax.conv_general_dilated(
        x, w, window_strides=(1, 1),
        padding=((padding[0], padding[0]), (padding[1], padding[1])),
        rhs_dilation=dilation,
        dimension_numbers=('NHWC', 'HWIO', 'NHWC'))
    y = y * p['scale'].reshape(1, 1, 1, Cout) + p['bias'].reshape(1, 1, 1, Cout)
    return jnp.maximum(y, 0.0) if relu else y


def _run_seq(x, layers):
    for (p, pad, dil, relu) in layers:
        x = _ref_conv_bn(x, p, pad, dil, relu)
    return x


def rfb_reference(x_nchw, params, scale=0.1):
    x = jnp.transpose(x_nchw, (0, 2, 3, 1))
    x0 = _run_seq(x, params['branch0'])
    x1 = _run_seq(x, params['branch1'])
    x2 = _run_seq(x, params['branch2'])
    x3 = _run_seq(x, params['branch3'])
    out = jnp.concatenate([x0, x1, x2, x3], axis=-1)
    out = _run_seq(out, params['convlinear'])
    short = _run_seq(x, params['shortcut'])
    out = jnp.maximum(out * scale + short, 0.0)
    return jnp.transpose(out, (0, 3, 1, 2))


# ------------------------------------ main ------------------------------------ #

if __name__ == "__main__":
    key = jax.random.PRNGKey(0)
    kx, kp = jax.random.split(key)

    N, C, H, W = 2, 16, 16, 16          # in_planes=16 -> inter_planes=4
    out_planes = 16
    scale = 0.1

    x = jax.random.normal(kx, (N, C, H, W), jnp.float32)
    params = init_rfb(kp, C, out_planes)
    packed = pack_params(params, C, out_planes, scale)

    out = jax.block_until_ready(rfb_forward(x, packed))
    assert out.shape == (N, out_planes, H, W), out.shape

    ref = rfb_reference(x, params, scale=scale)
    assert bool(jnp.allclose(out, ref, atol=1e-3, rtol=1e-3)), "mismatch vs JAX reference"

    print("KERNEL_OK")
</pallas_src>

<mosaic_0001>
module attributes {stable_mosaic.version = 11 : i64} {
  func.func @_rfb_kernel(%arg0: i32, %arg1: memref<1x16x256xf32, #tpu.memory_space<vmem>>, %arg2: memref<32x16xf32, #tpu.memory_space<vmem>>, %arg3: memref<32x1xf32, #tpu.memory_space<vmem>>, %arg4: memref<3x8x8xf32, #tpu.memory_space<vmem>>, %arg5: memref<8x1xf32, #tpu.memory_space<vmem>>, %arg6: memref<3x8x8xf32, #tpu.memory_space<vmem>>, %arg7: memref<8x1xf32, #tpu.memory_space<vmem>>, %arg8: memref<9x8x8xf32, #tpu.memory_space<vmem>>, %arg9: memref<8x1xf32, #tpu.memory_space<vmem>>, %arg10: memref<9x4x4xf32, #tpu.memory_space<vmem>>, %arg11: memref<4x1xf32, #tpu.memory_space<vmem>>, %arg12: memref<9x4x4xf32, #tpu.memory_space<vmem>>, %arg13: memref<4x1xf32, #tpu.memory_space<vmem>>, %arg14: memref<16x16xf32, #tpu.memory_space<vmem>>, %arg15: memref<16x1xf32, #tpu.memory_space<vmem>>, %arg16: memref<1x16x256xf32, #tpu.memory_space<vmem>>) attributes {dimension_semantics = [#tpu.dimension_semantics<parallel>], iteration_bounds = array<i64: 2>, scalar_prefetch = 0 : i64, scratch_operands = 0 : i64, tpu.core_type = #tpu.core_type<tc>, window_params = [{transform_indices = @transform_0, window_bounds = array<i64: 1, 16, 256>}, {pipeline_mode = #tpu.pipeline_mode<synchronous>, transform_indices = @transform_1, window_bounds = array<i64: 32, 16>}, {pipeline_mode = #tpu.pipeline_mode<synchronous>, transform_indices = @transform_2, window_bounds = array<i64: 32, 1>}, {pipeline_mode = #tpu.pipeline_mode<synchronous>, transform_indices = @transform_3, window_bounds = array<i64: 3, 8, 8>}, {pipeline_mode = #tpu.pipeline_mode<synchronous>, transform_indices = @transform_4, window_bounds = array<i64: 8, 1>}, {pipeline_mode = #tpu.pipeline_mode<synchronous>, transform_indices = @transform_5, window_bounds = array<i64: 3, 8, 8>}, {pipeline_mode = #tpu.pipeline_mode<synchronous>, transform_indices = @transform_6, window_bounds = array<i64: 8, 1>}, {pipeline_mode = #tpu.pipeline_mode<synchronous>, transform_indices = @transform_7, window_bounds = array<i64: 9, 8, 8>}, {pipeline_mode = #tpu.pipeline_mode<synchronous>, transform_indices = @transform_8, window_bounds = array<i64: 8, 1>}, {pipeline_mode = #tpu.pipeline_mode<synchronous>, transform_indices = @transform_9, window_bounds = array<i64: 9, 4, 4>}, {pipeline_mode = #tpu.pipeline_mode<synchronous>, transform_indices = @transform_10, window_bounds = array<i64: 4, 1>}, {pipeline_mode = #tpu.pipeline_mode<synchronous>, transform_indices = @transform_11, window_bounds = array<i64: 9, 4, 4>}, {pipeline_mode = #tpu.pipeline_mode<synchronous>, transform_indices = @transform_12, window_bounds = array<i64: 4, 1>}, {pipeline_mode = #tpu.pipeline_mode<synchronous>, transform_indices = @transform_13, window_bounds = array<i64: 16, 16>}, {pipeline_mode = #tpu.pipeline_mode<synchronous>, transform_indices = @transform_14, window_bounds = array<i64: 16, 1>}, {transform_indices = @transform_15, window_bounds = array<i64: 1, 16, 256>}]} {
    %0 = tpu.iota {dimensions = array<i32: 1>} : vector<1x256xi32>
    %c15_i32 = arith.constant 15 : i32
    %1 = vector.broadcast %c15_i32 : i32 to vector<1x256xi32>
    %2 = arith.andi %0, %1 : vector<1x256xi32>
    %c0 = arith.constant 0 : index
    %c0_0 = arith.constant 0 : index
    %c0_1 = arith.constant 0 : index
    %3 = vector.load %arg1[%c0, %c0_0, %c0_1] : memref<1x16x256xf32, #tpu.memory_space<vmem>>, vector<1x16x256xf32>
    %4 = vector.shape_cast %3 : vector<1x16x256xf32> to vector<16x256xf32>
    %c0_2 = arith.constant 0 : index
    %c0_3 = arith.constant 0 : index
    %5 = vector.load %arg2[%c0_2, %c0_3] : memref<32x16xf32, #tpu.memory_space<vmem>>, vector<32x16xf32>
    %cst = arith.constant dense<0.000000e+00> : vector<32x256xf32>
    %6 = tpu.matmul %5, %4, %cst {dimension_numbers = #tpu.dot_dimension_numbers<[1], [0], [0], [1], [0, 0, 1, 1], [], []>} : vector<32x16xf32>, vector<16x256xf32>, vector<32x256xf32> -> vector<32x256xf32>
    %c0_4 = arith.constant 0 : index
    %c0_5 = arith.constant 0 : index
    %7 = vector.load %arg3[%c0_4, %c0_5] : memref<32x1xf32, #tpu.memory_space<vmem>>, vector<32x1xf32>
    %8 = vector.broadcast %7 : vector<32x1xf32> to vector<32x256xf32>
    %9 = arith.addf %6, %8 : vector<32x256xf32>
    %10 = vector.extract_strided_slice %9 {offsets = [0, 0], sizes = [16, 256], strides = [1, 1]} : vector<32x256xf32> to vector<16x256xf32>
    %cst_6 = arith.constant 0.000000e+00 : f32
    %11 = vector.broadcast %cst_6 : f32 to vector<16x256xf32>
    %12 = arith.maximumf %10, %11 : vector<16x256xf32>
    %13 = vector.extract_strided_slice %9 {offsets = [16, 0], sizes = [16, 256], strides = [1, 1]} : vector<32x256xf32> to vector<16x256xf32>
    %14 = vector.extract_strided_slice %12 {offsets = [0, 0], sizes = [4, 256], strides = [1, 1]} : vector<16x256xf32> to vector<4x256xf32>
    %15 = vector.extract_strided_slice %12 {offsets = [4, 0], sizes = [4, 256], strides = [1, 1]} : vector<16x256xf32> to vector<4x256xf32>
    %16 = vector.extract_strided_slice %12 {offsets = [8, 0], sizes = [8, 256], strides = [1, 1]} : vector<16x256xf32> to vector<8x256xf32>
    %cst_7 = arith.constant 0.000000e+00 : f32
    %17 = vector.broadcast %cst_7 : f32 to vector<8x256xf32>
    %c1_i32 = arith.constant 1 : i32
    %18 = tpu.dynamic_rotate %16 by %c1_i32 dim 1 : vector<8x256xf32>, i32 -> vector<8x256xf32>
    %c1_i32_8 = arith.constant 1 : i32
    %19 = vector.broadcast %c1_i32_8 : i32 to vector<1x256xi32>
    %20 = arith.cmpi sge, %2, %19 : vector<1x256xi32>
    %cst_9 = arith.constant 0.000000e+00 : f32
    %21 = vector.shape_cast %20 : vector<1x256xi1> to vector<1x256xi1>
    %22 = vector.broadcast %21 : vector<1x256xi1> to vector<8x256xi1>
    %23 = vector.broadcast %cst_9 : f32 to vector<8x256xf32>
    %24 = arith.select %22, %18, %23 : vector<8x256xi1>, vector<8x256xf32>
    %c0_10 = arith.constant 0 : index
    %c0_11 = arith.constant 0 : index
    %c0_12 = arith.constant 0 : index
    %25 = vector.load %arg4[%c0_10, %c0_11, %c0_12] : memref<3x8x8xf32, #tpu.memory_space<vmem>>, vector<1x8x8xf32>
    %26 = vector.shape_cast %25 : vector<1x8x8xf32> to vector<8x8xf32>
    %cst_13 = arith.constant dense<0.000000e+00> : vector<8x256xf32>
    %27 = tpu.matmul %26, %24, %cst_13 {dimension_numbers = #tpu.dot_dimension_numbers<[1], [0], [0], [1], [0, 0, 1, 1], [], []>} : vector<8x8xf32>, vector<8x256xf32>, vector<8x256xf32> -> vector<8x256xf32>
    %28 = arith.addf %17, %27 : vector<8x256xf32>
    %c1 = arith.constant 1 : index
    %c0_14 = arith.constant 0 : index
    %c0_15 = arith.constant 0 : index
    %29 = vector.load %arg4[%c1, %c0_14, %c0_15] : memref<3x8x8xf32, #tpu.memory_space<vmem>>, vector<1x8x8xf32>
    %30 = vector.shape_cast %29 : vector<1x8x8xf32> to vector<8x8xf32>
    %cst_16 = arith.constant dense<0.000000e+00> : vector<8x256xf32>
    %31 = tpu.matmul %30, %16, %cst_16 {dimension_numbers = #tpu.dot_dimension_numbers<[1], [0], [0], [1], [0, 0, 1, 1], [], []>} : vector<8x8xf32>, vector<8x256xf32>, vector<8x256xf32> -> vector<8x256xf32>
    %32 = arith.addf %28, %31 : vector<8x256xf32>
    %c255_i32 = arith.constant 255 : i32
    %33 = tpu.dynamic_rotate %16 by %c255_i32 dim 1 : vector<8x256xf32>, i32 -> vector<8x256xf32>
    %c15_i32_17 = arith.constant 15 : i32
    %34 = vector.broadcast %c15_i32_17 : i32 to vector<1x256xi32>
    %35 = arith.cmpi slt, %2, %34 : vector<1x256xi32>
    %cst_18 = arith.constant 0.000000e+00 : f32
    %36 = vector.shape_cast %35 : vector<1x256xi1> to vector<1x256xi1>
    %37 = vector.broadcast %36 : vector<1x256xi1> to vector<8x256xi1>
    %38 = vector.broadcast %cst_18 : f32 to vector<8x256xf32>
    %39 = arith.select %37, %33, %38 : vector<8x256xi1>, vector<8x256xf32>
    %c2 = arith.constant 2 : index
    %c0_19 = arith.constant 0 : index
    %c0_20 = arith.constant 0 : index
    %40 = vector.load %arg4[%c2, %c0_19, %c0_20] : memref<3x8x8xf32, #tpu.memory_space<vmem>>, vector<1x8x8xf32>
    %41 = vector.shape_cast %40 : vector<1x8x8xf32> to vector<8x8xf32>
    %cst_21 = arith.constant dense<0.000000e+00> : vector<8x256xf32>
    %42 = tpu.matmul %41, %39, %cst_21 {dimension_numbers = #tpu.dot_dimension_numbers<[1], [0], [0], [1], [0, 0, 1, 1], [], []>} : vector<8x8xf32>, vector<8x256xf32>, vector<8x256xf32> -> vector<8x256xf32>
    %43 = arith.addf %32, %42 : vector<8x256xf32>
    %c0_22 = arith.constant 0 : index
    %c0_23 = arith.constant 0 : index
    %44 = vector.load %arg5[%c0_22, %c0_23] : memref<8x1xf32, #tpu.memory_space<vmem>>, vector<8x1xf32>
    %45 = vector.broadcast %44 : vector<8x1xf32> to vector<8x256xf32>
    %46 = arith.addf %43, %45 : vector<8x256xf32>
    %cst_24 = arith.constant 0.000000e+00 : f32
    %47 = vector.broadcast %cst_24 : f32 to vector<8x256xf32>
    %48 = arith.maximumf %46, %47 : vector<8x256xf32>
    %49 = vector.extract_strided_slice %48 {offsets = [0, 0], sizes = [4, 256], strides = [1, 1]} : vector<8x256xf32> to vector<4x256xf32>
    %50 = vector.extract_strided_slice %48 {offsets = [4, 0], sizes = [4, 256], strides = [1, 1]} : vector<8x256xf32> to vector<4x256xf32>
    %51 = tpu.concatenate %15, %50 in 0 : vector<4x256xf32>, vector<4x256xf32> -> vector<8x256xf32>
    %cst_25 = arith.constant 0.000000e+00 : f32
    %52 = vector.broadcast %cst_25 : f32 to vector<8x256xf32>
    %c16_i32 = arith.constant 16 : i32
    %53 = tpu.dynamic_rotate %51 by %c16_i32 dim 1 : vector<8x256xf32>, i32 -> vector<8x256xf32>
    %c16_i32_26 = arith.constant 16 : i32
    %54 = vector.broadcast %c16_i32_26 : i32 to vector<1x256xi32>
    %55 = arith.cmpi sge, %0, %54 : vector<1x256xi32>
    %cst_27 = arith.constant 0.000000e+00 : f32
    %56 = vector.shape_cast %55 : vector<1x256xi1> to vector<1x256xi1>
    %57 = vector.broadcast %56 : vector<1x256xi1> to vector<8x256xi1>
    %58 = vector.broadcast %cst_27 : f32 to vector<8x256xf32>
    %59 = arith.select %57, %53, %58 : vector<8x256xi1>, vector<8x256xf32>
    %c0_28 = arith.constant 0 : index
    %c0_29 = arith.constant 0 : index
    %c0_30 = arith.constant 0 : index
    %60 = vector.load %arg6[%c0_28, %c0_29, %c0_30] : memref<3x8x8xf32, #tpu.memory_space<vmem>>, vector<1x8x8xf32>
    %61 = vector.shape_cast %60 : vector<1x8x8xf32> to vector<8x8xf32>
    %cst_31 = arith.constant dense<0.000000e+00> : vector<8x256xf32>
    %62 = tpu.matmul %61, %59, %cst_31 {dimension_numbers = #tpu.dot_dimension_numbers<[1], [0], [0], [1], [0, 0, 1, 1], [], []>} : vector<8x8xf32>, vector<8x256xf32>, vector<8x256xf32> -> vector<8x256xf32>
    %63 = arith.addf %52, %62 : vector<8x256xf32>
    %c1_32 = arith.constant 1 : index
    %c0_33 = arith.constant 0 : index
    %c0_34 = arith.constant 0 : index
    %64 = vector.load %arg6[%c1_32, %c0_33, %c0_34] : memref<3x8x8xf32, #tpu.memory_space<vmem>>, vector<1x8x8xf32>
    %65 = vector.shape_cast %64 : vector<1x8x8xf32> to vector<8x8xf32>
    %cst_35 = arith.constant dense<0.000000e+00> : vector<8x256xf32>
    %66 = tpu.matmul %65, %51, %cst_35 {dimension_numbers = #tpu.dot_dimension_numbers<[1], [0], [0], [1], [0, 0, 1, 1], [], []>} : vector<8x8xf32>, vector<8x256xf32>, vector<8x256xf32> -> vector<8x256xf32>
    %67 = arith.addf %63, %66 : vector<8x256xf32>
    %c240_i32 = arith.constant 240 : i32
    %68 = tpu.dynamic_rotate %51 by %c240_i32 dim 1 : vector<8x256xf32>, i32 -> vector<8x256xf32>
    %c240_i32_36 = arith.constant 240 : i32
    %69 = vector.broadcast %c240_i32_36 : i32 to vector<1x256xi32>
    %70 = arith.cmpi slt, %0, %69 : vector<1x256xi32>
    %cst_37 = arith.constant 0.000000e+00 : f32
    %71 = vector.shape_cast %70 : vector<1x256xi1> to vector<1x256xi1>
    %72 = vector.broadcast %71 : vector<1x256xi1> to vector<8x256xi1>
    %73 = vector.broadcast %cst_37 : f32 to vector<8x256xf32>
    %74 = arith.select %72, %68, %73 : vector<8x256xi1>, vector<8x256xf32>
    %c2_38 = arith.constant 2 : index
    %c0_39 = arith.constant 0 : index
    %c0_40 = arith.constant 0 : index
    %75 = vector.load %arg6[%c2_38, %c0_39, %c0_40] : memref<3x8x8xf32, #tpu.memory_space<vmem>>, vector<1x8x8xf32>
    %76 = vector.shape_cast %75 : vector<1x8x8xf32> to vector<8x8xf32>
    %cst_41 = arith.constant dense<0.000000e+00> : vector<8x256xf32>
    %77 = tpu.matmul %76, %74, %cst_41 {dimension_numbers = #tpu.dot_dimension_numbers<[1], [0], [0], [1], [0, 0, 1, 1], [], []>} : vector<8x8xf32>, vector<8x256xf32>, vector<8x256xf32> -> vector<8x256xf32>
    %78 = arith.addf %67, %77 : vector<8x256xf32>
    %c0_42 = arith.constant 0 : index
    %c0_43 = arith.constant 0 : index
    %79 = vector.load %arg7[%c0_42, %c0_43] : memref<8x1xf32, #tpu.memory_space<vmem>>, vector<8x1xf32>
    %80 = vector.broadcast %79 : vector<8x1xf32> to vector<8x256xf32>
    %81 = arith.addf %78, %80 : vector<8x256xf32>
    %cst_44 = arith.constant 0.000000e+00 : f32
    %82 = vector.broadcast %cst_44 : f32 to vector<8x256xf32>
    %83 = arith.maximumf %81, %82 : vector<8x256xf32>
    %84 = vector.extract_strided_slice %83 {offsets = [0, 0], sizes = [4, 256], strides = [1, 1]} : vector<8x256xf32> to vector<4x256xf32>
    %85 = vector.extract_strided_slice %83 {offsets = [4, 0], sizes = [4, 256], strides = [1, 1]} : vector<8x256xf32> to vector<4x256xf32>
    %86 = tpu.concatenate %84, %49 in 0 : vector<4x256xf32>, vector<4x256xf32> -> vector<8x256xf32>
    %cst_45 = arith.constant 0.000000e+00 : f32
    %87 = vector.broadcast %cst_45 : f32 to vector<8x256xf32>
    %c51_i32 = arith.constant 51 : i32
    %88 = tpu.dynamic_rotate %86 by %c51_i32 dim 1 : vector<8x256xf32>, i32 -> vector<8x256xf32>
    %c48_i32 = arith.constant 48 : i32
    %89 = vector.broadcast %c48_i32 : i32 to vector<1x256xi32>
    %90 = arith.cmpi sge, %0, %89 : vector<1x256xi32>
    %c3_i32 = arith.constant 3 : i32
    %91 = vector.broadcast %c3_i32 : i32 to vector<1x256xi32>
    %92 = arith.cmpi sge, %2, %91 : vector<1x256xi32>
    %93 = arith.andi %90, %92 : vector<1x256xi1>
    %cst_46 = arith.constant 0.000000e+00 : f32
    %94 = vector.shape_cast %93 : vector<1x256xi1> to vector<1x256xi1>
    %95 = vector.broadcast %94 : vector<1x256xi1> to vector<8x256xi1>
    %96 = vector.broadcast %cst_46 : f32 to vector<8x256xf32>
    %97 = arith.select %95, %88, %96 : vector<8x256xi1>, vector<8x256xf32>
    %c0_47 = arith.constant 0 : index
    %c0_48 = arith.constant 0 : index
    %c0_49 = arith.constant 0 : index
    %98 = vector.load %arg8[%c0_47, %c0_48, %c0_49] : memref<9x8x8xf32, #tpu.memory_space<vmem>>, vector<1x8x8xf32>
    %99 = vector.shape_cast %98 : vector<1x8x8xf32> to vector<8x8xf32>
    %cst_50 = arith.constant dense<0.000000e+00> : vector<8x256xf32>
    %100 = tpu.matmul %99, %97, %cst_50 {dimension_numbers = #tpu.dot_dimension_numbers<[1], [0], [0], [1], [0, 0, 1, 1], [], []>} : vector<8x8xf32>, vector<8x256xf32>, vector<8x256xf32> -> vector<8x256xf32>
    %101 = arith.addf %87, %100 : vector<8x256xf32>
    %c48_i32_51 = arith.constant 48 : i32
    %102 = tpu.dynamic_rotate %86 by %c48_i32_51 dim 1 : vector<8x256xf32>, i32 -> vector<8x256xf32>
    %c48_i32_52 = arith.constant 48 : i32
    %103 = vector.broadcast %c48_i32_52 : i32 to vector<1x256xi32>
    %104 = arith.cmpi sge, %0, %103 : vector<1x256xi32>
    %cst_53 = arith.constant 0.000000e+00 : f32
    %105 = vector.shape_cast %104 : vector<1x256xi1> to vector<1x256xi1>
    %106 = vector.broadcast %105 : vector<1x256xi1> to vector<8x256xi1>
    %107 = vector.broadcast %cst_53 : f32 to vector<8x256xf32>
    %108 = arith.select %106, %102, %107 : vector<8x256xi1>, vector<8x256xf32>
    %c1_54 = arith.constant 1 : index
    %c0_55 = arith.constant 0 : index
    %c0_56 = arith.constant 0 : index
    %109 = vector.load %arg8[%c1_54, %c0_55, %c0_56] : memref<9x8x8xf32, #tpu.memory_space<vmem>>, vector<1x8x8xf32>
    %110 = vector.shape_cast %109 : vector<1x8x8xf32> to vector<8x8xf32>
    %cst_57 = arith.constant dense<0.000000e+00> : vector<8x256xf32>
    %111 = tpu.matmul %110, %108, %cst_57 {dimension_numbers = #tpu.dot_dimension_numbers<[1], [0], [0], [1], [0, 0, 1, 1], [], []>} : vector<8x8xf32>, vector<8x256xf32>, vector<8x256xf32> -> vector<8x256xf32>
    %112 = arith.addf %101, %111 : vector<8x256xf32>
    %c45_i32 = arith.constant 45 : i32
    %113 = tpu.dynamic_rotate %86 by %c45_i32 dim 1 : vector<8x256xf32>, i32 -> vector<8x256xf32>
    %c48_i32_58 = arith.constant 48 : i32
    %114 = vector.broadcast %c48_i32_58 : i32 to vector<1x256xi32>
    %115 = arith.cmpi sge, %0, %114 : vector<1x256xi32>
    %c13_i32 = arith.constant 13 : i32
    %116 = vector.broadcast %c13_i32 : i32 to vector<1x256xi32>
    %117 = arith.cmpi slt, %2, %116 : vector<1x256xi32>
    %118 = arith.andi %115, %117 : vector<1x256xi1>
    %cst_59 = arith.constant 0.000000e+00 : f32
    %119 = vector.shape_cast %118 : vector<1x256xi1> to vector<1x256xi1>
    %120 = vector.broadcast %119 : vector<1x256xi1> to vector<8x256xi1>
    %121 = vector.broadcast %cst_59 : f32 to vector<8x256xf32>
    %122 = arith.select %120, %113, %121 : vector<8x256xi1>, vector<8x256xf32>
    %c2_60 = arith.constant 2 : index
    %c0_61 = arith.constant 0 : index
    %c0_62 = arith.constant 0 : index
    %123 = vector.load %arg8[%c2_60, %c0_61, %c0_62] : memref<9x8x8xf32, #tpu.memory_space<vmem>>, vector<1x8x8xf32>
    %124 = vector.shape_cast %123 : vector<1x8x8xf32> to vector<8x8xf32>
    %cst_63 = arith.constant dense<0.000000e+00> : vector<8x256xf32>
    %125 = tpu.matmul %124, %122, %cst_63 {dimension_numbers = #tpu.dot_dimension_numbers<[1], [0], [0], [1], [0, 0, 1, 1], [], []>} : vector<8x8xf32>, vector<8x256xf32>, vector<8x256xf32> -> vector<8x256xf32>
    %126 = arith.addf %112, %125 : vector<8x256xf32>
    %c3_i32_64 = arith.constant 3 : i32
    %127 = tpu.dynamic_rotate %86 by %c3_i32_64 dim 1 : vector<8x256xf32>, i32 -> vector<8x256xf32>
    %c3_i32_65 = arith.constant 3 : i32
    %128 = vector.broadcast %c3_i32_65 : i32 to vector<1x256xi32>
    %129 = arith.cmpi sge, %2, %128 : vector<1x256xi32>
    %cst_66 = arith.constant 0.000000e+00 : f32
    %130 = vector.shape_cast %129 : vector<1x256xi1> to vector<1x256xi1>
    %131 = vector.broadcast %130 : vector<1x256xi1> to vector<8x256xi1>
    %132 = vector.broadcast %cst_66 : f32 to vector<8x256xf32>
    %133 = arith.select %131, %127, %132 : vector<8x256xi1>, vector<8x256xf32>
    %c3 = arith.constant 3 : index
    %c0_67 = arith.constant 0 : index
    %c0_68 = arith.constant 0 : index
    %134 = vector.load %arg8[%c3, %c0_67, %c0_68] : memref<9x8x8xf32, #tpu.memory_space<vmem>>, vector<1x8x8xf32>
    %135 = vector.shape_cast %134 : vector<1x8x8xf32> to vector<8x8xf32>
    %cst_69 = arith.constant dense<0.000000e+00> : vector<8x256xf32>
    %136 = tpu.matmul %135, %133, %cst_69 {dimension_numbers = #tpu.dot_dimension_numbers<[1], [0], [0], [1], [0, 0, 1, 1], [], []>} : vector<8x8xf32>, vector<8x256xf32>, vector<8x256xf32> -> vector<8x256xf32>
    %137 = arith.addf %126, %136 : vector<8x256xf32>
    %c4 = arith.constant 4 : index
    %c0_70 = arith.constant 0 : index
    %c0_71 = arith.constant 0 : index
    %138 = vector.load %arg8[%c4, %c0_70, %c0_71] : memref<9x8x8xf32, #tpu.memory_space<vmem>>, vector<1x8x8xf32>
    %139 = vector.shape_cast %138 : vector<1x8x8xf32> to vector<8x8xf32>
    %cst_72 = arith.constant dense<0.000000e+00> : vector<8x256xf32>
    %140 = tpu.matmul %139, %86, %cst_72 {dimension_numbers = #tpu.dot_dimension_numbers<[1], [0], [0], [1], [0, 0, 1, 1], [], []>} : vector<8x8xf32>, vector<8x256xf32>, vector<8x256xf32> -> vector<8x256xf32>
    %141 = arith.addf %137, %140 : vector<8x256xf32>
    %c253_i32 = arith.constant 253 : i32
    %142 = tpu.dynamic_rotate %86 by %c253_i32 dim 1 : vector<8x256xf32>, i32 -> vector<8x256xf32>
    %c13_i32_73 = arith.constant 13 : i32
    %143 = vector.broadcast %c13_i32_73 : i32 to vector<1x256xi32>
    %144 = arith.cmpi slt, %2, %143 : vector<1x256xi32>
    %cst_74 = arith.constant 0.000000e+00 : f32
    %145 = vector.shape_cast %144 : vector<1x256xi1> to vector<1x256xi1>
    %146 = vector.broadcast %145 : vector<1x256xi1> to vector<8x256xi1>
    %147 = vector.broadcast %cst_74 : f32 to vector<8x256xf32>
    %148 = arith.select %146, %142, %147 : vector<8x256xi1>, vector<8x256xf32>
    %c5 = arith.constant 5 : index
    %c0_75 = arith.constant 0 : index
    %c0_76 = arith.constant 0 : index
    %149 = vector.load %arg8[%c5, %c0_75, %c0_76] : memref<9x8x8xf32, #tpu.memory_space<vmem>>, vector<1x8x8xf32>
    %150 = vector.shape_cast %149 : vector<1x8x8xf32> to vector<8x8xf32>
    %cst_77 = arith.constant dense<0.000000e+00> : vector<8x256xf32>
    %151 = tpu.matmul %150, %148, %cst_77 {dimension_numbers = #tpu.dot_dimension_numbers<[1], [0], [0], [1], [0, 0, 1, 1], [], []>} : vector<8x8xf32>, vector<8x256xf32>, vector<8x256xf32> -> vector<8x256xf32>
    %152 = arith.addf %141, %151 : vector<8x256xf32>
    %c211_i32 = arith.constant 211 : i32
    %153 = tpu.dynamic_rotate %86 by %c211_i32 dim 1 : vector<8x256xf32>, i32 -> vector<8x256xf32>
    %c208_i32 = arith.constant 208 : i32
    %154 = vector.broadcast %c208_i32 : i32 to vector<1x256xi32>
    %155 = arith.cmpi slt, %0, %154 : vector<1x256xi32>
    %c3_i32_78 = arith.constant 3 : i32
    %156 = vector.broadcast %c3_i32_78 : i32 to vector<1x256xi32>
    %157 = arith.cmpi sge, %2, %156 : vector<1x256xi32>
    %158 = arith.andi %155, %157 : vector<1x256xi1>
    %cst_79 = arith.constant 0.000000e+00 : f32
    %159 = vector.shape_cast %158 : vector<1x256xi1> to vector<1x256xi1>
    %160 = vector.broadcast %159 : vector<1x256xi1> to vector<8x256xi1>
    %161 = vector.broadcast %cst_79 : f32 to vector<8x256xf32>
    %162 = arith.select %160, %153, %161 : vector<8x256xi1>, vector<8x256xf32>
    %c6 = arith.constant 6 : index
    %c0_80 = arith.constant 0 : index
    %c0_81 = arith.constant 0 : index
    %163 = vector.load %arg8[%c6, %c0_80, %c0_81] : memref<9x8x8xf32, #tpu.memory_space<vmem>>, vector<1x8x8xf32>
    %164 = vector.shape_cast %163 : vector<1x8x8xf32> to vector<8x8xf32>
    %cst_82 = arith.constant dense<0.000000e+00> : vector<8x256xf32>
    %165 = tpu.matmul %164, %162, %cst_82 {dimension_numbers = #tpu.dot_dimension_numbers<[1], [0], [0], [1], [0, 0, 1, 1], [], []>} : vector<8x8xf32>, vector<8x256xf32>, vector<8x256xf32> -> vector<8x256xf32>
    %166 = arith.addf %152, %165 : vector<8x256xf32>
    %c208_i32_83 = arith.constant 208 : i32
    %167 = tpu.dynamic_rotate %86 by %c208_i32_83 dim 1 : vector<8x256xf32>, i32 -> vector<8x256xf32>
    %c208_i32_84 = arith.constant 208 : i32
    %168 = vector.broadcast %c208_i32_84 : i32 to vector<1x256xi32>
    %169 = arith.cmpi slt, %0, %168 : vector<1x256xi32>
    %cst_85 = arith.constant 0.000000e+00 : f32
    %170 = vector.shape_cast %169 : vector<1x256xi1> to vector<1x256xi1>
    %171 = vector.broadcast %170 : vector<1x256xi1> to vector<8x256xi1>
    %172 = vector.broadcast %cst_85 : f32 to vector<8x256xf32>
    %173 = arith.select %171, %167, %172 : vector<8x256xi1>, vector<8x256xf32>
    %c7 = arith.constant 7 : index
    %c0_86 = arith.constant 0 : index
    %c0_87 = arith.constant 0 : index
    %174 = vector.load %arg8[%c7, %c0_86, %c0_87] : memref<9x8x8xf32, #tpu.memory_space<vmem>>, vector<1x8x8xf32>
    %175 = vector.shape_cast %174 : vector<1x8x8xf32> to vector<8x8xf32>
    %cst_88 = arith.constant dense<0.000000e+00> : vector<8x256xf32>
    %176 = tpu.matmul %175, %173, %cst_88 {dimension_numbers = #tpu.dot_dimension_numbers<[1], [0], [0], [1], [0, 0, 1, 1], [], []>} : vector<8x8xf32>, vector<8x256xf32>, vector<8x256xf32> -> vector<8x256xf32>
    %177 = arith.addf %166, %176 : vector<8x256xf32>
    %c205_i32 = arith.constant 205 : i32
    %178 = tpu.dynamic_rotate %86 by %c205_i32 dim 1 : vector<8x256xf32>, i32 -> vector<8x256xf32>
    %c208_i32_89 = arith.constant 208 : i32
    %179 = vector.broadcast %c208_i32_89 : i32 to vector<1x256xi32>
    %180 = arith.cmpi slt, %0, %179 : vector<1x256xi32>
    %c13_i32_90 = arith.constant 13 : i32
    %181 = vector.broadcast %c13_i32_90 : i32 to vector<1x256xi32>
    %182 = arith.cmpi slt, %2, %181 : vector<1x256xi32>
    %183 = arith.andi %180, %182 : vector<1x256xi1>
    %cst_91 = arith.constant 0.000000e+00 : f32
    %184 = vector.shape_cast %183 : vector<1x256xi1> to vector<1x256xi1>
    %185 = vector.broadcast %184 : vector<1x256xi1> to vector<8x256xi1>
    %186 = vector.broadcast %cst_91 : f32 to vector<8x256xf32>
    %187 = arith.select %185, %178, %186 : vector<8x256xi1>, vector<8x256xf32>
    %c8 = arith.constant 8 : index
    %c0_92 = arith.constant 0 : index
    %c0_93 = arith.constant 0 : index
    %188 = vector.load %arg8[%c8, %c0_92, %c0_93] : memref<9x8x8xf32, #tpu.memory_space<vmem>>, vector<1x8x8xf32>
    %189 = vector.shape_cast %188 : vector<1x8x8xf32> to vector<8x8xf32>
    %cst_94 = arith.constant dense<0.000000e+00> : vector<8x256xf32>
    %190 = tpu.matmul %189, %187, %cst_94 {dimension_numbers = #tpu.dot_dimension_numbers<[1], [0], [0], [1], [0, 0, 1, 1], [], []>} : vector<8x8xf32>, vector<8x256xf32>, vector<8x256xf32> -> vector<8x256xf32>
    %191 = arith.addf %177, %190 : vector<8x256xf32>
    %c0_95 = arith.constant 0 : index
    %c0_96 = arith.constant 0 : index
    %192 = vector.load %arg9[%c0_95, %c0_96] : memref<8x1xf32, #tpu.memory_space<vmem>>, vector<8x1xf32>
    %193 = vector.broadcast %192 : vector<8x1xf32> to vector<8x256xf32>
    %194 = arith.addf %191, %193 : vector<8x256xf32>
    %cst_97 = arith.constant 0.000000e+00 : f32
    %195 = vector.broadcast %cst_97 : f32 to vector<4x256xf32>
    %c17_i32 = arith.constant 17 : i32
    %196 = tpu.dynamic_rotate %14 by %c17_i32 dim 1 : vector<4x256xf32>, i32 -> vector<4x256xf32>
    %c16_i32_98 = arith.constant 16 : i32
    %197 = vector.broadcast %c16_i32_98 : i32 to vector<1x256xi32>
    %198 = arith.cmpi sge, %0, %197 : vector<1x256xi32>
    %c1_i32_99 = arith.constant 1 : i32
    %199 = vector.broadcast %c1_i32_99 : i32 to vector<1x256xi32>
    %200 = arith.cmpi sge, %2, %199 : vector<1x256xi32>
    %201 = arith.andi %198, %200 : vector<1x256xi1>
    %cst_100 = arith.constant 0.000000e+00 : f32
    %202 = vector.shape_cast %201 : vector<1x256xi1> to vector<1x256xi1>
    %203 = vector.broadcast %202 : vector<1x256xi1> to vector<4x256xi1>
    %204 = vector.broadcast %cst_100 : f32 to vector<4x256xf32>
    %205 = arith.select %203, %196, %204 : vector<4x256xi1>, vector<4x256xf32>
    %c0_101 = arith.constant 0 : index
    %c0_102 = arith.constant 0 : index
    %c0_103 = arith.constant 0 : index
    %206 = vector.load %arg10[%c0_101, %c0_102, %c0_103] : memref<9x4x4xf32, #tpu.memory_space<vmem>>, vector<1x4x4xf32>
    %207 = vector.shape_cast %206 : vector<1x4x4xf32> to vector<4x4xf32>
    %cst_104 = arith.constant dense<0.000000e+00> : vector<4x256xf32>
    %208 = tpu.matmul %207, %205, %cst_104 {dimension_numbers = #tpu.dot_dimension_numbers<[1], [0], [0], [1], [0, 0, 1, 1], [], []>} : vector<4x4xf32>, vector<4x256xf32>, vector<4x256xf32> -> vector<4x256xf32>
    %209 = arith.addf %195, %208 : vector<4x256xf32>
    %c16_i32_105 = arith.constant 16 : i32
    %210 = tpu.dynamic_rotate %14 by %c16_i32_105 dim 1 : vector<4x256xf32>, i32 -> vector<4x256xf32>
    %c16_i32_106 = arith.constant 16 : i32
    %211 = vector.broadcast %c16_i32_106 : i32 to vector<1x256xi32>
    %212 = arith.cmpi sge, %0, %211 : vector<1x256xi32>
    %cst_107 = arith.constant 0.000000e+00 : f32
    %213 = vector.shape_cast %212 : vector<1x256xi1> to vector<1x256xi1>
    %214 = vector.broadcast %213 : vector<1x256xi1> to vector<4x256xi1>
    %215 = vector.broadcast %cst_107 : f32 to vector<4x256xf32>
    %216 = arith.select %214, %210, %215 : vector<4x256xi1>, vector<4x256xf32>
    %c1_108 = arith.constant 1 : index
    %c0_109 = arith.constant 0 : index
    %c0_110 = arith.constant 0 : index
    %217 = vector.load %arg10[%c1_108, %c0_109, %c0_110] : memref<9x4x4xf32, #tpu.memory_space<vmem>>, vector<1x4x4xf32>
    %218 = vector.shape_cast %217 : vector<1x4x4xf32> to vector<4x4xf32>
    %cst_111 = arith.constant dense<0.000000e+00> : vector<4x256xf32>
    %219 = tpu.matmul %218, %216, %cst_111 {dimension_numbers = #tpu.dot_dimension_numbers<[1], [0], [0], [1], [0, 0, 1, 1], [], []>} : vector<4x4xf32>, vector<4x256xf32>, vector<4x256xf32> -> vector<4x256xf32>
    %220 = arith.addf %209, %219 : vector<4x256xf32>
    %c15_i32_112 = arith.constant 15 : i32
    %221 = tpu.dynamic_rotate %14 by %c15_i32_112 dim 1 : vector<4x256xf32>, i32 -> vector<4x256xf32>
    %c16_i32_113 = arith.constant 16 : i32
    %222 = vector.broadcast %c16_i32_113 : i32 to vector<1x256xi32>
    %223 = arith.cmpi sge, %0, %222 : vector<1x256xi32>
    %c15_i32_114 = arith.constant 15 : i32
    %224 = vector.broadcast %c15_i32_114 : i32 to vector<1x256xi32>
    %225 = arith.cmpi slt, %2, %224 : vector<1x256xi32>
    %226 = arith.andi %223, %225 : vector<1x256xi1>
    %cst_115 = arith.constant 0.000000e+00 : f32
    %227 = vector.shape_cast %226 : vector<1x256xi1> to vector<1x256xi1>
    %228 = vector.broadcast %227 : vector<1x256xi1> to vector<4x256xi1>
    %229 = vector.broadcast %cst_115 : f32 to vector<4x256xf32>
    %230 = arith.select %228, %221, %229 : vector<4x256xi1>, vector<4x256xf32>
    %c2_116 = arith.constant 2 : index
    %c0_117 = arith.constant 0 : index
    %c0_118 = arith.constant 0 : index
    %231 = vector.load %arg10[%c2_116, %c0_117, %c0_118] : memref<9x4x4xf32, #tpu.memory_space<vmem>>, vector<1x4x4xf32>
    %232 = vector.shape_cast %231 : vector<1x4x4xf32> to vector<4x4xf32>
    %cst_119 = arith.constant dense<0.000000e+00> : vector<4x256xf32>
    %233 = tpu.matmul %232, %230, %cst_119 {dimension_numbers = #tpu.dot_dimension_numbers<[1], [0], [0], [1], [0, 0, 1, 1], [], []>} : vector<4x4xf32>, vector<4x256xf32>, vector<4x256xf32> -> vector<4x256xf32>
    %234 = arith.addf %220, %233 : vector<4x256xf32>
    %c1_i32_120 = arith.constant 1 : i32
    %235 = tpu.dynamic_rotate %14 by %c1_i32_120 dim 1 : vector<4x256xf32>, i32 -> vector<4x256xf32>
    %c1_i32_121 = arith.constant 1 : i32
    %236 = vector.broadcast %c1_i32_121 : i32 to vector<1x256xi32>
    %237 = arith.cmpi sge, %2, %236 : vector<1x256xi32>
    %cst_122 = arith.constant 0.000000e+00 : f32
    %238 = vector.shape_cast %237 : vector<1x256xi1> to vector<1x256xi1>
    %239 = vector.broadcast %238 : vector<1x256xi1> to vector<4x256xi1>
    %240 = vector.broadcast %cst_122 : f32 to vector<4x256xf32>
    %241 = arith.select %239, %235, %240 : vector<4x256xi1>, vector<4x256xf32>
    %c3_123 = arith.constant 3 : index
    %c0_124 = arith.constant 0 : index
    %c0_125 = arith.constant 0 : index
    %242 = vector.load %arg10[%c3_123, %c0_124, %c0_125] : memref<9x4x4xf32, #tpu.memory_space<vmem>>, vector<1x4x4xf32>
    %243 = vector.shape_cast %242 : vector<1x4x4xf32> to vector<4x4xf32>
    %cst_126 = arith.constant dense<0.000000e+00> : vector<4x256xf32>
    %244 = tpu.matmul %243, %241, %cst_126 {dimension_numbers = #tpu.dot_dimension_numbers<[1], [0], [0], [1], [0, 0, 1, 1], [], []>} : vector<4x4xf32>, vector<4x256xf32>, vector<4x256xf32> -> vector<4x256xf32>
    %245 = arith.addf %234, %244 : vector<4x256xf32>
    %c4_127 = arith.constant 4 : index
    %c0_128 = arith.constant 0 : index
    %c0_129 = arith.constant 0 : index
    %246 = vector.load %arg10[%c4_127, %c0_128, %c0_129] : memref<9x4x4xf32, #tpu.memory_space<vmem>>, vector<1x4x4xf32>
    %247 = vector.shape_cast %246 : vector<1x4x4xf32> to vector<4x4xf32>
    %cst_130 = arith.constant dense<0.000000e+00> : vector<4x256xf32>
    %248 = tpu.matmul %247, %14, %cst_130 {dimension_numbers = #tpu.dot_dimension_numbers<[1], [0], [0], [1], [0, 0, 1, 1], [], []>} : vector<4x4xf32>, vector<4x256xf32>, vector<4x256xf32> -> vector<4x256xf32>
    %249 = arith.addf %245, %248 : vector<4x256xf32>
    %c255_i32_131 = arith.constant 255 : i32
    %250 = tpu.dynamic_rotate %14 by %c255_i32_131 dim 1 : vector<4x256xf32>, i32 -> vector<4x256xf32>
    %c15_i32_132 = arith.constant 15 : i32
    %251 = vector.broadcast %c15_i32_132 : i32 to vector<1x256xi32>
    %252 = arith.cmpi slt, %2, %251 : vector<1x256xi32>
    %cst_133 = arith.constant 0.000000e+00 : f32
    %253 = vector.shape_cast %252 : vector<1x256xi1> to vector<1x256xi1>
    %254 = vector.broadcast %253 : vector<1x256xi1> to vector<4x256xi1>
    %255 = vector.broadcast %cst_133 : f32 to vector<4x256xf32>
    %256 = arith.select %254, %250, %255 : vector<4x256xi1>, vector<4x256xf32>
    %c5_134 = arith.constant 5 : index
    %c0_135 = arith.constant 0 : index
    %c0_136 = arith.constant 0 : index
    %257 = vector.load %arg10[%c5_134, %c0_135, %c0_136] : memref<9x4x4xf32, #tpu.memory_space<vmem>>, vector<1x4x4xf32>
    %258 = vector.shape_cast %257 : vector<1x4x4xf32> to vector<4x4xf32>
    %cst_137 = arith.constant dense<0.000000e+00> : vector<4x256xf32>
    %259 = tpu.matmul %258, %256, %cst_137 {dimension_numbers = #tpu.dot_dimension_numbers<[1], [0], [0], [1], [0, 0, 1, 1], [], []>} : vector<4x4xf32>, vector<4x256xf32>, vector<4x256xf32> -> vector<4x256xf32>
    %260 = arith.addf %249, %259 : vector<4x256xf32>
    %c241_i32 = arith.constant 241 : i32
    %261 = tpu.dynamic_rotate %14 by %c241_i32 dim 1 : vector<4x256xf32>, i32 -> vector<4x256xf32>
    %c240_i32_138 = arith.constant 240 : i32
    %262 = vector.broadcast %c240_i32_138 : i32 to vector<1x256xi32>
    %263 = arith.cmpi slt, %0, %262 : vector<1x256xi32>
    %c1_i32_139 = arith.constant 1 : i32
    %264 = vector.broadcast %c1_i32_139 : i32 to vector<1x256xi32>
    %265 = arith.cmpi sge, %2, %264 : vector<1x256xi32>
    %266 = arith.andi %263, %265 : vector<1x256xi1>
    %cst_140 = arith.constant 0.000000e+00 : f32
    %267 = vector.shape_cast %266 : vector<1x256xi1> to vector<1x256xi1>
    %268 = vector.broadcast %267 : vector<1x256xi1> to vector<4x256xi1>
    %269 = vector.broadcast %cst_140 : f32 to vector<4x256xf32>
    %270 = arith.select %268, %261, %269 : vector<4x256xi1>, vector<4x256xf32>
    %c6_141 = arith.constant 6 : index
    %c0_142 = arith.constant 0 : index
    %c0_143 = arith.constant 0 : index
    %271 = vector.load %arg10[%c6_141, %c0_142, %c0_143] : memref<9x4x4xf32, #tpu.memory_space<vmem>>, vector<1x4x4xf32>
    %272 = vector.shape_cast %271 : vector<1x4x4xf32> to vector<4x4xf32>
    %cst_144 = arith.constant dense<0.000000e+00> : vector<4x256xf32>
    %273 = tpu.matmul %272, %270, %cst_144 {dimension_numbers = #tpu.dot_dimension_numbers<[1], [0], [0], [1], [0, 0, 1, 1], [], []>} : vector<4x4xf32>, vector<4x256xf32>, vector<4x256xf32> -> vector<4x256xf32>
    %274 = arith.addf %260, %273 : vector<4x256xf32>
    %c240_i32_145 = arith.constant 240 : i32
    %275 = tpu.dynamic_rotate %14 by %c240_i32_145 dim 1 : vector<4x256xf32>, i32 -> vector<4x256xf32>
    %c240_i32_146 = arith.constant 240 : i32
    %276 = vector.broadcast %c240_i32_146 : i32 to vector<1x256xi32>
    %277 = arith.cmpi slt, %0, %276 : vector<1x256xi32>
    %cst_147 = arith.constant 0.000000e+00 : f32
    %278 = vector.shape_cast %277 : vector<1x256xi1> to vector<1x256xi1>
    %279 = vector.broadcast %278 : vector<1x256xi1> to vector<4x256xi1>
    %280 = vector.broadcast %cst_147 : f32 to vector<4x256xf32>
    %281 = arith.select %279, %275, %280 : vector<4x256xi1>, vector<4x256xf32>
    %c7_148 = arith.constant 7 : index
    %c0_149 = arith.constant 0 : index
    %c0_150 = arith.constant 0 : index
    %282 = vector.load %arg10[%c7_148, %c0_149, %c0_150] : memref<9x4x4xf32, #tpu.memory_space<vmem>>, vector<1x4x4xf32>
    %283 = vector.shape_cast %282 : vector<1x4x4xf32> to vector<4x4xf32>
    %cst_151 = arith.constant dense<0.000000e+00> : vector<4x256xf32>
    %284 = tpu.matmul %283, %281, %cst_151 {dimension_numbers = #tpu.dot_dimension_numbers<[1], [0], [0], [1], [0, 0, 1, 1], [], []>} : vector<4x4xf32>, vector<4x256xf32>, vector<4x256xf32> -> vector<4x256xf32>
    %285 = arith.addf %274, %284 : vector<4x256xf32>
    %c239_i32 = arith.constant 239 : i32
    %286 = tpu.dynamic_rotate %14 by %c239_i32 dim 1 : vector<4x256xf32>, i32 -> vector<4x256xf32>
    %c240_i32_152 = arith.constant 240 : i32
    %287 = vector.broadcast %c240_i32_152 : i32 to vector<1x256xi32>
    %288 = arith.cmpi slt, %0, %287 : vector<1x256xi32>
    %c15_i32_153 = arith.constant 15 : i32
    %289 = vector.broadcast %c15_i32_153 : i32 to vector<1x256xi32>
    %290 = arith.cmpi slt, %2, %289 : vector<1x256xi32>
    %291 = arith.andi %288, %290 : vector<1x256xi1>
    %cst_154 = arith.constant 0.000000e+00 : f32
    %292 = vector.shape_cast %291 : vector<1x256xi1> to vector<1x256xi1>
    %293 = vector.broadcast %292 : vector<1x256xi1> to vector<4x256xi1>
    %294 = vector.broadcast %cst_154 : f32 to vector<4x256xf32>
    %295 = arith.select %293, %286, %294 : vector<4x256xi1>, vector<4x256xf32>
    %c8_155 = arith.constant 8 : index
    %c0_156 = arith.constant 0 : index
    %c0_157 = arith.constant 0 : index
    %296 = vector.load %arg10[%c8_155, %c0_156, %c0_157] : memref<9x4x4xf32, #tpu.memory_space<vmem>>, vector<1x4x4xf32>
    %297 = vector.shape_cast %296 : vector<1x4x4xf32> to vector<4x4xf32>
    %cst_158 = arith.constant dense<0.000000e+00> : vector<4x256xf32>
    %298 = tpu.matmul %297, %295, %cst_158 {dimension_numbers = #tpu.dot_dimension_numbers<[1], [0], [0], [1], [0, 0, 1, 1], [], []>} : vector<4x4xf32>, vector<4x256xf32>, vector<4x256xf32> -> vector<4x256xf32>
    %299 = arith.addf %285, %298 : vector<4x256xf32>
    %c0_159 = arith.constant 0 : index
    %c0_160 = arith.constant 0 : index
    %300 = vector.load %arg11[%c0_159, %c0_160] : memref<4x1xf32, #tpu.memory_space<vmem>>, vector<4x1xf32>
    %301 = vector.broadcast %300 : vector<4x1xf32> to vector<4x256xf32>
    %302 = arith.addf %299, %301 : vector<4x256xf32>
    %cst_161 = arith.constant 0.000000e+00 : f32
    %303 = vector.broadcast %cst_161 : f32 to vector<4x256xf32>
    %c85_i32 = arith.constant 85 : i32
    %304 = tpu.dynamic_rotate %85 by %c85_i32 dim 1 : vector<4x256xf32>, i32 -> vector<4x256xf32>
    %c80_i32 = arith.constant 80 : i32
    %305 = vector.broadcast %c80_i32 : i32 to vector<1x256xi32>
    %306 = arith.cmpi sge, %0, %305 : vector<1x256xi32>
    %c5_i32 = arith.constant 5 : i32
    %307 = vector.broadcast %c5_i32 : i32 to vector<1x256xi32>
    %308 = arith.cmpi sge, %2, %307 : vector<1x256xi32>
    %309 = arith.andi %306, %308 : vector<1x256xi1>
    %cst_162 = arith.constant 0.000000e+00 : f32
    %310 = vector.shape_cast %309 : vector<1x256xi1> to vector<1x256xi1>
    %311 = vector.broadcast %310 : vector<1x256xi1> to vector<4x256xi1>
    %312 = vector.broadcast %cst_162 : f32 to vector<4x256xf32>
    %313 = arith.select %311, %304, %312 : vector<4x256xi1>, vector<4x256xf32>
    %c0_163 = arith.constant 0 : index
    %c0_164 = arith.constant 0 : index
    %c0_165 = arith.constant 0 : index
    %314 = vector.load %arg12[%c0_163, %c0_164, %c0_165] : memref<9x4x4xf32, #tpu.memory_space<vmem>>, vector<1x4x4xf32>
    %315 = vector.shape_cast %314 : vector<1x4x4xf32> to vector<4x4xf32>
    %cst_166 = arith.constant dense<0.000000e+00> : vector<4x256xf32>
    %316 = tpu.matmul %315, %313, %cst_166 {dimension_numbers = #tpu.dot_dimension_numbers<[1], [0], [0], [1], [0, 0, 1, 1], [], []>} : vector<4x4xf32>, vector<4x256xf32>, vector<4x256xf32> -> vector<4x256xf32>
    %317 = arith.addf %303, %316 : vector<4x256xf32>
    %c80_i32_167 = arith.constant 80 : i32
    %318 = tpu.dynamic_rotate %85 by %c80_i32_167 dim 1 : vector<4x256xf32>, i32 -> vector<4x256xf32>
    %c80_i32_168 = arith.constant 80 : i32
    %319 = vector.broadcast %c80_i32_168 : i32 to vector<1x256xi32>
    %320 = arith.cmpi sge, %0, %319 : vector<1x256xi32>
    %cst_169 = arith.constant 0.000000e+00 : f32
    %321 = vector.shape_cast %320 : vector<1x256xi1> to vector<1x256xi1>
    %322 = vector.broadcast %321 : vector<1x256xi1> to vector<4x256xi1>
    %323 = vector.broadcast %cst_169 : f32 to vector<4x256xf32>
    %324 = arith.select %322, %318, %323 : vector<4x256xi1>, vector<4x256xf32>
    %c1_170 = arith.constant 1 : index
    %c0_171 = arith.constant 0 : index
    %c0_172 = arith.constant 0 : index
    %325 = vector.load %arg12[%c1_170, %c0_171, %c0_172] : memref<9x4x4xf32, #tpu.memory_space<vmem>>, vector<1x4x4xf32>
    %326 = vector.shape_cast %325 : vector<1x4x4xf32> to vector<4x4xf32>
    %cst_173 = arith.constant dense<0.000000e+00> : vector<4x256xf32>
    %327 = tpu.matmul %326, %324, %cst_173 {dimension_numbers = #tpu.dot_dimension_numbers<[1], [0], [0], [1], [0, 0, 1, 1], [], []>} : vector<4x4xf32>, vector<4x256xf32>, vector<4x256xf32> -> vector<4x256xf32>
    %328 = arith.addf %317, %327 : vector<4x256xf32>
    %c75_i32 = arith.constant 75 : i32
    %329 = tpu.dynamic_rotate %85 by %c75_i32 dim 1 : vector<4x256xf32>, i32 -> vector<4x256xf32>
    %c80_i32_174 = arith.constant 80 : i32
    %330 = vector.broadcast %c80_i32_174 : i32 to vector<1x256xi32>
    %331 = arith.cmpi sge, %0, %330 : vector<1x256xi32>
    %c11_i32 = arith.constant 11 : i32
    %332 = vector.broadcast %c11_i32 : i32 to vector<1x256xi32>
    %333 = arith.cmpi slt, %2, %332 : vector<1x256xi32>
    %334 = arith.andi %331, %333 : vector<1x256xi1>
    %cst_175 = arith.constant 0.000000e+00 : f32
    %335 = vector.shape_cast %334 : vector<1x256xi1> to vector<1x256xi1>
    %336 = vector.broadcast %335 : vector<1x256xi1> to vector<4x256xi1>
    %337 = vector.broadcast %cst_175 : f32 to vector<4x256xf32>
    %338 = arith.select %336, %329, %337 : vector<4x256xi1>, vector<4x256xf32>
    %c2_176 = arith.constant 2 : index
    %c0_177 = arith.constant 0 : index
    %c0_178 = arith.constant 0 : index
    %339 = vector.load %arg12[%c2_176, %c0_177, %c0_178] : memref<9x4x4xf32, #tpu.memory_space<vmem>>, vector<1x4x4xf32>
    %340 = vector.shape_cast %339 : vector<1x4x4xf32> to vector<4x4xf32>
    %cst_179 = arith.constant dense<0.000000e+00> : vector<4x256xf32>
    %341 = tpu.matmul %340, %338, %cst_179 {dimension_numbers = #tpu.dot_dimension_numbers<[1], [0], [0], [1], [0, 0, 1, 1], [], []>} : vector<4x4xf32>, vector<4x256xf32>, vector<4x256xf32> -> vector<4x256xf32>
    %342 = arith.addf %328, %341 : vector<4x256xf32>
    %c5_i32_180 = arith.constant 5 : i32
    %343 = tpu.dynamic_rotate %85 by %c5_i32_180 dim 1 : vector<4x256xf32>, i32 -> vector<4x256xf32>
    %c5_i32_181 = arith.constant 5 : i32
    %344 = vector.broadcast %c5_i32_181 : i32 to vector<1x256xi32>
    %345 = arith.cmpi sge, %2, %344 : vector<1x256xi32>
    %cst_182 = arith.constant 0.000000e+00 : f32
    %346 = vector.shape_cast %345 : vector<1x256xi1> to vector<1x256xi1>
    %347 = vector.broadcast %346 : vector<1x256xi1> to vector<4x256xi1>
    %348 = vector.broadcast %cst_182 : f32 to vector<4x256xf32>
    %349 = arith.select %347, %343, %348 : vector<4x256xi1>, vector<4x256xf32>
    %c3_183 = arith.constant 3 : index
    %c0_184 = arith.constant 0 : index
    %c0_185 = arith.constant 0 : index
    %350 = vector.load %arg12[%c3_183, %c0_184, %c0_185] : memref<9x4x4xf32, #tpu.memory_space<vmem>>, vector<1x4x4xf32>
    %351 = vector.shape_cast %350 : vector<1x4x4xf32> to vector<4x4xf32>
    %cst_186 = arith.constant dense<0.000000e+00> : vector<4x256xf32>
    %352 = tpu.matmul %351, %349, %cst_186 {dimension_numbers = #tpu.dot_dimension_numbers<[1], [0], [0], [1], [0, 0, 1, 1], [], []>} : vector<4x4xf32>, vector<4x256xf32>, vector<4x256xf32> -> vector<4x256xf32>
    %353 = arith.addf %342, %352 : vector<4x256xf32>
    %c4_187 = arith.constant 4 : index
    %c0_188 = arith.constant 0 : index
    %c0_189 = arith.constant 0 : index
    %354 = vector.load %arg12[%c4_187, %c0_188, %c0_189] : memref<9x4x4xf32, #tpu.memory_space<vmem>>, vector<1x4x4xf32>
    %355 = vector.shape_cast %354 : vector<1x4x4xf32> to vector<4x4xf32>
    %cst_190 = arith.constant dense<0.000000e+00> : vector<4x256xf32>
    %356 = tpu.matmul %355, %85, %cst_190 {dimension_numbers = #tpu.dot_dimension_numbers<[1], [0], [0], [1], [0, 0, 1, 1], [], []>} : vector<4x4xf32>, vector<4x256xf32>, vector<4x256xf32> -> vector<4x256xf32>
    %357 = arith.addf %353, %356 : vector<4x256xf32>
    %c251_i32 = arith.constant 251 : i32
    %358 = tpu.dynamic_rotate %85 by %c251_i32 dim 1 : vector<4x256xf32>, i32 -> vector<4x256xf32>
    %c11_i32_191 = arith.constant 11 : i32
    %359 = vector.broadcast %c11_i32_191 : i32 to vector<1x256xi32>
    %360 = arith.cmpi slt, %2, %359 : vector<1x256xi32>
    %cst_192 = arith.constant 0.000000e+00 : f32
    %361 = vector.shape_cast %360 : vector<1x256xi1> to vector<1x256xi1>
    %362 = vector.broadcast %361 : vector<1x256xi1> to vector<4x256xi1>
    %363 = vector.broadcast %cst_192 : f32 to vector<4x256xf32>
    %364 = arith.select %362, %358, %363 : vector<4x256xi1>, vector<4x256xf32>
    %c5_193 = arith.constant 5 : index
    %c0_194 = arith.constant 0 : index
    %c0_195 = arith.constant 0 : index
    %365 = vector.load %arg12[%c5_193, %c0_194, %c0_195] : memref<9x4x4xf32, #tpu.memory_space<vmem>>, vector<1x4x4xf32>
    %366 = vector.shape_cast %365 : vector<1x4x4xf32> to vector<4x4xf32>
    %cst_196 = arith.constant dense<0.000000e+00> : vector<4x256xf32>
    %367 = tpu.matmul %366, %364, %cst_196 {dimension_numbers = #tpu.dot_dimension_numbers<[1], [0], [0], [1], [0, 0, 1, 1], [], []>} : vector<4x4xf32>, vector<4x256xf32>, vector<4x256xf32> -> vector<4x256xf32>
    %368 = arith.addf %357, %367 : vector<4x256xf32>
    %c181_i32 = arith.constant 181 : i32
    %369 = tpu.dynamic_rotate %85 by %c181_i32 dim 1 : vector<4x256xf32>, i32 -> vector<4x256xf32>
    %c176_i32 = arith.constant 176 : i32
    %370 = vector.broadcast %c176_i32 : i32 to vector<1x256xi32>
    %371 = arith.cmpi slt, %0, %370 : vector<1x256xi32>
    %c5_i32_197 = arith.constant 5 : i32
    %372 = vector.broadcast %c5_i32_197 : i32 to vector<1x256xi32>
    %373 = arith.cmpi sge, %2, %372 : vector<1x256xi32>
    %374 = arith.andi %371, %373 : vector<1x256xi1>
    %cst_198 = arith.constant 0.000000e+00 : f32
    %375 = vector.shape_cast %374 : vector<1x256xi1> to vector<1x256xi1>
    %376 = vector.broadcast %375 : vector<1x256xi1> to vector<4x256xi1>
    %377 = vector.broadcast %cst_198 : f32 to vector<4x256xf32>
    %378 = arith.select %376, %369, %377 : vector<4x256xi1>, vector<4x256xf32>
    %c6_199 = arith.constant 6 : index
    %c0_200 = arith.constant 0 : index
    %c0_201 = arith.constant 0 : index
    %379 = vector.load %arg12[%c6_199, %c0_200, %c0_201] : memref<9x4x4xf32, #tpu.memory_space<vmem>>, vector<1x4x4xf32>
    %380 = vector.shape_cast %379 : vector<1x4x4xf32> to vector<4x4xf32>
    %cst_202 = arith.constant dense<0.000000e+00> : vector<4x256xf32>
    %381 = tpu.matmul %380, %378, %cst_202 {dimension_numbers = #tpu.dot_dimension_numbers<[1], [0], [0], [1], [0, 0, 1, 1], [], []>} : vector<4x4xf32>, vector<4x256xf32>, vector<4x256xf32> -> vector<4x256xf32>
    %382 = arith.addf %368, %381 : vector<4x256xf32>
    %c176_i32_203 = arith.constant 176 : i32
    %383 = tpu.dynamic_rotate %85 by %c176_i32_203 dim 1 : vector<4x256xf32>, i32 -> vector<4x256xf32>
    %c176_i32_204 = arith.constant 176 : i32
    %384 = vector.broadcast %c176_i32_204 : i32 to vector<1x256xi32>
    %385 = arith.cmpi slt, %0, %384 : vector<1x256xi32>
    %cst_205 = arith.constant 0.000000e+00 : f32
    %386 = vector.shape_cast %385 : vector<1x256xi1> to vector<1x256xi1>
    %387 = vector.broadcast %386 : vector<1x256xi1> to vector<4x256xi1>
    %388 = vector.broadcast %cst_205 : f32 to vector<4x256xf32>
    %389 = arith.select %387, %383, %388 : vector<4x256xi1>, vector<4x256xf32>
    %c7_206 = arith.constant 7 : index
    %c0_207 = arith.constant 0 : index
    %c0_208 = arith.constant 0 : index
    %390 = vector.load %arg12[%c7_206, %c0_207, %c0_208] : memref<9x4x4xf32, #tpu.memory_space<vmem>>, vector<1x4x4xf32>
    %391 = vector.shape_cast %390 : vector<1x4x4xf32> to vector<4x4xf32>
    %cst_209 = arith.constant dense<0.000000e+00> : vector<4x256xf32>
    %392 = tpu.matmul %391, %389, %cst_209 {dimension_numbers = #tpu.dot_dimension_numbers<[1], [0], [0], [1], [0, 0, 1, 1], [], []>} : vector<4x4xf32>, vector<4x256xf32>, vector<4x256xf32> -> vector<4x256xf32>
    %393 = arith.addf %382, %392 : vector<4x256xf32>
    %c171_i32 = arith.constant 171 : i32
    %394 = tpu.dynamic_rotate %85 by %c171_i32 dim 1 : vector<4x256xf32>, i32 -> vector<4x256xf32>
    %c176_i32_210 = arith.constant 176 : i32
    %395 = vector.broadcast %c176_i32_210 : i32 to vector<1x256xi32>
    %396 = arith.cmpi slt, %0, %395 : vector<1x256xi32>
    %c11_i32_211 = arith.constant 11 : i32
    %397 = vector.broadcast %c11_i32_211 : i32 to vector<1x256xi32>
    %398 = arith.cmpi slt, %2, %397 : vector<1x256xi32>
    %399 = arith.andi %396, %398 : vector<1x256xi1>
    %cst_212 = arith.constant 0.000000e+00 : f32
    %400 = vector.shape_cast %399 : vector<1x256xi1> to vector<1x256xi1>
    %401 = vector.broadcast %400 : vector<1x256xi1> to vector<4x256xi1>
    %402 = vector.broadcast %cst_212 : f32 to vector<4x256xf32>
    %403 = arith.select %401, %394, %402 : vector<4x256xi1>, vector<4x256xf32>
    %c8_213 = arith.constant 8 : index
    %c0_214 = arith.constant 0 : index
    %c0_215 = arith.constant 0 : index
    %404 = vector.load %arg12[%c8_213, %c0_214, %c0_215] : memref<9x4x4xf32, #tpu.memory_space<vmem>>, vector<1x4x4xf32>
    %405 = vector.shape_cast %404 : vector<1x4x4xf32> to vector<4x4xf32>
    %cst_216 = arith.constant dense<0.000000e+00> : vector<4x256xf32>
    %406 = tpu.matmul %405, %403, %cst_216 {dimension_numbers = #tpu.dot_dimension_numbers<[1], [0], [0], [1], [0, 0, 1, 1], [], []>} : vector<4x4xf32>, vector<4x256xf32>, vector<4x256xf32> -> vector<4x256xf32>
    %407 = arith.addf %393, %406 : vector<4x256xf32>
    %c0_217 = arith.constant 0 : index
    %c0_218 = arith.constant 0 : index
    %408 = vector.load %arg13[%c0_217, %c0_218] : memref<4x1xf32, #tpu.memory_space<vmem>>, vector<4x1xf32>
    %409 = vector.broadcast %408 : vector<4x1xf32> to vector<4x256xf32>
    %410 = arith.addf %407, %409 : vector<4x256xf32>
    %411 = tpu.concatenate %302, %194, %410 in 0 : vector<4x256xf32>, vector<8x256xf32>, vector<4x256xf32> -> vector<16x256xf32>
    %c0_219 = arith.constant 0 : index
    %c0_220 = arith.constant 0 : index
    %412 = vector.load %arg14[%c0_219, %c0_220] : memref<16x16xf32, #tpu.memory_space<vmem>>, vector<16x16xf32>
    %cst_221 = arith.constant dense<0.000000e+00> : vector<16x256xf32>
    %413 = tpu.matmul %412, %411, %cst_221 {dimension_numbers = #tpu.dot_dimension_numbers<[1], [0], [0], [1], [0, 0, 1, 1], [], []>} : vector<16x16xf32>, vector<16x256xf32>, vector<16x256xf32> -> vector<16x256xf32>
    %c0_222 = arith.constant 0 : index
    %c0_223 = arith.constant 0 : index
    %414 = vector.load %arg15[%c0_222, %c0_223] : memref<16x1xf32, #tpu.memory_space<vmem>>, vector<16x1xf32>
    %415 = vector.broadcast %414 : vector<16x1xf32> to vector<16x256xf32>
    %416 = arith.addf %413, %415 : vector<16x256xf32>
    %417 = arith.addf %416, %13 : vector<16x256xf32>
    %cst_224 = arith.constant 0.000000e+00 : f32
    %418 = vector.broadcast %cst_224 : f32 to vector<16x256xf32>
    %419 = arith.maximumf %417, %418 : vector<16x256xf32>
    %c0_225 = arith.constant 0 : index
    %c0_226 = arith.constant 0 : index
    %c0_227 = arith.constant 0 : index
    %420 = vector.load %arg16[%c0_225, %c0_226, %c0_227] : memref<1x16x256xf32, #tpu.memory_space<vmem>>, vector<1x16x256xf32>
    %421 = vector.shape_cast %420 : vector<1x16x256xf32> to vector<16x256xf32>
    %422 = vector.shape_cast %419 : vector<16x256xf32> to vector<1x16x256xf32>
    tpu.vector_store %arg16[%c0_225, %c0_226, %c0_227], %422 {strides = array<i32>} : memref<1x16x256xf32, #tpu.memory_space<vmem>>, vector<1x16x256xf32>,
    return
  }
  func.func @transform_0(%arg0: i32) -> (i32, i32, i32) {
    %c0_i32 = arith.constant 0 : i32
    %c0_i32_0 = arith.constant 0 : i32
    %c0_i32_1 = arith.constant 0 : i32
    return %arg0, %c0_i32, %c0_i32_0 : i32, i32, i32
  }
  func.func @transform_1(%arg0: i32) -> (i32, i32) {
    %c0_i32 = arith.constant 0 : i32
    %c0_i32_0 = arith.constant 0 : i32
    %c0_i32_1 = arith.constant 0 : i32
    return %c0_i32, %c0_i32_0 : i32, i32
  }
  func.func @transform_2(%arg0: i32) -> (i32, i32) {
    %c0_i32 = arith.constant 0 : i32
    %c0_i32_0 = arith.constant 0 : i32
    %c0_i32_1 = arith.constant 0 : i32
    return %c0_i32, %c0_i32_0 : i32, i32
  }
  func.func @transform_3(%arg0: i32) -> (i32, i32, i32) {
    %c0_i32 = arith.constant 0 : i32
    %c0_i32_0 = arith.constant 0 : i32
    %c0_i32_1 = arith.constant 0 : i32
    %c0_i32_2 = arith.constant 0 : i32
    return %c0_i32, %c0_i32_0, %c0_i32_1 : i32, i32, i32
  }
  func.func @transform_4(%arg0: i32) -> (i32, i32) {
    %c0_i32 = arith.constant 0 : i32
    %c0_i32_0 = arith.constant 0 : i32
    %c0_i32_1 = arith.constant 0 : i32
    return %c0_i32, %c0_i32_0 : i32, i32
  }
  func.func @transform_5(%arg0: i32) -> (i32, i32, i32) {
    %c0_i32 = arith.constant 0 : i32
    %c0_i32_0 = arith.constant 0 : i32
    %c0_i32_1 = arith.constant 0 : i32
    %c0_i32_2 = arith.constant 0 : i32
    return %c0_i32, %c0_i32_0, %c0_i32_1 : i32, i32, i32
  }
  func.func @transform_6(%arg0: i32) -> (i32, i32) {
    %c0_i32 = arith.constant 0 : i32
    %c0_i32_0 = arith.constant 0 : i32
    %c0_i32_1 = arith.constant 0 : i32
    return %c0_i32, %c0_i32_0 : i32, i32
  }
  func.func @transform_7(%arg0: i32) -> (i32, i32, i32) {
    %c0_i32 = arith.constant 0 : i32
    %c0_i32_0 = arith.constant 0 : i32
    %c0_i32_1 = arith.constant 0 : i32
    %c0_i32_2 = arith.constant 0 : i32
    return %c0_i32, %c0_i32_0, %c0_i32_1 : i32, i32, i32
  }
  func.func @transform_8(%arg0: i32) -> (i32, i32) {
    %c0_i32 = arith.constant 0 : i32
    %c0_i32_0 = arith.constant 0 : i32
    %c0_i32_1 = arith.constant 0 : i32
    return %c0_i32, %c0_i32_0 : i32, i32
  }
  func.func @transform_9(%arg0: i32) -> (i32, i32, i32) {
    %c0_i32 = arith.constant 0 : i32
    %c0_i32_0 = arith.constant 0 : i32
    %c0_i32_1 = arith.constant 0 : i32
    %c0_i32_2 = arith.constant 0 : i32
    return %c0_i32, %c0_i32_0, %c0_i32_1 : i32, i32, i32
  }
  func.func @transform_10(%arg0: i32) -> (i32, i32) {
    %c0_i32 = arith.constant 0 : i32
    %c0_i32_0 = arith.constant 0 : i32
    %c0_i32_1 = arith.constant 0 : i32
    return %c0_i32, %c0_i32_0 : i32, i32
  }
  func.func @transform_11(%arg0: i32) -> (i32, i32, i32) {
    %c0_i32 = arith.constant 0 : i32
    %c0_i32_0 = arith.constant 0 : i32
    %c0_i32_1 = arith.constant 0 : i32
    %c0_i32_2 = arith.constant 0 : i32
    return %c0_i32, %c0_i32_0, %c0_i32_1 : i32, i32, i32
  }
  func.func @transform_12(%arg0: i32) -> (i32, i32) {
    %c0_i32 = arith.constant 0 : i32
    %c0_i32_0 = arith.constant 0 : i32
    %c0_i32_1 = arith.constant 0 : i32
    return %c0_i32, %c0_i32_0 : i32, i32
  }
  func.func @transform_13(%arg0: i32) -> (i32, i32) {
    %c0_i32 = arith.constant 0 : i32
    %c0_i32_0 = arith.constant 0 : i32
    %c0_i32_1 = arith.constant 0 : i32
    return %c0_i32, %c0_i32_0 : i32, i32
  }
  func.func @transform_14(%arg0: i32) -> (i32, i32) {
    %c0_i32 = arith.constant 0 : i32
    %c0_i32_0 = arith.constant 0 : i32
    %c0_i32_1 = arith.constant 0 : i32
    return %c0_i32, %c0_i32_0 : i32, i32
  }
  func.func @transform_15(%arg0: i32) -> (i32, i32, i32) {
    %c0_i32 = arith.constant 0 : i32
    %c0_i32_0 = arith.constant 0 : i32
    %c0_i32_1 = arith.constant 0 : i32
    return %arg0, %c0_i32, %c0_i32_0 : i32, i32, i32
  }
}

</mosaic_0001>

<llo_original>
// kernel: tpu_custom_call.1
$region0: #{tpu_custom_call.1}
  #allocation0 [shape = 'u32[]', space=smem, size = 0x4, offset = 0x4, fixed_abs, tag = 'smem constant byte address 0x4 - core index']
  #allocation1 [shape = 'u32[72,128]{1,0:T(1,128)}', space=vmem, size = 0x9000, scoped, tag = 'internal scratch']
  %s0 = inlined_call_operand.vmem [shape: f32[2,16,256], index: 0, kind: input, shape index: {}]
  %s1 = inlined_call_operand.vmem [shape: f32[32,16], index: 1, kind: input, shape index: {}]
  %s2 = inlined_call_operand.vmem [shape: f32[32,1], index: 2, kind: input, shape index: {}]
  %s3 = inlined_call_operand.vmem [shape: f32[3,8,8], index: 3, kind: input, shape index: {}]
  %s4 = inlined_call_operand.vmem [shape: f32[8,1], index: 4, kind: input, shape index: {}]
  %s5 = inlined_call_operand.vmem [shape: f32[3,8,8], index: 5, kind: input, shape index: {}]
  %s6 = inlined_call_operand.vmem [shape: f32[8,1], index: 6, kind: input, shape index: {}]
  %s7 = inlined_call_operand.vmem [shape: f32[9,8,8], index: 7, kind: input, shape index: {}]
  %s8 = inlined_call_operand.vmem [shape: f32[8,1], index: 8, kind: input, shape index: {}]
  %s9 = inlined_call_operand.vmem [shape: f32[9,4,4], index: 9, kind: input, shape index: {}]
  %s10 = inlined_call_operand.vmem [shape: f32[4,1], index: 10, kind: input, shape index: {}]
  %s11 = inlined_call_operand.vmem [shape: f32[9,4,4], index: 11, kind: input, shape index: {}]
  %s12 = inlined_call_operand.vmem [shape: f32[4,1], index: 12, kind: input, shape index: {}]
  %s13 = inlined_call_operand.vmem [shape: f32[16,16], index: 13, kind: input, shape index: {}]
  %s14 = inlined_call_operand.vmem [shape: f32[16,1], index: 14, kind: input, shape index: {}]
  %s15 = inlined_call_operand.hbm [shape: f32[2,16,256], index: 15, kind: output, shape index: {}]
  %s16 = sld [smem:[#allocation0]]
  $region93: #{tpu_custom_call.1} parent=0
    _
  %s18 = ssub.s32 1, %s16
  %s19 = scalar_select 0, %s18, %s16
  $region1: #{tpu_custom_call.1} parent=0
    #allocation2 [shape = 'u8[32768]{0}', space=vmem, size = 0x8000, scoped, tag = 'output window, operand 0']
    #allocation3 [shape = 's32[2]{0}', space=sflag, size = 0x8, scoped, tag = 'scoped memory for tpu_custom_call.1']
    %20 = vsyncpa [#allocation3], 0
    %s21 = scalar_lea.sflag [#allocation3], 1
    %22 = vsyncpa %s21, 0
    loop: start=0, step=1, limit=4
    $region2: #{tpu_custom_call.1} parent=1 // loop_pre_header
      _
    $region3: #{tpu_custom_call.1} parent=1 // loop_header
      %s24 = sphi 0, %s28
      %p25 = scmp.ge.s32.totalorder %s24, 4
      %s34 = sphi 0, %s36
      %s37 = sphi 0, %s34
      %s38 = sphi 0, %s37
      %s54 = sphi 0, %s38
      %s58 = sphi 0, %s58
      %s60 = sphi 0, %s58
      %s61 = sphi 0, %s60
      %s75 = sphi 0, %s61
      %s79 = sphi 0, %s79
      %s81 = sphi 0, %s79
      %s82 = sphi 0, %s81
      %s96 = sphi 0, %s82
      %s100 = sphi 0, %s100
      %s102 = sphi 0, %s100
      %s103 = sphi 0, %s102
      %s117 = sphi 0, %s103
      %s121 = sphi 0, %s121
      %s123 = sphi 0, %s121
      %s124 = sphi 0, %s123
      %s138 = sphi 0, %s124
      %s142 = sphi 0, %s142
      %s144 = sphi 0, %s142
      %s145 = sphi 0, %s144
      %s159 = sphi 0, %s145
      %s163 = sphi 0, %s163
      %s165 = sphi 0, %s163
      %s166 = sphi 0, %s165
      %s180 = sphi 0, %s166
      %s184 = sphi 0, %s184
      %s186 = sphi 0, %s184
      %s187 = sphi 0, %s186
      %s201 = sphi 0, %s187
      %s205 = sphi 0, %s205
      %s207 = sphi 0, %s205
      %s208 = sphi 0, %s207
      %s222 = sphi 0, %s208
      %s226 = sphi 0, %s226
      %s228 = sphi 0, %s226
      %s229 = sphi 0, %s228
      %s243 = sphi 0, %s229
      %s247 = sphi 0, %s247
      %s249 = sphi 0, %s247
      %s250 = sphi 0, %s249
      %s264 = sphi 0, %s250
      %s268 = sphi 0, %s268
      %s270 = sphi 0, %s268
      %s271 = sphi 0, %s270
      %s285 = sphi 0, %s271
      %s289 = sphi 0, %s289
      %s291 = sphi 0, %s289
      %s292 = sphi 0, %s291
      %s306 = sphi 0, %s292
      %s310 = sphi 0, %s310
      %s312 = sphi 0, %s310
      %s313 = sphi 0, %s312
      %s327 = sphi 0, %s313
      %s331 = sphi 0, %s331
      %s333 = sphi 0, %s331
      %s334 = sphi 0, %s333
      %s348 = sphi 0, %s334
      %s354 = sphi 0, %s356
      %s357 = sphi 0, %s354
      %s358 = sphi 0, %s357
      %s374 = sphi 0, %s358
    $region4: #{tpu_custom_call.1} parent=1 // loop_header_branch
      %27 = sbr.rel (%p25) target = $region8
    $region5: #{tpu_custom_call.1} parent=1 // loop_body
      %s29 = ssub.s32 %s24, 1
      %s30 = ssub.s32 %s24, 2
      %s31 = sadd.s32 %s24, 1
      %s32 = ssub.s32 %s24, %s31
      %p33 = scmp.eq.s32.totalorder %s32, 0
      %s35 = sadd.s32 %s34, 1
      %s36 = scalar_select %p33, %s34, %s35
      %p39 = pneg %p33
      %p40 = scmp.eq.s32.totalorder %s24, 1
      %p41 = por %p39, %p40
      %p42 = scmp.ne.s32.totalorder %s34, %s37
      %p43 = scmp.eq.s32.totalorder %s24, 0
      %p44 = por %p42, %p43
      %p45 = scmp.ne.s32.totalorder %s34, %s37
      %p46 = scmp.eq.s32.totalorder %s29, 1
      %p47 = por %p45, %p46
      %p48 = scmp.ne.s32.totalorder %s37, %s38
      %p49 = scmp.eq.s32.totalorder %s29, 0
      %p50 = por %p48, %p49
      %p51 = scmp.ne.s32.totalorder %s37, %s38
      %p52 = scmp.eq.s32.totalorder %s30, 1
      %p53 = por %p51, %p52
      %p55 = scmp.ne.s32.totalorder %s38, %s54
      %p56 = scmp.eq.s32.totalorder %s30, 0
      %p57 = por %p55, %p56
      %s59 = sadd.s32 %s58, 1
      %p62 = scmp.eq.s32.totalorder %s24, 1
      %p63 = scmp.ne.s32.totalorder %s58, %s60
      %p64 = scmp.eq.s32.totalorder %s24, 0
      %p65 = por %p63, %p64
      %p66 = scmp.ne.s32.totalorder %s58, %s60
      %p67 = scmp.eq.s32.totalorder %s29, 1
      %p68 = por %p66, %p67
      %p69 = scmp.ne.s32.totalorder %s60, %s61
      %p70 = scmp.eq.s32.totalorder %s29, 0
      %p71 = por %p69, %p70
      %p72 = scmp.ne.s32.totalorder %s60, %s61
      %p73 = scmp.eq.s32.totalorder %s30, 1
      %p74 = por %p72, %p73
      %p76 = scmp.ne.s32.totalorder %s61, %s75
      %p77 = scmp.eq.s32.totalorder %s30, 0
      %p78 = por %p76, %p77
      %s80 = sadd.s32 %s79, 1
      %p83 = scmp.eq.s32.totalorder %s24, 1
      %p84 = scmp.ne.s32.totalorder %s79, %s81
      %p85 = scmp.eq.s32.totalorder %s24, 0
      %p86 = por %p84, %p85
      %p87 = scmp.ne.s32.totalorder %s79, %s81
      %p88 = scmp.eq.s32.totalorder %s29, 1
      %p89 = por %p87, %p88
      %p90 = scmp.ne.s32.totalorder %s81, %s82
      %p91 = scmp.eq.s32.totalorder %s29, 0
      %p92 = por %p90, %p91
      %p93 = scmp.ne.s32.totalorder %s81, %s82
      %p94 = scmp.eq.s32.totalorder %s30, 1
      %p95 = por %p93, %p94
      %p97 = scmp.ne.s32.totalorder %s82, %s96
      %p98 = scmp.eq.s32.totalorder %s30, 0
      %p99 = por %p97, %p98
      %s101 = sadd.s32 %s100, 1
      %p104 = scmp.eq.s32.totalorder %s24, 1
      %p105 = scmp.ne.s32.totalorder %s100, %s102
      %p106 = scmp.eq.s32.totalorder %s24, 0
      %p107 = por %p105, %p106
      %p108 = scmp.ne.s32.totalorder %s100, %s102
      %p109 = scmp.eq.s32.totalorder %s29, 1
      %p110 = por %p108, %p109
      %p111 = scmp.ne.s32.totalorder %s102, %s103
      %p112 = scmp.eq.s32.totalorder %s29, 0
      %p113 = por %p111, %p112
      %p114 = scmp.ne.s32.totalorder %s102, %s103
      %p115 = scmp.eq.s32.totalorder %s30, 1
      %p116 = por %p114, %p115
      %p118 = scmp.ne.s32.totalorder %s103, %s117
      %p119 = scmp.eq.s32.totalorder %s30, 0
      %p120 = por %p118, %p119
      %s122 = sadd.s32 %s121, 1
      %p125 = scmp.eq.s32.totalorder %s24, 1
      %p126 = scmp.ne.s32.totalorder %s121, %s123
      %p127 = scmp.eq.s32.totalorder %s24, 0
      %p128 = por %p126, %p127
      %p129 = scmp.ne.s32.totalorder %s121, %s123
      %p130 = scmp.eq.s32.totalorder %s29, 1
      %p131 = por %p129, %p130
      %p132 = scmp.ne.s32.totalorder %s123, %s124
      %p133 = scmp.eq.s32.totalorder %s29, 0
      %p134 = por %p132, %p133
      %p135 = scmp.ne.s32.totalorder %s123, %s124
      %p136 = scmp.eq.s32.totalorder %s30, 1
      %p137 = por %p135, %p136
      %p139 = scmp.ne.s32.totalorder %s124, %s138
      %p140 = scmp.eq.s32.totalorder %s30, 0
      %p141 = por %p139, %p140
      %s143 = sadd.s32 %s142, 1
      %p146 = scmp.eq.s32.totalorder %s24, 1
      %p147 = scmp.ne.s32.totalorder %s142, %s144
      %p148 = scmp.eq.s32.totalorder %s24, 0
      %p149 = por %p147, %p148
      %p150 = scmp.ne.s32.totalorder %s142, %s144
      %p151 = scmp.eq.s32.totalorder %s29, 1
      %p152 = por %p150, %p151
      %p153 = scmp.ne.s32.totalorder %s144, %s145
      %p154 = scmp.eq.s32.totalorder %s29, 0
      %p155 = por %p153, %p154
      %p156 = scmp.ne.s32.totalorder %s144, %s145
      %p157 = scmp.eq.s32.totalorder %s30, 1
      %p158 = por %p156, %p157
      %p160 = scmp.ne.s32.totalorder %s145, %s159
      %p161 = scmp.eq.s32.totalorder %s30, 0
      %p162 = por %p160, %p161
      %s164 = sadd.s32 %s163, 1
      %p167 = scmp.eq.s32.totalorder %s24, 1
      %p168 = scmp.ne.s32.totalorder %s163, %s165
      %p169 = scmp.eq.s32.totalorder %s24, 0
      %p170 = por %p168, %p169
      %p171 = scmp.ne.s32.totalorder %s163, %s165
      %p172 = scmp.eq.s32.totalorder %s29, 1
      %p173 = por %p171, %p172
      %p174 = scmp.ne.s32.totalorder %s165, %s166
      %p175 = scmp.eq.s32.totalorder %s29, 0
      %p176 = por %p174, %p175
      %p177 = scmp.ne.s32.totalorder %s165, %s166
      %p178 = scmp.eq.s32.totalorder %s30, 1
      %p179 = por %p177, %p178
      %p181 = scmp.ne.s32.totalorder %s166, %s180
      %p182 = scmp.eq.s32.totalorder %s30, 0
      %p183 = por %p181, %p182
      %s185 = sadd.s32 %s184, 1
      %p188 = scmp.eq.s32.totalorder %s24, 1
      %p189 = scmp.ne.s32.totalorder %s184, %s186
      %p190 = scmp.eq.s32.totalorder %s24, 0
      %p191 = por %p189, %p190
      %p192 = scmp.ne.s32.totalorder %s184, %s186
      %p193 = scmp.eq.s32.totalorder %s29, 1
      %p194 = por %p192, %p193
      %p195 = scmp.ne.s32.totalorder %s186, %s187
      %p196 = scmp.eq.s32.totalorder %s29, 0
      %p197 = por %p195, %p196
      %p198 = scmp.ne.s32.totalorder %s186, %s187
      %p199 = scmp.eq.s32.totalorder %s30, 1
      %p200 = por %p198, %p199
      %p202 = scmp.ne.s32.totalorder %s187, %s201
      %p203 = scmp.eq.s32.totalorder %s30, 0
      %p204 = por %p202, %p203
      %s206 = sadd.s32 %s205, 1
      %p209 = scmp.eq.s32.totalorder %s24, 1
      %p210 = scmp.ne.s32.totalorder %s205, %s207
      %p211 = scmp.eq.s32.totalorder %s24, 0
      %p212 = por %p210, %p211
      %p213 = scmp.ne.s32.totalorder %s205, %s207
      %p214 = scmp.eq.s32.totalorder %s29, 1
      %p215 = por %p213, %p214
      %p216 = scmp.ne.s32.totalorder %s207, %s208
      %p217 = scmp.eq.s32.totalorder %s29, 0
      %p218 = por %p216, %p217
      %p219 = scmp.ne.s32.totalorder %s207, %s208
      %p220 = scmp.eq.s32.totalorder %s30, 1
      %p221 = por %p219, %p220
      %p223 = scmp.ne.s32.totalorder %s208, %s222
      %p224 = scmp.eq.s32.totalorder %s30, 0
      %p225 = por %p223, %p224
      %s227 = sadd.s32 %s226, 1
      %p230 = scmp.eq.s32.totalorder %s24, 1
      %p231 = scmp.ne.s32.totalorder %s226, %s228
      %p232 = scmp.eq.s32.totalorder %s24, 0
      %p233 = por %p231, %p232
      %p234 = scmp.ne.s32.totalorder %s226, %s228
      %p235 = scmp.eq.s32.totalorder %s29, 1
      %p236 = por %p234, %p235
      %p237 = scmp.ne.s32.totalorder %s228, %s229
      %p238 = scmp.eq.s32.totalorder %s29, 0
      %p239 = por %p237, %p238
      %p240 = scmp.ne.s32.totalorder %s228, %s229
      %p241 = scmp.eq.s32.totalorder %s30, 1
      %p242 = por %p240, %p241
      %p244 = scmp.ne.s32.totalorder %s229, %s243
      %p245 = scmp.eq.s32.totalorder %s30, 0
      %p246 = por %p244, %p245
      %s248 = sadd.s32 %s247, 1
      %p251 = scmp.eq.s32.totalorder %s24, 1
      %p252 = scmp.ne.s32.totalorder %s247, %s249
      %p253 = scmp.eq.s32.totalorder %s24, 0
      %p254 = por %p252, %p253
      %p255 = scmp.ne.s32.totalorder %s247, %s249
      %p256 = scmp.eq.s32.totalorder %s29, 1
      %p257 = por %p255, %p256
      %p258 = scmp.ne.s32.totalorder %s249, %s250
      %p259 = scmp.eq.s32.totalorder %s29, 0
      %p260 = por %p258, %p259
      %p261 = scmp.ne.s32.totalorder %s249, %s250
      %p262 = scmp.eq.s32.totalorder %s30, 1
      %p263 = por %p261, %p262
      %p265 = scmp.ne.s32.totalorder %s250, %s264
      %p266 = scmp.eq.s32.totalorder %s30, 0
      %p267 = por %p265, %p266
      %s269 = sadd.s32 %s268, 1
      %p272 = scmp.eq.s32.totalorder %s24, 1
      %p273 = scmp.ne.s32.totalorder %s268, %s270
      %p274 = scmp.eq.s32.totalorder %s24, 0
      %p275 = por %p273, %p274
      %p276 = scmp.ne.s32.totalorder %s268, %s270
      %p277 = scmp.eq.s32.totalorder %s29, 1
      %p278 = por %p276, %p277
      %p279 = scmp.ne.s32.totalorder %s270, %s271
      %p280 = scmp.eq.s32.totalorder %s29, 0
      %p281 = por %p279, %p280
      %p282 = scmp.ne.s32.totalorder %s270, %s271
      %p283 = scmp.eq.s32.totalorder %s30, 1
      %p284 = por %p282, %p283
      %p286 = scmp.ne.s32.totalorder %s271, %s285
      %p287 = scmp.eq.s32.totalorder %s30, 0
      %p288 = por %p286, %p287
      %s290 = sadd.s32 %s289, 1
      %p293 = scmp.eq.s32.totalorder %s24, 1
      %p294 = scmp.ne.s32.totalorder %s289, %s291
      %p295 = scmp.eq.s32.totalorder %s24, 0
      %p296 = por %p294, %p295
      %p297 = scmp.ne.s32.totalorder %s289, %s291
      %p298 = scmp.eq.s32.totalorder %s29, 1
      %p299 = por %p297, %p298
      %p300 = scmp.ne.s32.totalorder %s291, %s292
      %p301 = scmp.eq.s32.totalorder %s29, 0
      %p302 = por %p300, %p301
      %p303 = scmp.ne.s32.totalorder %s291, %s292
      %p304 = scmp.eq.s32.totalorder %s30, 1
      %p305 = por %p303, %p304
      %p307 = scmp.ne.s32.totalorder %s292, %s306
      %p308 = scmp.eq.s32.totalorder %s30, 0
      %p309 = por %p307, %p308
      %s311 = sadd.s32 %s310, 1
      %p314 = scmp.eq.s32.totalorder %s24, 1
      %p315 = scmp.ne.s32.totalorder %s310, %s312
      %p316 = scmp.eq.s32.totalorder %s24, 0
      %p317 = por %p315, %p316
      %p318 = scmp.ne.s32.totalorder %s310, %s312
      %p319 = scmp.eq.s32.totalorder %s29, 1
      %p320 = por %p318, %p319
      %p321 = scmp.ne.s32.totalorder %s312, %s313
      %p322 = scmp.eq.s32.totalorder %s29, 0
      %p323 = por %p321, %p322
      %p324 = scmp.ne.s32.totalorder %s312, %s313
      %p325 = scmp.eq.s32.totalorder %s30, 1
      %p326 = por %p324, %p325
      %p328 = scmp.ne.s32.totalorder %s313, %s327
      %p329 = scmp.eq.s32.totalorder %s30, 0
      %p330 = por %p328, %p329
      %s332 = sadd.s32 %s331, 1
      %p335 = scmp.eq.s32.totalorder %s24, 1
      %p336 = scmp.ne.s32.totalorder %s331, %s333
      %p337 = scmp.eq.s32.totalorder %s24, 0
      %p338 = por %p336, %p337
      %p339 = scmp.ne.s32.totalorder %s331, %s333
      %p340 = scmp.eq.s32.totalorder %s29, 1
      %p341 = por %p339, %p340
      %p342 = scmp.ne.s32.totalorder %s333, %s334
      %p343 = scmp.eq.s32.totalorder %s29, 0
      %p344 = por %p342, %p343
      %p345 = scmp.ne.s32.totalorder %s333, %s334
      %p346 = scmp.eq.s32.totalorder %s30, 1
      %p347 = por %p345, %p346
      %p349 = scmp.ne.s32.totalorder %s334, %s348
      %p350 = scmp.eq.s32.totalorder %s30, 0
      %p351 = por %p349, %p350
      %s352 = ssub.s32 %s24, %s31
      %p353 = scmp.eq.s32.totalorder %s352, 0
      %s355 = sadd.s32 %s354, 1
      %s356 = scalar_select %p353, %s354, %s355
      %p359 = pneg %p353
      %p360 = scmp.eq.s32.totalorder %s24, 1
      %p361 = por %p359, %p360
      %p362 = scmp.ne.s32.totalorder %s354, %s357
      %p363 = scmp.eq.s32.totalorder %s24, 0
      %p364 = por %p362, %p363
      %p365 = scmp.ne.s32.totalorder %s354, %s357
      %p366 = scmp.eq.s32.totalorder %s29, 1
      %p367 = por %p365, %p366
      %p368 = scmp.ne.s32.totalorder %s357, %s358
      %p369 = scmp.eq.s32.totalorder %s29, 0
      %p370 = por %p368, %p369
      %p371 = scmp.ne.s32.totalorder %s357, %s358
      %p372 = scmp.eq.s32.totalorder %s30, 1
      %p373 = por %p371, %p372
      %p375 = scmp.ne.s32.totalorder %s358, %s374
      %p376 = scmp.eq.s32.totalorder %s30, 0
      %p377 = por %p375, %p376
      %p378 = scmp.le.s32.totalorder 1, %s24
      %p379 = scmp.lt.s32.totalorder %s24, 3
      %p380 = pnand %p378, %p379
      %p381 = pneg %p380
      // Predicated region
      $region9: #{tpu_custom_call.1} parent=5 // pred_check
        _
      $region10: #{tpu_custom_call.1} parent=5 // pred_check_branch
        %383 = sbr.rel (%p380) target = $region12
      $region11: #{tpu_custom_call.1} parent=5 // pred_region
        %s384 = ssub.s32 %s24, 1
        // Predicated region
        $region13: #{tpu_custom_call.1} parent=11 // pred_check
          %p385 = pneg %p71
        $region14: #{tpu_custom_call.1} parent=11 // pred_check_branch
          %387 = sbr.rel (%p385) target = $region16
        $region15: #{tpu_custom_call.1} parent=11 // pred_region
          _
        $region16: #{tpu_custom_call.1} parent=11 // pred_fallthru
          _
        // Predicated region
        $region17: #{tpu_custom_call.1} parent=11 // pred_check
          %p388 = pneg %p92
        $region18: #{tpu_custom_call.1} parent=11 // pred_check_branch
          %390 = sbr.rel (%p388) target = $region20
        $region19: #{tpu_custom_call.1} parent=11 // pred_region
          _
        $region20: #{tpu_custom_call.1} parent=11 // pred_fallthru
          _
        // Predicated region
        $region21: #{tpu_custom_call.1} parent=11 // pred_check
          %p391 = pneg %p113
        $region22: #{tpu_custom_call.1} parent=11 // pred_check_branch
          %393 = sbr.rel (%p391) target = $region24
        $region23: #{tpu_custom_call.1} parent=11 // pred_region
          _
        $region24: #{tpu_custom_call.1} parent=11 // pred_fallthru
          _
        // Predicated region
        $region25: #{tpu_custom_call.1} parent=11 // pred_check
          %p394 = pneg %p134
        $region26: #{tpu_custom_call.1} parent=11 // pred_check_branch
          %396 = sbr.rel (%p394) target = $region28
        $region27: #{tpu_custom_call.1} parent=11 // pred_region
          _
        $region28: #{tpu_custom_call.1} parent=11 // pred_fallthru
          _
        // Predicated region
        $region29: #{tpu_custom_call.1} parent=11 // pred_check
          %p397 = pneg %p155
        $region30: #{tpu_custom_call.1} parent=11 // pred_check_branch
          %399 = sbr.rel (%p397) target = $region32
        $region31: #{tpu_custom_call.1} parent=11 // pred_region
          _
        $region32: #{tpu_custom_call.1} parent=11 // pred_fallthru
          _
        // Predicated region
        $region33: #{tpu_custom_call.1} parent=11 // pred_check
          %p400 = pneg %p176
        $region34: #{tpu_custom_call.1} parent=11 // pred_check_branch
          %402 = sbr.rel (%p400) target = $region36
        $region35: #{tpu_custom_call.1} parent=11 // pred_region
          _
        $region36: #{tpu_custom_call.1} parent=11 // pred_fallthru
          _
        // Predicated region
        $region37: #{tpu_custom_call.1} parent=11 // pred_check
          %p403 = pneg %p197
        $region38: #{tpu_custom_call.1} parent=11 // pred_check_branch
          %405 = sbr.rel (%p403) target = $region40
        $region39: #{tpu_custom_call.1} parent=11 // pred_region
          _
        $region40: #{tpu_custom_call.1} parent=11 // pred_fallthru
          _
        // Predicated region
        $region41: #{tpu_custom_call.1} parent=11 // pred_check
          %p406 = pneg %p218
        $region42: #{tpu_custom_call.1} parent=11 // pred_check_branch
          %408 = sbr.rel (%p406) target = $region44
        $region43: #{tpu_custom_call.1} parent=11 // pred_region
          _
        $region44: #{tpu_custom_call.1} parent=11 // pred_fallthru
          _
        // Predicated region
        $region45: #{tpu_custom_call.1} parent=11 // pred_check
          %p409 = pneg %p239
        $region46: #{tpu_custom_call.1} parent=11 // pred_check_branch
          %411 = sbr.rel (%p409) target = $region48
        $region47: #{tpu_custom_call.1} parent=11 // pred_region
          _
        $region48: #{tpu_custom_call.1} parent=11 // pred_fallthru
          _
        // Predicated region
        $region49: #{tpu_custom_call.1} parent=11 // pred_check
          %p412 = pneg %p260
        $region50: #{tpu_custom_call.1} parent=11 // pred_check_branch
          %414 = sbr.rel (%p412) target = $region52
        $region51: #{tpu_custom_call.1} parent=11 // pred_region
          _
        $region52: #{tpu_custom_call.1} parent=11 // pred_fallthru
          _
        // Predicated region
        $region53: #{tpu_custom_call.1} parent=11 // pred_check
          %p415 = pneg %p281
        $region54: #{tpu_custom_call.1} parent=11 // pred_check_branch
          %417 = sbr.rel (%p415) target = $region56
        $region55: #{tpu_custom_call.1} parent=11 // pred_region
          _
        $region56: #{tpu_custom_call.1} parent=11 // pred_fallthru
          _
        // Predicated region
        $region57: #{tpu_custom_call.1} parent=11 // pred_check
          %p418 = pneg %p302
        $region58: #{tpu_custom_call.1} parent=11 // pred_check_branch
          %420 = sbr.rel (%p418) target = $region60
        $region59: #{tpu_custom_call.1} parent=11 // pred_region
          _
        $region60: #{tpu_custom_call.1} parent=11 // pred_fallthru
          _
        // Predicated region
        $region61: #{tpu_custom_call.1} parent=11 // pred_check
          %p421 = pneg %p323
        $region62: #{tpu_custom_call.1} parent=11 // pred_check_branch
          %423 = sbr.rel (%p421) target = $region64
        $region63: #{tpu_custom_call.1} parent=11 // pred_region
          _
        $region64: #{tpu_custom_call.1} parent=11 // pred_fallthru
          _
        // Predicated region
        $region65: #{tpu_custom_call.1} parent=11 // pred_check
          %p424 = pneg %p344
        $region66: #{tpu_custom_call.1} parent=11 // pred_check_branch
          %426 = sbr.rel (%p424) target = $region68
        $region67: #{tpu_custom_call.1} parent=11 // pred_region
          _
        $region68: #{tpu_custom_call.1} parent=11 // pred_fallthru
          _
      $region12: #{tpu_custom_call.1} parent=5 // pred_fallthru
        _
      %p427 = scmp.lt.s32.totalorder %s24, 2
      // Predicated region
      $region69: #{tpu_custom_call.1} parent=5 // pred_check
        %p428 = pneg %p427
      $region70: #{tpu_custom_call.1} parent=5 // pred_check_branch
        %430 = sbr.rel (%p428) target = $region72
      $region71: #{tpu_custom_call.1} parent=5 // pred_region
        // Predicated region
        $region73: #{tpu_custom_call.1} parent=71 // pred_check
          %p431 = pneg %p44
        $region74: #{tpu_custom_call.1} parent=71 // pred_check_branch
          %433 = sbr.rel (%p431) target = $region76
        $region75: #{tpu_custom_call.1} parent=71 // pred_region
          %p434 = scmp.lt.s32.totalorder %s24, 1
          %s435 = scalar_select %p434, %s24, 1
          %s436 = smul.addr %s435, 4
          %s437 = smul.addr %s436, 8
          %s438 = scalar_lea.vmem %s0, %s437
        $region76: #{tpu_custom_call.1} parent=71 // pred_fallthru
          _
      $region72: #{tpu_custom_call.1} parent=5 // pred_fallthru
        _
      %p439 = scmp.le.s32.totalorder 1, %s24
      %p440 = scmp.lt.s32.totalorder %s24, 3
      %p441 = pnand %p439, %p440
      %p442 = pneg %p441
      // Predicated region
      $region77: #{tpu_custom_call.1} parent=5 // pred_check
        _
      $region78: #{tpu_custom_call.1} parent=5 // pred_check_branch
        %444 = sbr.rel (%p441) target = $region80
      $region79: #{tpu_custom_call.1} parent=5 // pred_region
        %s445 = ssub.s32 %s24, 1
        %p446 = scmp.lt.s32.totalorder %s29, 1
        %s447 = scalar_select %p446, %s29, 1
        %s448 = smul.addr %s447, 4
        %s449 = smul.addr %s448, 8
        %s450 = scalar_lea.vmem %s0, %s449
        %p451 = pneg %p50
        %p452 = pneg %p47
        %p453 = pneg %p71
        %p454 = pneg %p68
        %p455 = pneg %p92
        %p456 = pneg %p89
        %p457 = pneg %p113
        %p458 = pneg %p110
        %p459 = pneg %p134
        %p460 = pneg %p131
        %p461 = pneg %p155
        %p462 = pneg %p152
        %p463 = pneg %p176
        %p464 = pneg %p173
        %p465 = pneg %p197
        %p466 = pneg %p194
        %p467 = pneg %p218
        %p468 = pneg %p215
        %p469 = pneg %p239
        %p470 = pneg %p236
        %p471 = pneg %p260
        %p472 = pneg %p257
        %p473 = pneg %p281
        %p474 = pneg %p278
        %p475 = pneg %p302
        %p476 = pneg %p299
        %p477 = pneg %p323
        %p478 = pneg %p320
        %p479 = pneg %p344
        %p480 = pneg %p341
        %p481 = pneg %p370
        %p482 = pneg %p367
        %s483 = sand.u32 %s357, 1
        %s484 = scalar_lea.sflag [#allocation3], %s483
        %s485 = sand.u32 %s357, 1
        %s486 = smul.addr %s485, 32
        %s487 = scalar_lea.vmem [#allocation2], %s486
        %p488 = scmp.lt.s32.totalorder %s29, 1
        %s489 = scalar_select %p488, %s29, 1
        %s490 = smul.addr %s489, 4
        %s491 = smul.addr %s490, 8
        %s492 = scalar_lea.vmem %s0, %s491
        %v493 = vlaneseq
        %v494 = vand.u32 %v493, 127
        %v495 = vadd.s32 %v494, 128
        %v496 = vand.u32 %v494, 15
        %v497 = vand.u32 %v495, 15
        %v498 = vld [vmem:[%s492] sm:$0xff]
        %v499 = vld [vmem:[%s492 + $0x8] sm:$0xff]
        %v500 = vld [vmem:[%s492 + $0x10] sm:$0xff]
        %v501 = vld [vmem:[%s492 + $0x18] sm:$0xff]
        %v502 = vld [vmem:[%s1] sm:$0xff]
        %v503 = vld [vmem:[%s1 + $0x8] sm:$0xff]
        %v504 = vld [vmem:[%s1 + $0x10] sm:$0xff]
        %v505 = vld [vmem:[%s1 + $0x18] sm:$0xff]
        %v506 = vld [vmem:[%s2] sm:$0xff]
        %v507 = vld [vmem:[%s2 + $0x8] sm:$0xff]
        %v508 = vld [vmem:[%s2 + $0x10] sm:$0xff]
        %v509 = vld [vmem:[%s2 + $0x18] sm:$0xff]
        %511 = vset.pattern.permute.xlu0 0
        %512 = vperm.xlu0 %511, %v506
        %v513 = vpop.permute.xlu0 %512
        %516 = vset.pattern.permute.xlu0 0
        %517 = vperm.xlu0 %516, %v507
        %v518 = vpop.permute.xlu0 %517
        %521 = vset.pattern.permute.xlu0 0
        %522 = vperm.xlu0 %521, %v508
        %v523 = vpop.permute.xlu0 %522
        %526 = vset.pattern.permute.xlu0 0
        %527 = vperm.xlu0 %526, %v509
        %v528 = vpop.permute.xlu0 %527
        %vm530 = vcmask 130048
        %v532 = vsel %vm530, %v502, 0
        %v535 = vsel %vm530, %v503, 0
        %v538 = vsel %vm530, %v504, 0
        %v541 = vsel %vm530, %v505, 0
        %543 = vmatpush.msra.mxu0 0.0
        %544 = vmatpush.msra.mxu0 0.0
        %545 = vmatpush.msra.mxu0 0.0
        %546 = vmatpush.msra.mxu0 0.0
        %547 = vmatpush.msra.mxu0 0.0
        %548 = vmatpush.msra.mxu0 0.0
        %549 = vmatpush.msra.mxu0 0.0
        %550 = vmatpush.msra.mxu0 0.0
        %551 = vmatpush.msra.mxu0 0.0
        %552 = vmatpush.msra.mxu0 0.0
        %553 = vmatpush.msra.mxu0 0.0
        %554 = vmatpush.msra.mxu0 0.0
        %555 = vmatpush.msra.mxu0 0.0
        %556 = vmatpush.msra.mxu0 0.0
        %557 = vmatpush.msra.mxu0 %v500
        %558 = vmatpush.msra.mxu0 %v498
        %559 = vmatmul.f32.gmra.mxu0 %v532
        %v560 = vpop.f32.mrf.mxu0
        %v561 = vadd.f32 %v513, %v560
        %562 = vmatmul.f32.gmra.mxu0 %v535
        %v563 = vpop.f32.mrf.mxu0
        %v564 = vadd.f32 %v518, %v563
        %565 = vmatmul.f32.gmra.mxu0 %v538
        %v566 = vpop.f32.mrf.mxu0
        %v567 = vadd.f32 %v523, %v566
        %568 = vmatmul.f32.gmra.mxu0 %v541
        %v569 = vpop.f32.mrf.mxu0
        %v570 = vadd.f32 %v528, %v569
        %571 = vdwg.mxu0
        %572 = vmatpush.msra.mxu0 0.0
        %573 = vmatpush.msra.mxu0 0.0
        %574 = vmatpush.msra.mxu0 0.0
        %575 = vmatpush.msra.mxu0 0.0
        %576 = vmatpush.msra.mxu0 0.0
        %577 = vmatpush.msra.mxu0 0.0
        %578 = vmatpush.msra.mxu0 0.0
        %579 = vmatpush.msra.mxu0 0.0
        %580 = vmatpush.msra.mxu0 0.0
        %581 = vmatpush.msra.mxu0 0.0
        %582 = vmatpush.msra.mxu0 0.0
        %583 = vmatpush.msra.mxu0 0.0
        %584 = vmatpush.msra.mxu0 0.0
        %585 = vmatpush.msra.mxu0 0.0
        %586 = vmatpush.msra.mxu0 %v501
        %587 = vmatpush.msra.mxu0 %v499
        %588 = vmatmul.f32.gmra.mxu0 %v532
        %v589 = vpop.f32.mrf.mxu0
        %v590 = vadd.f32 %v513, %v589
        %591 = vmatmul.f32.gmra.mxu0 %v535
        %v592 = vpop.f32.mrf.mxu0
        %v593 = vadd.f32 %v518, %v592
        %594 = vmatmul.f32.gmra.mxu0 %v538
        %v595 = vpop.f32.mrf.mxu0
        %v596 = vadd.f32 %v523, %v595
        %597 = vmatmul.f32.gmra.mxu0 %v541
        %v598 = vpop.f32.mrf.mxu0
        %v599 = vadd.f32 %v528, %v598
        %600 = vdwg.mxu0
        %v601 = vmax.f32 %v561, 0.0
        %v602 = vmax.f32 %v590, 0.0
        %v603 = vmax.f32 %v564, 0.0
        %v604 = vmax.f32 %v593, 0.0
        %605 = vrot.lane.b32.xlu0 %v603, 1
        %v606 = vpop.permute.xlu0 %605
        %607 = vrot.lane.b32.xlu0 %v604, 1
        %v608 = vpop.permute.xlu0 %607
        %vm609 = vcmp.lt.s32.totalorder %v494, 1
        %v610 = vsel %vm609, %v606, %v608
        %v611 = vsel %vm609, %v608, %v606
        %vm612 = vcmp.ge.s32.totalorder %v496, 1
        %vm613 = vcmp.ge.s32.totalorder %v497, 1
        %v614 = vsel %vm612, 1, 0
        %v615 = vsel %vm613, 1, 0
        %vm616 = vcmp.eq.s32.totalorder %v614, 1
        %vm617 = vcmp.eq.s32.totalorder %v615, 1
        %v618 = vsel %vm616, %v611, 0.0
        %v619 = vsel %vm617, %v610, 0.0
        %v620 = vld [vmem:[%s3] sm:$0xff]
        %s621 = scalar_lea.vmem %s3, 8
        %v622 = vld [vmem:[%s621] sm:$0xff]
        %vm623 = vcmask 64512
        %v625 = vsel %vm623, %v622, 0
        %627 = vmatpush.msra.mxu0 0.0
        %628 = vmatpush.msra.mxu0 0.0
        %629 = vmatpush.msra.mxu0 0.0
        %630 = vmatpush.msra.mxu0 0.0
        %631 = vmatpush.msra.mxu0 0.0
        %632 = vmatpush.msra.mxu0 0.0
        %633 = vmatpush.msra.mxu0 0.0
        %634 = vmatpush.msra.mxu0 0.0
        %635 = vmatpush.msra.mxu0 0.0
        %636 = vmatpush.msra.mxu0 0.0
        %637 = vmatpush.msra.mxu0 0.0
        %638 = vmatpush.msra.mxu0 0.0
        %639 = vmatpush.msra.mxu0 0.0
        %640 = vmatpush.msra.mxu0 0.0
        %641 = vmatpush.msra.mxu0 0.0
        %642 = vmatpush.msra.mxu0 %v603
        %643 = vmatmul.f32.gmra.mxu0 %v625
        %v644 = vpop.f32.mrf.mxu0
        %v645 = vadd.f32 0.0, %v644
        %646 = vdwg.mxu0
        %647 = vmatpush.msra.mxu0 0.0
        %648 = vmatpush.msra.mxu0 0.0
        %649 = vmatpush.msra.mxu0 0.0
        %650 = vmatpush.msra.mxu0 0.0
        %651 = vmatpush.msra.mxu0 0.0
        %652 = vmatpush.msra.mxu0 0.0
        %653 = vmatpush.msra.mxu0 0.0
        %654 = vmatpush.msra.mxu0 0.0
        %655 = vmatpush.msra.mxu0 0.0
        %656 = vmatpush.msra.mxu0 0.0
        %657 = vmatpush.msra.mxu0 0.0
        %658 = vmatpush.msra.mxu0 0.0
        %659 = vmatpush.msra.mxu0 0.0
        %660 = vmatpush.msra.mxu0 0.0
        %661 = vmatpush.msra.mxu0 0.0
        %662 = vmatpush.msra.mxu0 %v604
        %663 = vmatmul.f32.gmra.mxu0 %v625
        %v664 = vpop.f32.mrf.mxu0
        %v665 = vadd.f32 0.0, %v664
        %666 = vdwg.mxu0
        %v668 = vsel %vm623, %v620, 0
        %670 = vmatpush.msra.mxu0 0.0
        %671 = vmatpush.msra.mxu0 0.0
        %672 = vmatpush.msra.mxu0 0.0
        %673 = vmatpush.msra.mxu0 0.0
        %674 = vmatpush.msra.mxu0 0.0
        %675 = vmatpush.msra.mxu0 0.0
        %676 = vmatpush.msra.mxu0 0.0
        %677 = vmatpush.msra.mxu0 0.0
        %678 = vmatpush.msra.mxu0 0.0
        %679 = vmatpush.msra.mxu0 0.0
        %680 = vmatpush.msra.mxu0 0.0
        %681 = vmatpush.msra.mxu0 0.0
        %682 = vmatpush.msra.mxu0 0.0
        %683 = vmatpush.msra.mxu0 0.0
        %684 = vmatpush.msra.mxu0 0.0
        %685 = vmatpush.msra.mxu0 %v618
        %686 = vmatmul.f32.gmra.mxu0 %v668
        %v687 = vpop.f32.mrf.mxu0
        %v688 = vadd.f32 %v645, %v687
        %689 = vdwg.mxu0
        %690 = vmatpush.msra.mxu0 0.0
        %691 = vmatpush.msra.mxu0 0.0
        %692 = vmatpush.msra.mxu0 0.0
        %693 = vmatpush.msra.mxu0 0.0
        %694 = vmatpush.msra.mxu0 0.0
        %695 = vmatpush.msra.mxu0 0.0
        %696 = vmatpush.msra.mxu0 0.0
        %697 = vmatpush.msra.mxu0 0.0
        %698 = vmatpush.msra.mxu0 0.0
        %699 = vmatpush.msra.mxu0 0.0
        %700 = vmatpush.msra.mxu0 0.0
        %701 = vmatpush.msra.mxu0 0.0
        %702 = vmatpush.msra.mxu0 0.0
        %703 = vmatpush.msra.mxu0 0.0
        %704 = vmatpush.msra.mxu0 0.0
        %705 = vmatpush.msra.mxu0 %v619
        %706 = vmatmul.f32.gmra.mxu0 %v668
        %v707 = vpop.f32.mrf.mxu0
        %v708 = vadd.f32 %v665, %v707
        %709 = vdwg.mxu0
        %710 = vrot.lane.b32.xlu0 %v603, 127
        %v711 = vpop.permute.xlu0 %710
        %712 = vrot.lane.b32.xlu0 %v604, 127
        %v713 = vpop.permute.xlu0 %712
        %vm714 = vcmp.lt.s32.totalorder %v494, 127
        %v715 = vsel %vm714, %v711, %v713
        %v716 = vsel %vm714, %v713, %v711
        %vm717 = vcmp.lt.s32.totalorder %v496, 15
        %vm718 = vcmp.lt.s32.totalorder %v497, 15
        %v719 = vsel %vm717, 1, 0
        %v720 = vsel %vm718, 1, 0
        %vm721 = vcmp.eq.s32.totalorder %v719, 1
        %vm722 = vcmp.eq.s32.totalorder %v720, 1
        %v723 = vsel %vm721, %v715, 0.0
        %v724 = vsel %vm722, %v716, 0.0
        %s725 = scalar_lea.vmem %s3, 16
        %v726 = vld [vmem:[%s725] sm:$0xff]
        %v728 = vsel %vm623, %v726, 0
        %730 = vmatpush.msra.mxu0 0.0
        %731 = vmatpush.msra.mxu0 0.0
        %732 = vmatpush.msra.mxu0 0.0
        %733 = vmatpush.msra.mxu0 0.0
        %734 = vmatpush.msra.mxu0 0.0
        %735 = vmatpush.msra.mxu0 0.0
        %736 = vmatpush.msra.mxu0 0.0
        %737 = vmatpush.msra.mxu0 0.0
        %738 = vmatpush.msra.mxu0 0.0
        %739 = vmatpush.msra.mxu0 0.0
        %740 = vmatpush.msra.mxu0 0.0
        %741 = vmatpush.msra.mxu0 0.0
        %742 = vmatpush.msra.mxu0 0.0
        %743 = vmatpush.msra.mxu0 0.0
        %744 = vmatpush.msra.mxu0 0.0
        %745 = vmatpush.msra.mxu0 %v723
        %746 = vmatmul.f32.gmra.mxu0 %v728
        %v747 = vpop.f32.mrf.mxu0
        %v748 = vadd.f32 0.0, %v747
        %749 = vdwg.mxu0
        %750 = vmatpush.msra.mxu0 0.0
        %751 = vmatpush.msra.mxu0 0.0
        %752 = vmatpush.msra.mxu0 0.0
        %753 = vmatpush.msra.mxu0 0.0
        %754 = vmatpush.msra.mxu0 0.0
        %755 = vmatpush.msra.mxu0 0.0
        %756 = vmatpush.msra.mxu0 0.0
        %757 = vmatpush.msra.mxu0 0.0
        %758 = vmatpush.msra.mxu0 0.0
        %759 = vmatpush.msra.mxu0 0.0
        %760 = vmatpush.msra.mxu0 0.0
        %761 = vmatpush.msra.mxu0 0.0
        %762 = vmatpush.msra.mxu0 0.0
        %763 = vmatpush.msra.mxu0 0.0
        %764 = vmatpush.msra.mxu0 0.0
        %765 = vmatpush.msra.mxu0 %v724
        %766 = vmatmul.f32.gmra.mxu0 %v728
        %v767 = vpop.f32.mrf.mxu0
        %v768 = vadd.f32 0.0, %v767
        %769 = vdwg.mxu0
        %v770 = vadd.f32 %v688, %v748
        %v771 = vadd.f32 %v708, %v768
        %v772 = vld [vmem:[%s4] sm:$0xff]
        %774 = vset.pattern.permute.xlu0 0
        %775 = vperm.xlu0 %774, %v772
        %v776 = vpop.permute.xlu0 %775
        %v778 = vadd.f32 %v770, %v776
        %v779 = vadd.f32 %v771, %v776
        %v780 = vmax.f32 %v778, 0.0
        %v781 = vmax.f32 %v779, 0.0
        %v784 = vrot.slane %v601, 4
        %v785 = vrot.slane %v602, 4
        %vm788 = vcmask 1043456
        %v789 = vsel %vm788, %v784, %v780
        %v790 = vsel %vm788, %v785, %v781
        %791 = vrot.lane.b32.xlu0 %v789, 16
        %v792 = vpop.permute.xlu0 %791
        %793 = vrot.lane.b32.xlu0 %v790, 16
        %v794 = vpop.permute.xlu0 %793
        %vm795 = vcmp.lt.s32.totalorder %v494, 16
        %v796 = vsel %vm795, %v792, %v794
        %v797 = vsel %vm795, %v794, %v792
        %vm798 = vcmp.ge.s32.totalorder %v494, 16
        %vm799 = vcmp.ge.s32.totalorder %v495, 16
        %v800 = vsel %vm798, 1, 0
        %v801 = vsel %vm799, 1, 0
        %vm802 = vcmp.eq.s32.totalorder %v800, 1
        %vm803 = vcmp.eq.s32.totalorder %v801, 1
        %v804 = vsel %vm802, %v797, 0.0
        %v805 = vsel %vm803, %v796, 0.0
        %v806 = vld [vmem:[%s5] sm:$0xff]
        %s807 = scalar_lea.vmem %s5, 8
        %v808 = vld [vmem:[%s807] sm:$0xff]
        %v810 = vsel %vm623, %v808, 0
        %812 = vmatpush.msra.mxu0 0.0
        %813 = vmatpush.msra.mxu0 0.0
        %814 = vmatpush.msra.mxu0 0.0
        %815 = vmatpush.msra.mxu0 0.0
        %816 = vmatpush.msra.mxu0 0.0
        %817 = vmatpush.msra.mxu0 0.0
        %818 = vmatpush.msra.mxu0 0.0
        %819 = vmatpush.msra.mxu0 0.0
        %820 = vmatpush.msra.mxu0 0.0
        %821 = vmatpush.msra.mxu0 0.0
        %822 = vmatpush.msra.mxu0 0.0
        %823 = vmatpush.msra.mxu0 0.0
        %824 = vmatpush.msra.mxu0 0.0
        %825 = vmatpush.msra.mxu0 0.0
        %826 = vmatpush.msra.mxu0 0.0
        %827 = vmatpush.msra.mxu0 %v789
        %828 = vmatmul.f32.gmra.mxu0 %v810
        %v829 = vpop.f32.mrf.mxu0
        %v830 = vadd.f32 0.0, %v829
        %831 = vdwg.mxu0
        %832 = vmatpush.msra.mxu0 0.0
        %833 = vmatpush.msra.mxu0 0.0
        %834 = vmatpush.msra.mxu0 0.0
        %835 = vmatpush.msra.mxu0 0.0
        %836 = vmatpush.msra.mxu0 0.0
        %837 = vmatpush.msra.mxu0 0.0
        %838 = vmatpush.msra.mxu0 0.0
        %839 = vmatpush.msra.mxu0 0.0
        %840 = vmatpush.msra.mxu0 0.0
        %841 = vmatpush.msra.mxu0 0.0
        %842 = vmatpush.msra.mxu0 0.0
        %843 = vmatpush.msra.mxu0 0.0
        %844 = vmatpush.msra.mxu0 0.0
        %845 = vmatpush.msra.mxu0 0.0
        %846 = vmatpush.msra.mxu0 0.0
        %847 = vmatpush.msra.mxu0 %v790
        %848 = vmatmul.f32.gmra.mxu0 %v810
        %v849 = vpop.f32.mrf.mxu0
        %v850 = vadd.f32 0.0, %v849
        %851 = vdwg.mxu0
        %v853 = vsel %vm623, %v806, 0
        %855 = vmatpush.msra.mxu0 0.0
        %856 = vmatpush.msra.mxu0 0.0
        %857 = vmatpush.msra.mxu0 0.0
        %858 = vmatpush.msra.mxu0 0.0
        %859 = vmatpush.msra.mxu0 0.0
        %860 = vmatpush.msra.mxu0 0.0
        %861 = vmatpush.msra.mxu0 0.0
        %862 = vmatpush.msra.mxu0 0.0
        %863 = vmatpush.msra.mxu0 0.0
        %864 = vmatpush.msra.mxu0 0.0
        %865 = vmatpush.msra.mxu0 0.0
        %866 = vmatpush.msra.mxu0 0.0
        %867 = vmatpush.msra.mxu0 0.0
        %868 = vmatpush.msra.mxu0 0.0
        %869 = vmatpush.msra.mxu0 0.0
        %870 = vmatpush.msra.mxu0 %v804
        %871 = vmatmul.f32.gmra.mxu0 %v853
        %v872 = vpop.f32.mrf.mxu0
        %v873 = vadd.f32 %v830, %v872
        %874 = vdwg.mxu0
        %875 = vmatpush.msra.mxu0 0.0
        %876 = vmatpush.msra.mxu0 0.0
        %877 = vmatpush.msra.mxu0 0.0
        %878 = vmatpush.msra.mxu0 0.0
        %879 = vmatpush.msra.mxu0 0.0
        %880 = vmatpush.msra.mxu0 0.0
        %881 = vmatpush.msra.mxu0 0.0
        %882 = vmatpush.msra.mxu0 0.0
        %883 = vmatpush.msra.mxu0 0.0
        %884 = vmatpush.msra.mxu0 0.0
        %885 = vmatpush.msra.mxu0 0.0
        %886 = vmatpush.msra.mxu0 0.0
        %887 = vmatpush.msra.mxu0 0.0
        %888 = vmatpush.msra.mxu0 0.0
        %889 = vmatpush.msra.mxu0 0.0
        %890 = vmatpush.msra.mxu0 %v805
        %891 = vmatmul.f32.gmra.mxu0 %v853
        %v892 = vpop.f32.mrf.mxu0
        %v893 = vadd.f32 %v850, %v892
        %894 = vdwg.mxu0
        %895 = vrot.lane.b32.xlu0 %v789, 112
        %v896 = vpop.permute.xlu0 %895
        %897 = vrot.lane.b32.xlu0 %v790, 112
        %v898 = vpop.permute.xlu0 %897
        %vm899 = vcmp.lt.s32.totalorder %v494, 112
        %v900 = vsel %vm899, %v896, %v898
        %v901 = vsel %vm899, %v898, %v896
        %vm902 = vcmp.lt.s32.totalorder %v494, 240
        %vm903 = vcmp.lt.s32.totalorder %v495, 240
        %v904 = vsel %vm902, 1, 0
        %v905 = vsel %vm903, 1, 0
        %vm906 = vcmp.eq.s32.totalorder %v904, 1
        %vm907 = vcmp.eq.s32.totalorder %v905, 1
        %v908 = vsel %vm906, %v900, 0.0
        %v909 = vsel %vm907, %v901, 0.0
        %s910 = scalar_lea.vmem %s5, 16
        %v911 = vld [vmem:[%s910] sm:$0xff]
        %v913 = vsel %vm623, %v911, 0
        %915 = vmatpush.msra.mxu0 0.0
        %916 = vmatpush.msra.mxu0 0.0
        %917 = vmatpush.msra.mxu0 0.0
        %918 = vmatpush.msra.mxu0 0.0
        %919 = vmatpush.msra.mxu0 0.0
        %920 = vmatpush.msra.mxu0 0.0
        %921 = vmatpush.msra.mxu0 0.0
        %922 = vmatpush.msra.mxu0 0.0
        %923 = vmatpush.msra.mxu0 0.0
        %924 = vmatpush.msra.mxu0 0.0
        %925 = vmatpush.msra.mxu0 0.0
        %926 = vmatpush.msra.mxu0 0.0
        %927 = vmatpush.msra.mxu0 0.0
        %928 = vmatpush.msra.mxu0 0.0
        %929 = vmatpush.msra.mxu0 0.0
        %930 = vmatpush.msra.mxu0 %v908
        %931 = vmatmul.f32.gmra.mxu0 %v913
        %v932 = vpop.f32.mrf.mxu0
        %v933 = vadd.f32 0.0, %v932
        %934 = vdwg.mxu0
        %935 = vmatpush.msra.mxu0 0.0
        %936 = vmatpush.msra.mxu0 0.0
        %937 = vmatpush.msra.mxu0 0.0
        %938 = vmatpush.msra.mxu0 0.0
        %939 = vmatpush.msra.mxu0 0.0
        %940 = vmatpush.msra.mxu0 0.0
        %941 = vmatpush.msra.mxu0 0.0
        %942 = vmatpush.msra.mxu0 0.0
        %943 = vmatpush.msra.mxu0 0.0
        %944 = vmatpush.msra.mxu0 0.0
        %945 = vmatpush.msra.mxu0 0.0
        %946 = vmatpush.msra.mxu0 0.0
        %947 = vmatpush.msra.mxu0 0.0
        %948 = vmatpush.msra.mxu0 0.0
        %949 = vmatpush.msra.mxu0 0.0
        %950 = vmatpush.msra.mxu0 %v909
        %951 = vmatmul.f32.gmra.mxu0 %v913
        %v952 = vpop.f32.mrf.mxu0
        %v953 = vadd.f32 0.0, %v952
        %954 = vdwg.mxu0
        %v955 = vadd.f32 %v873, %v933
        %v956 = vadd.f32 %v893, %v953
        %v957 = vld [vmem:[%s6] sm:$0xff]
        %959 = vset.pattern.permute.xlu0 0
        %960 = vperm.xlu0 %959, %v957
        %v961 = vpop.permute.xlu0 %960
        %v963 = vadd.f32 %v955, %v961
        %v964 = vadd.f32 %v956, %v961
        %v965 = vmax.f32 %v963, 0.0
        %v966 = vmax.f32 %v964, 0.0
        %v969 = vrot.slane %v780, 4
        %v970 = vrot.slane %v781, 4
        %v973 = vsel %vm788, %v965, %v969
        %v974 = vsel %vm788, %v966, %v970
        %975 = vrot.lane.b32.xlu0 %v973, 51
        %v976 = vpop.permute.xlu0 %975
        %977 = vrot.lane.b32.xlu0 %v974, 51
        %v978 = vpop.permute.xlu0 %977
        %vm979 = vcmp.lt.s32.totalorder %v494, 51
        %v980 = vsel %vm979, %v976, %v978
        %v981 = vsel %vm979, %v978, %v976
        %vm982 = vcmp.ge.s32.totalorder %v494, 48
        %vm983 = vcmp.ge.s32.totalorder %v495, 48
        %vm984 = vcmp.ge.s32.totalorder %v496, 3
        %vm985 = vcmp.ge.s32.totalorder %v497, 3
        %vm986 = vmand %vm982, %vm984
        %vm987 = vmand %vm983, %vm985
        %v988 = vsel %vm986, 1, 0
        %v989 = vsel %vm987, 1, 0
        %vm990 = vcmp.eq.s32.totalorder %v988, 1
        %vm991 = vcmp.eq.s32.totalorder %v989, 1
        %v992 = vsel %vm990, %v981, 0.0
        %v993 = vsel %vm991, %v980, 0.0
        %v994 = vld [vmem:[%s7] sm:$0xff]
        %995 = vrot.lane.b32.xlu0 %v973, 48
        %v996 = vpop.permute.xlu0 %995
        %997 = vrot.lane.b32.xlu0 %v974, 48
        %v998 = vpop.permute.xlu0 %997
        %vm999 = vcmp.lt.s32.totalorder %v494, 48
        %v1000 = vsel %vm999, %v996, %v998
        %v1001 = vsel %vm999, %v998, %v996
        %v1002 = vsel %vm982, 1, 0
        %v1003 = vsel %vm983, 1, 0
        %vm1004 = vcmp.eq.s32.totalorder %v1002, 1
        %vm1005 = vcmp.eq.s32.totalorder %v1003, 1
        %v1006 = vsel %vm1004, %v1001, 0.0
        %v1007 = vsel %vm1005, %v1000, 0.0
        %s1008 = scalar_lea.vmem %s7, 8
        %v1009 = vld [vmem:[%s1008] sm:$0xff]
        %v1011 = vsel %vm623, %v1009, 0
        %1013 = vmatpush.msra.mxu0 0.0
        %1014 = vmatpush.msra.mxu0 0.0
        %1015 = vmatpush.msra.mxu0 0.0
        %1016 = vmatpush.msra.mxu0 0.0
        %1017 = vmatpush.msra.mxu0 0.0
        %1018 = vmatpush.msra.mxu0 0.0
        %1019 = vmatpush.msra.mxu0 0.0
        %1020 = vmatpush.msra.mxu0 0.0
        %1021 = vmatpush.msra.mxu0 0.0
        %1022 = vmatpush.msra.mxu0 0.0
        %1023 = vmatpush.msra.mxu0 0.0
        %1024 = vmatpush.msra.mxu0 0.0
        %1025 = vmatpush.msra.mxu0 0.0
        %1026 = vmatpush.msra.mxu0 0.0
        %1027 = vmatpush.msra.mxu0 0.0
        %1028 = vmatpush.msra.mxu0 %v1006
        %1029 = vmatmul.f32.gmra.mxu0 %v1011
        %v1030 = vpop.f32.mrf.mxu0
        %v1031 = vadd.f32 0.0, %v1030
        %1032 = vdwg.mxu0
        %1033 = vmatpush.msra.mxu0 0.0
        %1034 = vmatpush.msra.mxu0 0.0
        %1035 = vmatpush.msra.mxu0 0.0
        %1036 = vmatpush.msra.mxu0 0.0
        %1037 = vmatpush.msra.mxu0 0.0
        %1038 = vmatpush.msra.mxu0 0.0
        %1039 = vmatpush.msra.mxu0 0.0
        %1040 = vmatpush.msra.mxu0 0.0
        %1041 = vmatpush.msra.mxu0 0.0
        %1042 = vmatpush.msra.mxu0 0.0
        %1043 = vmatpush.msra.mxu0 0.0
        %1044 = vmatpush.msra.mxu0 0.0
        %1045 = vmatpush.msra.mxu0 0.0
        %1046 = vmatpush.msra.mxu0 0.0
        %1047 = vmatpush.msra.mxu0 0.0
        %1048 = vmatpush.msra.mxu0 %v1007
        %1049 = vmatmul.f32.gmra.mxu0 %v1011
        %v1050 = vpop.f32.mrf.mxu0
        %v1051 = vadd.f32 0.0, %v1050
        %1052 = vdwg.mxu0
        %v1054 = vsel %vm623, %v994, 0
        %1056 = vmatpush.msra.mxu0 0.0
        %1057 = vmatpush.msra.mxu0 0.0
        %1058 = vmatpush.msra.mxu0 0.0
        %1059 = vmatpush.msra.mxu0 0.0
        %1060 = vmatpush.msra.mxu0 0.0
        %1061 = vmatpush.msra.mxu0 0.0
        %1062 = vmatpush.msra.mxu0 0.0
        %1063 = vmatpush.msra.mxu0 0.0
        %1064 = vmatpush.msra.mxu0 0.0
        %1065 = vmatpush.msra.mxu0 0.0
        %1066 = vmatpush.msra.mxu0 0.0
        %1067 = vmatpush.msra.mxu0 0.0
        %1068 = vmatpush.msra.mxu0 0.0
        %1069 = vmatpush.msra.mxu0 0.0
        %1070 = vmatpush.msra.mxu0 0.0
        %1071 = vmatpush.msra.mxu0 %v992
        %1072 = vmatmul.f32.gmra.mxu0 %v1054
        %v1073 = vpop.f32.mrf.mxu0
        %v1074 = vadd.f32 %v1031, %v1073
        %1075 = vdwg.mxu0
        %1076 = vmatpush.msra.mxu0 0.0
        %1077 = vmatpush.msra.mxu0 0.0
        %1078 = vmatpush.msra.mxu0 0.0
        %1079 = vmatpush.msra.mxu0 0.0
        %1080 = vmatpush.msra.mxu0 0.0
        %1081 = vmatpush.msra.mxu0 0.0
        %1082 = vmatpush.msra.mxu0 0.0
        %1083 = vmatpush.msra.mxu0 0.0
        %1084 = vmatpush.msra.mxu0 0.0
        %1085 = vmatpush.msra.mxu0 0.0
        %1086 = vmatpush.msra.mxu0 0.0
        %1087 = vmatpush.msra.mxu0 0.0
        %1088 = vmatpush.msra.mxu0 0.0
        %1089 = vmatpush.msra.mxu0 0.0
        %1090 = vmatpush.msra.mxu0 0.0
        %1091 = vmatpush.msra.mxu0 %v993
        %1092 = vmatmul.f32.gmra.mxu0 %v1054
        %v1093 = vpop.f32.mrf.mxu0
        %v1094 = vadd.f32 %v1051, %v1093
        %1095 = vdwg.mxu0
        %1096 = vrot.lane.b32.xlu0 %v973, 45
        %v1097 = vpop.permute.xlu0 %1096
        %1098 = vrot.lane.b32.xlu0 %v974, 45
        %v1099 = vpop.permute.xlu0 %1098
        %vm1100 = vcmp.lt.s32.totalorder %v494, 45
        %v1101 = vsel %vm1100, %v1097, %v1099
        %v1102 = vsel %vm1100, %v1099, %v1097
        %vm1103 = vcmp.lt.s32.totalorder %v496, 13
        %vm1104 = vcmp.lt.s32.totalorder %v497, 13
        %vm1105 = vmand %vm982, %vm1103
        %vm1106 = vmand %vm983, %vm1104
        %v1107 = vsel %vm1105, 1, 0
        %v1108 = vsel %vm1106, 1, 0
        %vm1109 = vcmp.eq.s32.totalorder %v1107, 1
        %vm1110 = vcmp.eq.s32.totalorder %v1108, 1
        %v1111 = vsel %vm1109, %v1102, 0.0
        %v1112 = vsel %vm1110, %v1101, 0.0
        %s1113 = scalar_lea.vmem %s7, 16
        %v1114 = vld [vmem:[%s1113] sm:$0xff]
        %v1116 = vsel %vm623, %v1114, 0
        %1118 = vmatpush.msra.mxu0 0.0
        %1119 = vmatpush.msra.mxu0 0.0
        %1120 = vmatpush.msra.mxu0 0.0
        %1121 = vmatpush.msra.mxu0 0.0
        %1122 = vmatpush.msra.mxu0 0.0
        %1123 = vmatpush.msra.mxu0 0.0
        %1124 = vmatpush.msra.mxu0 0.0
        %1125 = vmatpush.msra.mxu0 0.0
        %1126 = vmatpush.msra.mxu0 0.0
        %1127 = vmatpush.msra.mxu0 0.0
        %1128 = vmatpush.msra.mxu0 0.0
        %1129 = vmatpush.msra.mxu0 0.0
        %1130 = vmatpush.msra.mxu0 0.0
        %1131 = vmatpush.msra.mxu0 0.0
        %1132 = vmatpush.msra.mxu0 0.0
        %1133 = vmatpush.msra.mxu0 %v1111
        %1134 = vmatmul.f32.gmra.mxu0 %v1116
        %v1135 = vpop.f32.mrf.mxu0
        %v1136 = vadd.f32 0.0, %v1135
        %1137 = vdwg.mxu0
        %1138 = vmatpush.msra.mxu0 0.0
        %1139 = vmatpush.msra.mxu0 0.0
        %1140 = vmatpush.msra.mxu0 0.0
        %1141 = vmatpush.msra.mxu0 0.0
        %1142 = vmatpush.msra.mxu0 0.0
        %1143 = vmatpush.msra.mxu0 0.0
        %1144 = vmatpush.msra.mxu0 0.0
        %1145 = vmatpush.msra.mxu0 0.0
        %1146 = vmatpush.msra.mxu0 0.0
        %1147 = vmatpush.msra.mxu0 0.0
        %1148 = vmatpush.msra.mxu0 0.0
        %1149 = vmatpush.msra.mxu0 0.0
        %1150 = vmatpush.msra.mxu0 0.0
        %1151 = vmatpush.msra.mxu0 0.0
        %1152 = vmatpush.msra.mxu0 0.0
        %1153 = vmatpush.msra.mxu0 %v1112
        %1154 = vmatmul.f32.gmra.mxu0 %v1116
        %v1155 = vpop.f32.mrf.mxu0
        %v1156 = vadd.f32 0.0, %v1155
        %1157 = vdwg.mxu0
        %v1158 = vadd.f32 %v1074, %v1136
        %v1159 = vadd.f32 %v1094, %v1156
        %1160 = vrot.lane.b32.xlu0 %v973, 3
        %v1161 = vpop.permute.xlu0 %1160
        %1162 = vrot.lane.b32.xlu0 %v974, 3
        %v1163 = vpop.permute.xlu0 %1162
        %vm1164 = vcmp.lt.s32.totalorder %v494, 3
        %v1165 = vsel %vm1164, %v1161, %v1163
        %v1166 = vsel %vm1164, %v1163, %v1161
        %v1167 = vsel %vm984, 1, 0
        %v1168 = vsel %vm985, 1, 0
        %vm1169 = vcmp.eq.s32.totalorder %v1167, 1
        %vm1170 = vcmp.eq.s32.totalorder %v1168, 1
        %v1171 = vsel %vm1169, %v1166, 0.0
        %v1172 = vsel %vm1170, %v1165, 0.0
        %s1173 = scalar_lea.vmem %s7, 24
        %v1174 = vld [vmem:[%s1173] sm:$0xff]
        %v1176 = vsel %vm623, %v1174, 0
        %1178 = vmatpush.msra.mxu0 0.0
        %1179 = vmatpush.msra.mxu0 0.0
        %1180 = vmatpush.msra.mxu0 0.0
        %1181 = vmatpush.msra.mxu0 0.0
        %1182 = vmatpush.msra.mxu0 0.0
        %1183 = vmatpush.msra.mxu0 0.0
        %1184 = vmatpush.msra.mxu0 0.0
        %1185 = vmatpush.msra.mxu0 0.0
        %1186 = vmatpush.msra.mxu0 0.0
        %1187 = vmatpush.msra.mxu0 0.0
        %1188 = vmatpush.msra.mxu0 0.0
        %1189 = vmatpush.msra.mxu0 0.0
        %1190 = vmatpush.msra.mxu0 0.0
        %1191 = vmatpush.msra.mxu0 0.0
        %1192 = vmatpush.msra.mxu0 0.0
        %1193 = vmatpush.msra.mxu0 %v1171
        %1194 = vmatmul.f32.gmra.mxu0 %v1176
        %v1195 = vpop.f32.mrf.mxu0
        %v1196 = vadd.f32 0.0, %v1195
        %1197 = vdwg.mxu0
        %1198 = vmatpush.msra.mxu0 0.0
        %1199 = vmatpush.msra.mxu0 0.0
        %1200 = vmatpush.msra.mxu0 0.0
        %1201 = vmatpush.msra.mxu0 0.0
        %1202 = vmatpush.msra.mxu0 0.0
        %1203 = vmatpush.msra.mxu0 0.0
        %1204 = vmatpush.msra.mxu0 0.0
        %1205 = vmatpush.msra.mxu0 0.0
        %1206 = vmatpush.msra.mxu0 0.0
        %1207 = vmatpush.msra.mxu0 0.0
        %1208 = vmatpush.msra.mxu0 0.0
        %1209 = vmatpush.msra.mxu0 0.0
        %1210 = vmatpush.msra.mxu0 0.0
        %1211 = vmatpush.msra.mxu0 0.0
        %1212 = vmatpush.msra.mxu0 0.0
        %1213 = vmatpush.msra.mxu0 %v1172
        %1214 = vmatmul.f32.gmra.mxu0 %v1176
        %v1215 = vpop.f32.mrf.mxu0
        %v1216 = vadd.f32 0.0, %v1215
        %1217 = vdwg.mxu0
        %v1218 = vadd.f32 %v1158, %v1196
        %v1219 = vadd.f32 %v1159, %v1216
        %s1220 = scalar_lea.vmem %s7, 32
        %v1221 = vld [vmem:[%s1220] sm:$0xff]
        %v1223 = vsel %vm623, %v1221, 0
        %1225 = vmatpush.msra.mxu0 0.0
        %1226 = vmatpush.msra.mxu0 0.0
        %1227 = vmatpush.msra.mxu0 0.0
        %1228 = vmatpush.msra.mxu0 0.0
        %1229 = vmatpush.msra.mxu0 0.0
        %1230 = vmatpush.msra.mxu0 0.0
        %1231 = vmatpush.msra.mxu0 0.0
        %1232 = vmatpush.msra.mxu0 0.0
        %1233 = vmatpush.msra.mxu0 0.0
        %1234 = vmatpush.msra.mxu0 0.0
        %1235 = vmatpush.msra.mxu0 0.0
        %1236 = vmatpush.msra.mxu0 0.0
        %1237 = vmatpush.msra.mxu0 0.0
        %1238 = vmatpush.msra.mxu0 0.0
        %1239 = vmatpush.msra.mxu0 0.0
        %1240 = vmatpush.msra.mxu0 %v973
        %1241 = vmatmul.f32.gmra.mxu0 %v1223
        %v1242 = vpop.f32.mrf.mxu0
        %v1243 = vadd.f32 0.0, %v1242
        %1244 = vdwg.mxu0
        %1245 = vmatpush.msra.mxu0 0.0
        %1246 = vmatpush.msra.mxu0 0.0
        %1247 = vmatpush.msra.mxu0 0.0
        %1248 = vmatpush.msra.mxu0 0.0
        %1249 = vmatpush.msra.mxu0 0.0
        %1250 = vmatpush.msra.mxu0 0.0
        %1251 = vmatpush.msra.mxu0 0.0
        %1252 = vmatpush.msra.mxu0 0.0
        %1253 = vmatpush.msra.mxu0 0.0
        %1254 = vmatpush.msra.mxu0 0.0
        %1255 = vmatpush.msra.mxu0 0.0
        %1256 = vmatpush.msra.mxu0 0.0
        %1257 = vmatpush.msra.mxu0 0.0
        %1258 = vmatpush.msra.mxu0 0.0
        %1259 = vmatpush.msra.mxu0 0.0
        %1260 = vmatpush.msra.mxu0 %v974
        %1261 = vmatmul.f32.gmra.mxu0 %v1223
        %v1262 = vpop.f32.mrf.mxu0
        %v1263 = vadd.f32 0.0, %v1262
        %1264 = vdwg.mxu0
        %v1265 = vadd.f32 %v1218, %v1243
        %v1266 = vadd.f32 %v1219, %v1263
        %1267 = vrot.lane.b32.xlu0 %v973, 125
        %v1268 = vpop.permute.xlu0 %1267
        %1269 = vrot.lane.b32.xlu0 %v974, 125
        %v1270 = vpop.permute.xlu0 %1269
        %vm1271 = vcmp.lt.s32.totalorder %v494, 125
        %v1272 = vsel %vm1271, %v1268, %v1270
        %v1273 = vsel %vm1271, %v1270, %v1268
        %v1274 = vsel %vm1103, 1, 0
        %v1275 = vsel %vm1104, 1, 0
        %vm1276 = vcmp.eq.s32.totalorder %v1274, 1
        %vm1277 = vcmp.eq.s32.totalorder %v1275, 1
        %v1278 = vsel %vm1276, %v1272, 0.0
        %v1279 = vsel %vm1277, %v1273, 0.0
        %s1280 = scalar_lea.vmem %s7, 40
        %v1281 = vld [vmem:[%s1280] sm:$0xff]
        %v1283 = vsel %vm623, %v1281, 0
        %1285 = vmatpush.msra.mxu0 0.0
        %1286 = vmatpush.msra.mxu0 0.0
        %1287 = vmatpush.msra.mxu0 0.0
        %1288 = vmatpush.msra.mxu0 0.0
        %1289 = vmatpush.msra.mxu0 0.0
        %1290 = vmatpush.msra.mxu0 0.0
        %1291 = vmatpush.msra.mxu0 0.0
        %1292 = vmatpush.msra.mxu0 0.0
        %1293 = vmatpush.msra.mxu0 0.0
        %1294 = vmatpush.msra.mxu0 0.0
        %1295 = vmatpush.msra.mxu0 0.0
        %1296 = vmatpush.msra.mxu0 0.0
        %1297 = vmatpush.msra.mxu0 0.0
        %1298 = vmatpush.msra.mxu0 0.0
        %1299 = vmatpush.msra.mxu0 0.0
        %1300 = vmatpush.msra.mxu0 %v1278
        %1301 = vmatmul.f32.gmra.mxu0 %v1283
        %v1302 = vpop.f32.mrf.mxu0
        %v1303 = vadd.f32 0.0, %v1302
        %1304 = vdwg.mxu0
        %1305 = vmatpush.msra.mxu0 0.0
        %1306 = vmatpush.msra.mxu0 0.0
        %1307 = vmatpush.msra.mxu0 0.0
        %1308 = vmatpush.msra.mxu0 0.0
        %1309 = vmatpush.msra.mxu0 0.0
        %1310 = vmatpush.msra.mxu0 0.0
        %1311 = vmatpush.msra.mxu0 0.0
        %1312 = vmatpush.msra.mxu0 0.0
        %1313 = vmatpush.msra.mxu0 0.0
        %1314 = vmatpush.msra.mxu0 0.0
        %1315 = vmatpush.msra.mxu0 0.0
        %1316 = vmatpush.msra.mxu0 0.0
        %1317 = vmatpush.msra.mxu0 0.0
        %1318 = vmatpush.msra.mxu0 0.0
        %1319 = vmatpush.msra.mxu0 0.0
        %1320 = vmatpush.msra.mxu0 %v1279
        %1321 = vmatmul.f32.gmra.mxu0 %v1283
        %v1322 = vpop.f32.mrf.mxu0
        %v1323 = vadd.f32 0.0, %v1322
        %1324 = vdwg.mxu0
        %v1325 = vadd.f32 %v1265, %v1303
        %v1326 = vadd.f32 %v1266, %v1323
        %1327 = vrot.lane.b32.xlu0 %v973, 83
        %v1328 = vpop.permute.xlu0 %1327
        %1329 = vrot.lane.b32.xlu0 %v974, 83
        %v1330 = vpop.permute.xlu0 %1329
        %vm1331 = vcmp.lt.s32.totalorder %v494, 83
        %v1332 = vsel %vm1331, %v1328, %v1330
        %v1333 = vsel %vm1331, %v1330, %v1328
        %vm1334 = vcmp.lt.s32.totalorder %v494, 208
        %vm1335 = vcmp.lt.s32.totalorder %v495, 208
        %vm1336 = vmand %vm1334, %vm984
        %vm1337 = vmand %vm1335, %vm985
        %v1338 = vsel %vm1336, 1, 0
        %v1339 = vsel %vm1337, 1, 0
        %vm1340 = vcmp.eq.s32.totalorder %v1338, 1
        %vm1341 = vcmp.eq.s32.totalorder %v1339, 1
        %v1342 = vsel %vm1340, %v1332, 0.0
        %v1343 = vsel %vm1341, %v1333, 0.0
        %s1344 = scalar_lea.vmem %s7, 48
        %v1345 = vld [vmem:[%s1344] sm:$0xff]
        %v1347 = vsel %vm623, %v1345, 0
        %1349 = vmatpush.msra.mxu0 0.0
        %1350 = vmatpush.msra.mxu0 0.0
        %1351 = vmatpush.msra.mxu0 0.0
        %1352 = vmatpush.msra.mxu0 0.0
        %1353 = vmatpush.msra.mxu0 0.0
        %1354 = vmatpush.msra.mxu0 0.0
        %1355 = vmatpush.msra.mxu0 0.0
        %1356 = vmatpush.msra.mxu0 0.0
        %1357 = vmatpush.msra.mxu0 0.0
        %1358 = vmatpush.msra.mxu0 0.0
        %1359 = vmatpush.msra.mxu0 0.0
        %1360 = vmatpush.msra.mxu0 0.0
        %1361 = vmatpush.msra.mxu0 0.0
        %1362 = vmatpush.msra.mxu0 0.0
        %1363 = vmatpush.msra.mxu0 0.0
        %1364 = vmatpush.msra.mxu0 %v1342
        %1365 = vmatmul.f32.gmra.mxu0 %v1347
        %v1366 = vpop.f32.mrf.mxu0
        %v1367 = vadd.f32 0.0, %v1366
        %1368 = vdwg.mxu0
        %1369 = vmatpush.msra.mxu0 0.0
        %1370 = vmatpush.msra.mxu0 0.0
        %1371 = vmatpush.msra.mxu0 0.0
        %1372 = vmatpush.msra.mxu0 0.0
        %1373 = vmatpush.msra.mxu0 0.0
        %1374 = vmatpush.msra.mxu0 0.0
        %1375 = vmatpush.msra.mxu0 0.0
        %1376 = vmatpush.msra.mxu0 0.0
        %1377 = vmatpush.msra.mxu0 0.0
        %1378 = vmatpush.msra.mxu0 0.0
        %1379 = vmatpush.msra.mxu0 0.0
        %1380 = vmatpush.msra.mxu0 0.0
        %1381 = vmatpush.msra.mxu0 0.0
        %1382 = vmatpush.msra.mxu0 0.0
        %1383 = vmatpush.msra.mxu0 0.0
        %1384 = vmatpush.msra.mxu0 %v1343
        %1385 = vmatmul.f32.gmra.mxu0 %v1347
        %v1386 = vpop.f32.mrf.mxu0
        %v1387 = vadd.f32 0.0, %v1386
        %1388 = vdwg.mxu0
        %v1389 = vadd.f32 %v1325, %v1367
        %v1390 = vadd.f32 %v1326, %v1387
        %1391 = vrot.lane.b32.xlu0 %v973, 80
        %v1392 = vpop.permute.xlu0 %1391
        %1393 = vrot.lane.b32.xlu0 %v974, 80
        %v1394 = vpop.permute.xlu0 %1393
        %vm1395 = vcmp.lt.s32.totalorder %v494, 80
        %v1396 = vsel %vm1395, %v1392, %v1394
        %v1397 = vsel %vm1395, %v1394, %v1392
        %v1398 = vsel %vm1334, 1, 0
        %v1399 = vsel %vm1335, 1, 0
        %vm1400 = vcmp.eq.s32.totalorder %v1398, 1
        %vm1401 = vcmp.eq.s32.totalorder %v1399, 1
        %v1402 = vsel %vm1400, %v1396, 0.0
        %v1403 = vsel %vm1401, %v1397, 0.0
        %s1404 = scalar_lea.vmem %s7, 56
        %v1405 = vld [vmem:[%s1404] sm:$0xff]
        %v1407 = vsel %vm623, %v1405, 0
        %1409 = vmatpush.msra.mxu0 0.0
        %1410 = vmatpush.msra.mxu0 0.0
        %1411 = vmatpush.msra.mxu0 0.0
        %1412 = vmatpush.msra.mxu0 0.0
        %1413 = vmatpush.msra.mxu0 0.0
        %1414 = vmatpush.msra.mxu0 0.0
        %1415 = vmatpush.msra.mxu0 0.0
        %1416 = vmatpush.msra.mxu0 0.0
        %1417 = vmatpush.msra.mxu0 0.0
        %1418 = vmatpush.msra.mxu0 0.0
        %1419 = vmatpush.msra.mxu0 0.0
        %1420 = vmatpush.msra.mxu0 0.0
        %1421 = vmatpush.msra.mxu0 0.0
        %1422 = vmatpush.msra.mxu0 0.0
        %1423 = vmatpush.msra.mxu0 0.0
        %1424 = vmatpush.msra.mxu0 %v1402
        %1425 = vmatmul.f32.gmra.mxu0 %v1407
        %v1426 = vpop.f32.mrf.mxu0
        %v1427 = vadd.f32 0.0, %v1426
        %1428 = vdwg.mxu0
        %1429 = vmatpush.msra.mxu0 0.0
        %1430 = vmatpush.msra.mxu0 0.0
        %1431 = vmatpush.msra.mxu0 0.0
        %1432 = vmatpush.msra.mxu0 0.0
        %1433 = vmatpush.msra.mxu0 0.0
        %1434 = vmatpush.msra.mxu0 0.0
        %1435 = vmatpush.msra.mxu0 0.0
        %1436 = vmatpush.msra.mxu0 0.0
        %1437 = vmatpush.msra.mxu0 0.0
        %1438 = vmatpush.msra.mxu0 0.0
        %1439 = vmatpush.msra.mxu0 0.0
        %1440 = vmatpush.msra.mxu0 0.0
        %1441 = vmatpush.msra.mxu0 0.0
        %1442 = vmatpush.msra.mxu0 0.0
        %1443 = vmatpush.msra.mxu0 0.0
        %1444 = vmatpush.msra.mxu0 %v1403
        %1445 = vmatmul.f32.gmra.mxu0 %v1407
        %v1446 = vpop.f32.mrf.mxu0
        %v1447 = vadd.f32 0.0, %v1446
        %1448 = vdwg.mxu0
        %v1449 = vadd.f32 %v1389, %v1427
        %v1450 = vadd.f32 %v1390, %v1447
        %1451 = vrot.lane.b32.xlu0 %v973, 77
        %v1452 = vpop.permute.xlu0 %1451
        %1453 = vrot.lane.b32.xlu0 %v974, 77
        %v1454 = vpop.permute.xlu0 %1453
        %vm1455 = vcmp.lt.s32.totalorder %v494, 77
        %v1456 = vsel %vm1455, %v1452, %v1454
        %v1457 = vsel %vm1455, %v1454, %v1452
        %vm1458 = vmand %vm1334, %vm1103
        %vm1459 = vmand %vm1335, %vm1104
        %v1460 = vsel %vm1458, 1, 0
        %v1461 = vsel %vm1459, 1, 0
        %vm1462 = vcmp.eq.s32.totalorder %v1460, 1
        %vm1463 = vcmp.eq.s32.totalorder %v1461, 1
        %v1464 = vsel %vm1462, %v1456, 0.0
        %v1465 = vsel %vm1463, %v1457, 0.0
        %s1466 = scalar_lea.vmem %s7, 64
        %v1467 = vld [vmem:[%s1466] sm:$0xff]
        %v1469 = vsel %vm623, %v1467, 0
        %1471 = vmatpush.msra.mxu0 0.0
        %1472 = vmatpush.msra.mxu0 0.0
        %1473 = vmatpush.msra.mxu0 0.0
        %1474 = vmatpush.msra.mxu0 0.0
        %1475 = vmatpush.msra.mxu0 0.0
        %1476 = vmatpush.msra.mxu0 0.0
        %1477 = vmatpush.msra.mxu0 0.0
        %1478 = vmatpush.msra.mxu0 0.0
        %1479 = vmatpush.msra.mxu0 0.0
        %1480 = vmatpush.msra.mxu0 0.0
        %1481 = vmatpush.msra.mxu0 0.0
        %1482 = vmatpush.msra.mxu0 0.0
        %1483 = vmatpush.msra.mxu0 0.0
        %1484 = vmatpush.msra.mxu0 0.0
        %1485 = vmatpush.msra.mxu0 0.0
        %1486 = vmatpush.msra.mxu0 %v1464
        %1487 = vmatmul.f32.gmra.mxu0 %v1469
        %v1488 = vpop.f32.mrf.mxu0
        %v1489 = vadd.f32 0.0, %v1488
        %1490 = vdwg.mxu0
        %1491 = vmatpush.msra.mxu0 0.0
        %1492 = vmatpush.msra.mxu0 0.0
        %1493 = vmatpush.msra.mxu0 0.0
        %1494 = vmatpush.msra.mxu0 0.0
        %1495 = vmatpush.msra.mxu0 0.0
        %1496 = vmatpush.msra.mxu0 0.0
        %1497 = vmatpush.msra.mxu0 0.0
        %1498 = vmatpush.msra.mxu0 0.0
        %1499 = vmatpush.msra.mxu0 0.0
        %1500 = vmatpush.msra.mxu0 0.0
        %1501 = vmatpush.msra.mxu0 0.0
        %1502 = vmatpush.msra.mxu0 0.0
        %1503 = vmatpush.msra.mxu0 0.0
        %1504 = vmatpush.msra.mxu0 0.0
        %1505 = vmatpush.msra.mxu0 0.0
        %1506 = vmatpush.msra.mxu0 %v1465
        %1507 = vmatmul.f32.gmra.mxu0 %v1469
        %v1508 = vpop.f32.mrf.mxu0
        %v1509 = vadd.f32 0.0, %v1508
        %1510 = vdwg.mxu0
        %v1511 = vadd.f32 %v1449, %v1489
        %v1512 = vadd.f32 %v1450, %v1509
        %v1513 = vld [vmem:[%s8] sm:$0xff]
        %1515 = vset.pattern.permute.xlu0 0
        %1516 = vperm.xlu0 %1515, %v1513
        %v1517 = vpop.permute.xlu0 %1516
        %v1519 = vadd.f32 %v1511, %v1517
        %v1520 = vadd.f32 %v1512, %v1517
        %1521 = vrot.lane.b32.xlu0 %v601, 17
        %v1522 = vpop.permute.xlu0 %1521
        %1523 = vrot.lane.b32.xlu0 %v602, 17
        %v1524 = vpop.permute.xlu0 %1523
        %vm1525 = vcmp.lt.s32.totalorder %v494, 17
        %v1526 = vsel %vm1525, %v1522, %v1524
        %v1527 = vsel %vm1525, %v1524, %v1522
        %vm1528 = vmand %vm798, %vm612
        %vm1529 = vmand %vm799, %vm613
        %v1530 = vsel %vm1528, 1, 0
        %v1531 = vsel %vm1529, 1, 0
        %vm1532 = vcmp.eq.s32.totalorder %v1530, 1
        %vm1533 = vcmp.eq.s32.totalorder %v1531, 1
        %v1534 = vsel %vm1532, %v1527, 0.0
        %v1535 = vsel %vm1533, %v1526, 0.0
        %v1536 = vld [vmem:[%s9] sm:$0xf]
        %1537 = vrot.lane.b32.xlu0 %v601, 16
        %v1538 = vpop.permute.xlu0 %1537
        %1539 = vrot.lane.b32.xlu0 %v602, 16
        %v1540 = vpop.permute.xlu0 %1539
        %v1541 = vsel %vm795, %v1538, %v1540
        %v1542 = vsel %vm795, %v1540, %v1538
        %v1543 = vsel %vm802, %v1542, 0.0
        %v1544 = vsel %vm803, %v1541, 0.0
        %s1545 = scalar_lea.vmem %s9, 4
        %v1546 = vld [vmem:[%s1545] sm:$0xf]
        %vm1547 = vcmask 31744
        %v1549 = vsel %vm1547, %v1546, 0
        %v1552 = vsel %vm788, %v1543, 0
        %v1555 = vsel %vm788, %v1544, 0
        %1557 = vmatpush.msra.mxu0 0.0
        %1558 = vmatpush.msra.mxu0 0.0
        %1559 = vmatpush.msra.mxu0 0.0
        %1560 = vmatpush.msra.mxu0 0.0
        %1561 = vmatpush.msra.mxu0 0.0
        %1562 = vmatpush.msra.mxu0 0.0
        %1563 = vmatpush.msra.mxu0 0.0
        %1564 = vmatpush.msra.mxu0 0.0
        %1565 = vmatpush.msra.mxu0 0.0
        %1566 = vmatpush.msra.mxu0 0.0
        %1567 = vmatpush.msra.mxu0 0.0
        %1568 = vmatpush.msra.mxu0 0.0
        %1569 = vmatpush.msra.mxu0 0.0
        %1570 = vmatpush.msra.mxu0 0.0
        %1571 = vmatpush.msra.mxu0 0.0
        %1572 = vmatpush.msra.mxu0 %v1552
        %1573 = vmatmul.f32.gmra.mxu0 %v1549
        %v1574 = vpop.f32.mrf.mxu0
        %v1575 = vadd.f32 0.0, %v1574
        %1576 = vdwg.mxu0
        %1577 = vmatpush.msra.mxu0 0.0
        %1578 = vmatpush.msra.mxu0 0.0
        %1579 = vmatpush.msra.mxu0 0.0
        %1580 = vmatpush.msra.mxu0 0.0
        %1581 = vmatpush.msra.mxu0 0.0
        %1582 = vmatpush.msra.mxu0 0.0
        %1583 = vmatpush.msra.mxu0 0.0
        %1584 = vmatpush.msra.mxu0 0.0
        %1585 = vmatpush.msra.mxu0 0.0
        %1586 = vmatpush.msra.mxu0 0.0
        %1587 = vmatpush.msra.mxu0 0.0
        %1588 = vmatpush.msra.mxu0 0.0
        %1589 = vmatpush.msra.mxu0 0.0
        %1590 = vmatpush.msra.mxu0 0.0
        %1591 = vmatpush.msra.mxu0 0.0
        %1592 = vmatpush.msra.mxu0 %v1555
        %1593 = vmatmul.f32.gmra.mxu0 %v1549
        %v1594 = vpop.f32.mrf.mxu0
        %v1595 = vadd.f32 0.0, %v1594
        %1596 = vdwg.mxu0
        %v1598 = vsel %vm1547, %v1536, 0
        %v1601 = vsel %vm788, %v1534, 0
        %v1604 = vsel %vm788, %v1535, 0
        %1606 = vmatpush.msra.mxu0 0.0
        %1607 = vmatpush.msra.mxu0 0.0
        %1608 = vmatpush.msra.mxu0 0.0
        %1609 = vmatpush.msra.mxu0 0.0
        %1610 = vmatpush.msra.mxu0 0.0
        %1611 = vmatpush.msra.mxu0 0.0
        %1612 = vmatpush.msra.mxu0 0.0
        %1613 = vmatpush.msra.mxu0 0.0
        %1614 = vmatpush.msra.mxu0 0.0
        %1615 = vmatpush.msra.mxu0 0.0
        %1616 = vmatpush.msra.mxu0 0.0
        %1617 = vmatpush.msra.mxu0 0.0
        %1618 = vmatpush.msra.mxu0 0.0
        %1619 = vmatpush.msra.mxu0 0.0
        %1620 = vmatpush.msra.mxu0 0.0
        %1621 = vmatpush.msra.mxu0 %v1601
        %1622 = vmatmul.f32.gmra.mxu0 %v1598
        %v1623 = vpop.f32.mrf.mxu0
        %v1624 = vadd.f32 %v1575, %v1623
        %1625 = vdwg.mxu0
        %1626 = vmatpush.msra.mxu0 0.0
        %1627 = vmatpush.msra.mxu0 0.0
        %1628 = vmatpush.msra.mxu0 0.0
        %1629 = vmatpush.msra.mxu0 0.0
        %1630 = vmatpush.msra.mxu0 0.0
        %1631 = vmatpush.msra.mxu0 0.0
        %1632 = vmatpush.msra.mxu0 0.0
        %1633 = vmatpush.msra.mxu0 0.0
        %1634 = vmatpush.msra.mxu0 0.0
        %1635 = vmatpush.msra.mxu0 0.0
        %1636 = vmatpush.msra.mxu0 0.0
        %1637 = vmatpush.msra.mxu0 0.0
        %1638 = vmatpush.msra.mxu0 0.0
        %1639 = vmatpush.msra.mxu0 0.0
        %1640 = vmatpush.msra.mxu0 0.0
        %1641 = vmatpush.msra.mxu0 %v1604
        %1642 = vmatmul.f32.gmra.mxu0 %v1598
        %v1643 = vpop.f32.mrf.mxu0
        %v1644 = vadd.f32 %v1595, %v1643
        %1645 = vdwg.mxu0
        %1646 = vrot.lane.b32.xlu0 %v601, 15
        %v1647 = vpop.permute.xlu0 %1646
        %1648 = vrot.lane.b32.xlu0 %v602, 15
        %v1649 = vpop.permute.xlu0 %1648
        %vm1650 = vcmp.lt.s32.totalorder %v494, 15
        %v1651 = vsel %vm1650, %v1647, %v1649
        %v1652 = vsel %vm1650, %v1649, %v1647
        %vm1653 = vmand %vm798, %vm717
        %vm1654 = vmand %vm799, %vm718
        %v1655 = vsel %vm1653, 1, 0
        %v1656 = vsel %vm1654, 1, 0
        %vm1657 = vcmp.eq.s32.totalorder %v1655, 1
        %vm1658 = vcmp.eq.s32.totalorder %v1656, 1
        %v1659 = vsel %vm1657, %v1652, 0.0
        %v1660 = vsel %vm1658, %v1651, 0.0
        %s1661 = scalar_lea.vmem %s9, 8
        %v1662 = vld [vmem:[%s1661] sm:$0xf]
        %v1664 = vsel %vm1547, %v1662, 0
        %v1667 = vsel %vm788, %v1659, 0
        %v1670 = vsel %vm788, %v1660, 0
        %1672 = vmatpush.msra.mxu0 0.0
        %1673 = vmatpush.msra.mxu0 0.0
        %1674 = vmatpush.msra.mxu0 0.0
        %1675 = vmatpush.msra.mxu0 0.0
        %1676 = vmatpush.msra.mxu0 0.0
        %1677 = vmatpush.msra.mxu0 0.0
        %1678 = vmatpush.msra.mxu0 0.0
        %1679 = vmatpush.msra.mxu0 0.0
        %1680 = vmatpush.msra.mxu0 0.0
        %1681 = vmatpush.msra.mxu0 0.0
        %1682 = vmatpush.msra.mxu0 0.0
        %1683 = vmatpush.msra.mxu0 0.0
        %1684 = vmatpush.msra.mxu0 0.0
        %1685 = vmatpush.msra.mxu0 0.0
        %1686 = vmatpush.msra.mxu0 0.0
        %1687 = vmatpush.msra.mxu0 %v1667
        %1688 = vmatmul.f32.gmra.mxu0 %v1664
        %v1689 = vpop.f32.mrf.mxu0
        %v1690 = vadd.f32 0.0, %v1689
        %1691 = vdwg.mxu0
        %1692 = vmatpush.msra.mxu0 0.0
        %1693 = vmatpush.msra.mxu0 0.0
        %1694 = vmatpush.msra.mxu0 0.0
        %1695 = vmatpush.msra.mxu0 0.0
        %1696 = vmatpush.msra.mxu0 0.0
        %1697 = vmatpush.msra.mxu0 0.0
        %1698 = vmatpush.msra.mxu0 0.0
        %1699 = vmatpush.msra.mxu0 0.0
        %1700 = vmatpush.msra.mxu0 0.0
        %1701 = vmatpush.msra.mxu0 0.0
        %1702 = vmatpush.msra.mxu0 0.0
        %1703 = vmatpush.msra.mxu0 0.0
        %1704 = vmatpush.msra.mxu0 0.0
        %1705 = vmatpush.msra.mxu0 0.0
        %1706 = vmatpush.msra.mxu0 0.0
        %1707 = vmatpush.msra.mxu0 %v1670
        %1708 = vmatmul.f32.gmra.mxu0 %v1664
        %v1709 = vpop.f32.mrf.mxu0
        %v1710 = vadd.f32 0.0, %v1709
        %1711 = vdwg.mxu0
        %v1712 = vadd.f32 %v1624, %v1690
        %v1713 = vadd.f32 %v1644, %v1710
        %1714 = vrot.lane.b32.xlu0 %v601, 1
        %v1715 = vpop.permute.xlu0 %1714
        %1716 = vrot.lane.b32.xlu0 %v602, 1
        %v1717 = vpop.permute.xlu0 %1716
        %v1718 = vsel %vm609, %v1715, %v1717
        %v1719 = vsel %vm609, %v1717, %v1715
        %v1720 = vsel %vm616, %v1719, 0.0
        %v1721 = vsel %vm617, %v1718, 0.0
        %s1722 = scalar_lea.vmem %s9, 12
        %v1723 = vld [vmem:[%s1722] sm:$0xf]
        %v1725 = vsel %vm1547, %v1723, 0
        %v1728 = vsel %vm788, %v1720, 0
        %v1731 = vsel %vm788, %v1721, 0
        %1733 = vmatpush.msra.mxu0 0.0
        %1734 = vmatpush.msra.mxu0 0.0
        %1735 = vmatpush.msra.mxu0 0.0
        %1736 = vmatpush.msra.mxu0 0.0
        %1737 = vmatpush.msra.mxu0 0.0
        %1738 = vmatpush.msra.mxu0 0.0
        %1739 = vmatpush.msra.mxu0 0.0
        %1740 = vmatpush.msra.mxu0 0.0
        %1741 = vmatpush.msra.mxu0 0.0
        %1742 = vmatpush.msra.mxu0 0.0
        %1743 = vmatpush.msra.mxu0 0.0
        %1744 = vmatpush.msra.mxu0 0.0
        %1745 = vmatpush.msra.mxu0 0.0
        %1746 = vmatpush.msra.mxu0 0.0
        %1747 = vmatpush.msra.mxu0 0.0
        %1748 = vmatpush.msra.mxu0 %v1728
        %1749 = vmatmul.f32.gmra.mxu0 %v1725
        %v1750 = vpop.f32.mrf.mxu0
        %v1751 = vadd.f32 0.0, %v1750
        %1752 = vdwg.mxu0
        %1753 = vmatpush.msra.mxu0 0.0
        %1754 = vmatpush.msra.mxu0 0.0
        %1755 = vmatpush.msra.mxu0 0.0
        %1756 = vmatpush.msra.mxu0 0.0
        %1757 = vmatpush.msra.mxu0 0.0
        %1758 = vmatpush.msra.mxu0 0.0
        %1759 = vmatpush.msra.mxu0 0.0
        %1760 = vmatpush.msra.mxu0 0.0
        %1761 = vmatpush.msra.mxu0 0.0
        %1762 = vmatpush.msra.mxu0 0.0
        %1763 = vmatpush.msra.mxu0 0.0
        %1764 = vmatpush.msra.mxu0 0.0
        %1765 = vmatpush.msra.mxu0 0.0
        %1766 = vmatpush.msra.mxu0 0.0
        %1767 = vmatpush.msra.mxu0 0.0
        %1768 = vmatpush.msra.mxu0 %v1731
        %1769 = vmatmul.f32.gmra.mxu0 %v1725
        %v1770 = vpop.f32.mrf.mxu0
        %v1771 = vadd.f32 0.0, %v1770
        %1772 = vdwg.mxu0
        %v1773 = vadd.f32 %v1712, %v1751
        %v1774 = vadd.f32 %v1713, %v1771
        %s1775 = scalar_lea.vmem %s9, 16
        %v1776 = vld [vmem:[%s1775] sm:$0xf]
        %v1778 = vsel %vm1547, %v1776, 0
        %v1780 = vsel %vm788, %v601, 0
        %v1782 = vsel %vm788, %v602, 0
        %1784 = vmatpush.msra.mxu0 0.0
        %1785 = vmatpush.msra.mxu0 0.0
        %1786 = vmatpush.msra.mxu0 0.0
        %1787 = vmatpush.msra.mxu0 0.0
        %1788 = vmatpush.msra.mxu0 0.0
        %1789 = vmatpush.msra.mxu0 0.0
        %1790 = vmatpush.msra.mxu0 0.0
        %1791 = vmatpush.msra.mxu0 0.0
        %1792 = vmatpush.msra.mxu0 0.0
        %1793 = vmatpush.msra.mxu0 0.0
        %1794 = vmatpush.msra.mxu0 0.0
        %1795 = vmatpush.msra.mxu0 0.0
        %1796 = vmatpush.msra.mxu0 0.0
        %1797 = vmatpush.msra.mxu0 0.0
        %1798 = vmatpush.msra.mxu0 0.0
        %1799 = vmatpush.msra.mxu0 %v1780
        %1800 = vmatmul.f32.gmra.mxu0 %v1778
        %v1801 = vpop.f32.mrf.mxu0
        %v1802 = vadd.f32 0.0, %v1801
        %1803 = vdwg.mxu0
        %1804 = vmatpush.msra.mxu0 0.0
        %1805 = vmatpush.msra.mxu0 0.0
        %1806 = vmatpush.msra.mxu0 0.0
        %1807 = vmatpush.msra.mxu0 0.0
        %1808 = vmatpush.msra.mxu0 0.0
        %1809 = vmatpush.msra.mxu0 0.0
        %1810 = vmatpush.msra.mxu0 0.0
        %1811 = vmatpush.msra.mxu0 0.0
        %1812 = vmatpush.msra.mxu0 0.0
        %1813 = vmatpush.msra.mxu0 0.0
        %1814 = vmatpush.msra.mxu0 0.0
        %1815 = vmatpush.msra.mxu0 0.0
        %1816 = vmatpush.msra.mxu0 0.0
        %1817 = vmatpush.msra.mxu0 0.0
        %1818 = vmatpush.msra.mxu0 0.0
        %1819 = vmatpush.msra.mxu0 %v1782
        %1820 = vmatmul.f32.gmra.mxu0 %v1778
        %v1821 = vpop.f32.mrf.mxu0
        %v1822 = vadd.f32 0.0, %v1821
        %1823 = vdwg.mxu0
        %v1824 = vadd.f32 %v1773, %v1802
        %v1825 = vadd.f32 %v1774, %v1822
        %1826 = vrot.lane.b32.xlu0 %v601, 127
        %v1827 = vpop.permute.xlu0 %1826
        %1828 = vrot.lane.b32.xlu0 %v602, 127
        %v1829 = vpop.permute.xlu0 %1828
        %v1830 = vsel %vm714, %v1827, %v1829
        %v1831 = vsel %vm714, %v1829, %v1827
        %v1832 = vsel %vm721, %v1830, 0.0
        %v1833 = vsel %vm722, %v1831, 0.0
        %s1834 = scalar_lea.vmem %s9, 20
        %v1835 = vld [vmem:[%s1834] sm:$0xf]
        %v1837 = vsel %vm1547, %v1835, 0
        %v1840 = vsel %vm788, %v1832, 0
        %v1843 = vsel %vm788, %v1833, 0
        %1845 = vmatpush.msra.mxu0 0.0
        %1846 = vmatpush.msra.mxu0 0.0
        %1847 = vmatpush.msra.mxu0 0.0
        %1848 = vmatpush.msra.mxu0 0.0
        %1849 = vmatpush.msra.mxu0 0.0
        %1850 = vmatpush.msra.mxu0 0.0
        %1851 = vmatpush.msra.mxu0 0.0
        %1852 = vmatpush.msra.mxu0 0.0
        %1853 = vmatpush.msra.mxu0 0.0
        %1854 = vmatpush.msra.mxu0 0.0
        %1855 = vmatpush.msra.mxu0 0.0
        %1856 = vmatpush.msra.mxu0 0.0
        %1857 = vmatpush.msra.mxu0 0.0
        %1858 = vmatpush.msra.mxu0 0.0
        %1859 = vmatpush.msra.mxu0 0.0
        %1860 = vmatpush.msra.mxu0 %v1840
        %1861 = vmatmul.f32.gmra.mxu0 %v1837
        %v1862 = vpop.f32.mrf.mxu0
        %v1863 = vadd.f32 0.0, %v1862
        %1864 = vdwg.mxu0
        %1865 = vmatpush.msra.mxu0 0.0
        %1866 = vmatpush.msra.mxu0 0.0
        %1867 = vmatpush.msra.mxu0 0.0
        %1868 = vmatpush.msra.mxu0 0.0
        %1869 = vmatpush.msra.mxu0 0.0
        %1870 = vmatpush.msra.mxu0 0.0
        %1871 = vmatpush.msra.mxu0 0.0
        %1872 = vmatpush.msra.mxu0 0.0
        %1873 = vmatpush.msra.mxu0 0.0
        %1874 = vmatpush.msra.mxu0 0.0
        %1875 = vmatpush.msra.mxu0 0.0
        %1876 = vmatpush.msra.mxu0 0.0
        %1877 = vmatpush.msra.mxu0 0.0
        %1878 = vmatpush.msra.mxu0 0.0
        %1879 = vmatpush.msra.mxu0 0.0
        %1880 = vmatpush.msra.mxu0 %v1843
        %1881 = vmatmul.f32.gmra.mxu0 %v1837
        %v1882 = vpop.f32.mrf.mxu0
        %v1883 = vadd.f32 0.0, %v1882
        %1884 = vdwg.mxu0
        %v1885 = vadd.f32 %v1824, %v1863
        %v1886 = vadd.f32 %v1825, %v1883
        %1887 = vrot.lane.b32.xlu0 %v601, 113
        %v1888 = vpop.permute.xlu0 %1887
        %1889 = vrot.lane.b32.xlu0 %v602, 113
        %v1890 = vpop.permute.xlu0 %1889
        %vm1891 = vcmp.lt.s32.totalorder %v494, 113
        %v1892 = vsel %vm1891, %v1888, %v1890
        %v1893 = vsel %vm1891, %v1890, %v1888
        %vm1894 = vmand %vm902, %vm612
        %vm1895 = vmand %vm903, %vm613
        %v1896 = vsel %vm1894, 1, 0
        %v1897 = vsel %vm1895, 1, 0
        %vm1898 = vcmp.eq.s32.totalorder %v1896, 1
        %vm1899 = vcmp.eq.s32.totalorder %v1897, 1
        %v1900 = vsel %vm1898, %v1892, 0.0
        %v1901 = vsel %vm1899, %v1893, 0.0
        %s1902 = scalar_lea.vmem %s9, 24
        %v1903 = vld [vmem:[%s1902] sm:$0xf]
        %v1905 = vsel %vm1547, %v1903, 0
        %v1908 = vsel %vm788, %v1900, 0
        %v1911 = vsel %vm788, %v1901, 0
        %1913 = vmatpush.msra.mxu0 0.0
        %1914 = vmatpush.msra.mxu0 0.0
        %1915 = vmatpush.msra.mxu0 0.0
        %1916 = vmatpush.msra.mxu0 0.0
        %1917 = vmatpush.msra.mxu0 0.0
        %1918 = vmatpush.msra.mxu0 0.0
        %1919 = vmatpush.msra.mxu0 0.0
        %1920 = vmatpush.msra.mxu0 0.0
        %1921 = vmatpush.msra.mxu0 0.0
        %1922 = vmatpush.msra.mxu0 0.0
        %1923 = vmatpush.msra.mxu0 0.0
        %1924 = vmatpush.msra.mxu0 0.0
        %1925 = vmatpush.msra.mxu0 0.0
        %1926 = vmatpush.msra.mxu0 0.0
        %1927 = vmatpush.msra.mxu0 0.0
        %1928 = vmatpush.msra.mxu0 %v1908
        %1929 = vmatmul.f32.gmra.mxu0 %v1905
        %v1930 = vpop.f32.mrf.mxu0
        %v1931 = vadd.f32 0.0, %v1930
        %1932 = vdwg.mxu0
        %1933 = vmatpush.msra.mxu0 0.0
        %1934 = vmatpush.msra.mxu0 0.0
        %1935 = vmatpush.msra.mxu0 0.0
        %1936 = vmatpush.msra.mxu0 0.0
        %1937 = vmatpush.msra.mxu0 0.0
        %1938 = vmatpush.msra.mxu0 0.0
        %1939 = vmatpush.msra.mxu0 0.0
        %1940 = vmatpush.msra.mxu0 0.0
        %1941 = vmatpush.msra.mxu0 0.0
        %1942 = vmatpush.msra.mxu0 0.0
        %1943 = vmatpush.msra.mxu0 0.0
        %1944 = vmatpush.msra.mxu0 0.0
        %1945 = vmatpush.msra.mxu0 0.0
        %1946 = vmatpush.msra.mxu0 0.0
        %1947 = vmatpush.msra.mxu0 0.0
        %1948 = vmatpush.msra.mxu0 %v1911
        %1949 = vmatmul.f32.gmra.mxu0 %v1905
        %v1950 = vpop.f32.mrf.mxu0
        %v1951 = vadd.f32 0.0, %v1950
        %1952 = vdwg.mxu0
        %v1953 = vadd.f32 %v1885, %v1931
        %v1954 = vadd.f32 %v1886, %v1951
        %1955 = vrot.lane.b32.xlu0 %v601, 112
        %v1956 = vpop.permute.xlu0 %1955
        %1957 = vrot.lane.b32.xlu0 %v602, 112
        %v1958 = vpop.permute.xlu0 %1957
        %v1959 = vsel %vm899, %v1956, %v1958
        %v1960 = vsel %vm899, %v1958, %v1956
        %v1961 = vsel %vm906, %v1959, 0.0
        %v1962 = vsel %vm907, %v1960, 0.0
        %s1963 = scalar_lea.vmem %s9, 28
        %v1964 = vld [vmem:[%s1963] sm:$0xf]
        %v1966 = vsel %vm1547, %v1964, 0
        %v1969 = vsel %vm788, %v1961, 0
        %v1972 = vsel %vm788, %v1962, 0
        %1974 = vmatpush.msra.mxu0 0.0
        %1975 = vmatpush.msra.mxu0 0.0
        %1976 = vmatpush.msra.mxu0 0.0
        %1977 = vmatpush.msra.mxu0 0.0
        %1978 = vmatpush.msra.mxu0 0.0
        %1979 = vmatpush.msra.mxu0 0.0
        %1980 = vmatpush.msra.mxu0 0.0
        %1981 = vmatpush.msra.mxu0 0.0
        %1982 = vmatpush.msra.mxu0 0.0
        %1983 = vmatpush.msra.mxu0 0.0
        %1984 = vmatpush.msra.mxu0 0.0
        %1985 = vmatpush.msra.mxu0 0.0
        %1986 = vmatpush.msra.mxu0 0.0
        %1987 = vmatpush.msra.mxu0 0.0
        %1988 = vmatpush.msra.mxu0 0.0
        %1989 = vmatpush.msra.mxu0 %v1969
        %1990 = vmatmul.f32.gmra.mxu0 %v1966
        %v1991 = vpop.f32.mrf.mxu0
        %v1992 = vadd.f32 0.0, %v1991
        %1993 = vdwg.mxu0
        %1994 = vmatpush.msra.mxu0 0.0
        %1995 = vmatpush.msra.mxu0 0.0
        %1996 = vmatpush.msra.mxu0 0.0
        %1997 = vmatpush.msra.mxu0 0.0
        %1998 = vmatpush.msra.mxu0 0.0
        %1999 = vmatpush.msra.mxu0 0.0
        %2000 = vmatpush.msra.mxu0 0.0
        %2001 = vmatpush.msra.mxu0 0.0
        %2002 = vmatpush.msra.mxu0 0.0
        %2003 = vmatpush.msra.mxu0 0.0
        %2004 = vmatpush.msra.mxu0 0.0
        %2005 = vmatpush.msra.mxu0 0.0
        %2006 = vmatpush.msra.mxu0 0.0
        %2007 = vmatpush.msra.mxu0 0.0
        %2008 = vmatpush.msra.mxu0 0.0
        %2009 = vmatpush.msra.mxu0 %v1972
        %2010 = vmatmul.f32.gmra.mxu0 %v1966
        %v2011 = vpop.f32.mrf.mxu0
        %v2012 = vadd.f32 0.0, %v2011
        %2013 = vdwg.mxu0
        %v2014 = vadd.f32 %v1953, %v1992
        %v2015 = vadd.f32 %v1954, %v2012
        %2016 = vrot.lane.b32.xlu0 %v601, 111
        %v2017 = vpop.permute.xlu0 %2016
        %2018 = vrot.lane.b32.xlu0 %v602, 111
        %v2019 = vpop.permute.xlu0 %2018
        %vm2020 = vcmp.lt.s32.totalorder %v494, 111
        %v2021 = vsel %vm2020, %v2017, %v2019
        %v2022 = vsel %vm2020, %v2019, %v2017
        %vm2023 = vmand %vm902, %vm717
        %vm2024 = vmand %vm903, %vm718
        %v2025 = vsel %vm2023, 1, 0
        %v2026 = vsel %vm2024, 1, 0
        %vm2027 = vcmp.eq.s32.totalorder %v2025, 1
        %vm2028 = vcmp.eq.s32.totalorder %v2026, 1
        %v2029 = vsel %vm2027, %v2021, 0.0
        %v2030 = vsel %vm2028, %v2022, 0.0
        %s2031 = scalar_lea.vmem %s9, 32
        %v2032 = vld [vmem:[%s2031] sm:$0xf]
        %v2034 = vsel %vm1547, %v2032, 0
        %v2037 = vsel %vm788, %v2029, 0
        %v2040 = vsel %vm788, %v2030, 0
        %2042 = vmatpush.msra.mxu0 0.0
        %2043 = vmatpush.msra.mxu0 0.0
        %2044 = vmatpush.msra.mxu0 0.0
        %2045 = vmatpush.msra.mxu0 0.0
        %2046 = vmatpush.msra.mxu0 0.0
        %2047 = vmatpush.msra.mxu0 0.0
        %2048 = vmatpush.msra.mxu0 0.0
        %2049 = vmatpush.msra.mxu0 0.0
        %2050 = vmatpush.msra.mxu0 0.0
        %2051 = vmatpush.msra.mxu0 0.0
        %2052 = vmatpush.msra.mxu0 0.0
        %2053 = vmatpush.msra.mxu0 0.0
        %2054 = vmatpush.msra.mxu0 0.0
        %2055 = vmatpush.msra.mxu0 0.0
        %2056 = vmatpush.msra.mxu0 0.0
        %2057 = vmatpush.msra.mxu0 %v2037
        %2058 = vmatmul.f32.gmra.mxu0 %v2034
        %v2059 = vpop.f32.mrf.mxu0
        %v2060 = vadd.f32 0.0, %v2059
        %2061 = vdwg.mxu0
        %2062 = vmatpush.msra.mxu0 0.0
        %2063 = vmatpush.msra.mxu0 0.0
        %2064 = vmatpush.msra.mxu0 0.0
        %2065 = vmatpush.msra.mxu0 0.0
        %2066 = vmatpush.msra.mxu0 0.0
        %2067 = vmatpush.msra.mxu0 0.0
        %2068 = vmatpush.msra.mxu0 0.0
        %2069 = vmatpush.msra.mxu0 0.0
        %2070 = vmatpush.msra.mxu0 0.0
        %2071 = vmatpush.msra.mxu0 0.0
        %2072 = vmatpush.msra.mxu0 0.0
        %2073 = vmatpush.msra.mxu0 0.0
        %2074 = vmatpush.msra.mxu0 0.0
        %2075 = vmatpush.msra.mxu0 0.0
        %2076 = vmatpush.msra.mxu0 0.0
        %2077 = vmatpush.msra.mxu0 %v2040
        %2078 = vmatmul.f32.gmra.mxu0 %v2034
        %v2079 = vpop.f32.mrf.mxu0
        %v2080 = vadd.f32 0.0, %v2079
        %2081 = vdwg.mxu0
        %v2082 = vadd.f32 %v2014, %v2060
        %v2083 = vadd.f32 %v2015, %v2080
        %v2084 = vld [vmem:[%s10] sm:$0xf]
        %2086 = vset.pattern.permute.xlu0 0
        %2087 = vperm.xlu0 %2086, %v2084
        %v2088 = vpop.permute.xlu0 %2087
        %v2090 = vadd.f32 %v2082, %v2088
        %v2091 = vadd.f32 %v2083, %v2088
        %v2094 = vrot.slane %v965, 4
        %v2095 = vrot.slane %v966, 4
        %2098 = vrot.lane.b32.xlu0 %v2094, 85
        %v2099 = vpop.permute.xlu0 %2098
        %2100 = vrot.lane.b32.xlu0 %v2095, 85
        %v2101 = vpop.permute.xlu0 %2100
        %vm2102 = vcmp.lt.s32.totalorder %v494, 85
        %v2103 = vsel %vm2102, %v2099, %v2101
        %v2104 = vsel %vm2102, %v2101, %v2099
        %vm2105 = vcmp.ge.s32.totalorder %v494, 80
        %vm2106 = vcmp.ge.s32.totalorder %v495, 80
        %vm2107 = vcmp.ge.s32.totalorder %v496, 5
        %vm2108 = vcmp.ge.s32.totalorder %v497, 5
        %vm2109 = vmand %vm2105, %vm2107
        %vm2110 = vmand %vm2106, %vm2108
        %v2111 = vsel %vm2109, 1, 0
        %v2112 = vsel %vm2110, 1, 0
        %vm2113 = vcmp.eq.s32.totalorder %v2111, 1
        %vm2114 = vcmp.eq.s32.totalorder %v2112, 1
        %v2115 = vsel %vm2113, %v2104, 0.0
        %v2116 = vsel %vm2114, %v2103, 0.0
        %v2117 = vld [vmem:[%s11] sm:$0xf]
        %2118 = vrot.lane.b32.xlu0 %v2094, 80
        %v2119 = vpop.permute.xlu0 %2118
        %2120 = vrot.lane.b32.xlu0 %v2095, 80
        %v2121 = vpop.permute.xlu0 %2120
        %v2122 = vsel %vm1395, %v2119, %v2121
        %v2123 = vsel %vm1395, %v2121, %v2119
        %v2124 = vsel %vm2105, 1, 0
        %v2125 = vsel %vm2106, 1, 0
        %vm2126 = vcmp.eq.s32.totalorder %v2124, 1
        %vm2127 = vcmp.eq.s32.totalorder %v2125, 1
        %v2128 = vsel %vm2126, %v2123, 0.0
        %v2129 = vsel %vm2127, %v2122, 0.0
        %s2130 = scalar_lea.vmem %s11, 4
        %v2131 = vld [vmem:[%s2130] sm:$0xf]
        %v2133 = vsel %vm1547, %v2131, 0
        %v2136 = vsel %vm788, %v2128, 0
        %v2139 = vsel %vm788, %v2129, 0
        %2141 = vmatpush.msra.mxu0 0.0
        %2142 = vmatpush.msra.mxu0 0.0
        %2143 = vmatpush.msra.mxu0 0.0
        %2144 = vmatpush.msra.mxu0 0.0
        %2145 = vmatpush.msra.mxu0 0.0
        %2146 = vmatpush.msra.mxu0 0.0
        %2147 = vmatpush.msra.mxu0 0.0
        %2148 = vmatpush.msra.mxu0 0.0
        %2149 = vmatpush.msra.mxu0 0.0
        %2150 = vmatpush.msra.mxu0 0.0
        %2151 = vmatpush.msra.mxu0 0.0
        %2152 = vmatpush.msra.mxu0 0.0
        %2153 = vmatpush.msra.mxu0 0.0
        %2154 = vmatpush.msra.mxu0 0.0
        %2155 = vmatpush.msra.mxu0 0.0
        %2156 = vmatpush.msra.mxu0 %v2136
        %2157 = vmatmul.f32.gmra.mxu0 %v2133
        %v2158 = vpop.f32.mrf.mxu0
        %v2159 = vadd.f32 0.0, %v2158
        %2160 = vdwg.mxu0
        %2161 = vmatpush.msra.mxu0 0.0
        %2162 = vmatpush.msra.mxu0 0.0
        %2163 = vmatpush.msra.mxu0 0.0
        %2164 = vmatpush.msra.mxu0 0.0
        %2165 = vmatpush.msra.mxu0 0.0
        %2166 = vmatpush.msra.mxu0 0.0
        %2167 = vmatpush.msra.mxu0 0.0
        %2168 = vmatpush.msra.mxu0 0.0
        %2169 = vmatpush.msra.mxu0 0.0
        %2170 = vmatpush.msra.mxu0 0.0
        %2171 = vmatpush.msra.mxu0 0.0
        %2172 = vmatpush.msra.mxu0 0.0
        %2173 = vmatpush.msra.mxu0 0.0
        %2174 = vmatpush.msra.mxu0 0.0
        %2175 = vmatpush.msra.mxu0 0.0
        %2176 = vmatpush.msra.mxu0 %v2139
        %2177 = vmatmul.f32.gmra.mxu0 %v2133
        %v2178 = vpop.f32.mrf.mxu0
        %v2179 = vadd.f32 0.0, %v2178
        %2180 = vdwg.mxu0
        %v2182 = vsel %vm1547, %v2117, 0
        %v2185 = vsel %vm788, %v2115, 0
        %v2188 = vsel %vm788, %v2116, 0
        %2190 = vmatpush.msra.mxu0 0.0
        %2191 = vmatpush.msra.mxu0 0.0
        %2192 = vmatpush.msra.mxu0 0.0
        %2193 = vmatpush.msra.mxu0 0.0
        %2194 = vmatpush.msra.mxu0 0.0
        %2195 = vmatpush.msra.mxu0 0.0
        %2196 = vmatpush.msra.mxu0 0.0
        %2197 = vmatpush.msra.mxu0 0.0
        %2198 = vmatpush.msra.mxu0 0.0
        %2199 = vmatpush.msra.mxu0 0.0
        %2200 = vmatpush.msra.mxu0 0.0
        %2201 = vmatpush.msra.mxu0 0.0
        %2202 = vmatpush.msra.mxu0 0.0
        %2203 = vmatpush.msra.mxu0 0.0
        %2204 = vmatpush.msra.mxu0 0.0
        %2205 = vmatpush.msra.mxu0 %v2185
        %2206 = vmatmul.f32.gmra.mxu0 %v2182
        %v2207 = vpop.f32.mrf.mxu0
        %v2208 = vadd.f32 %v2159, %v2207
        %2209 = vdwg.mxu0
        %2210 = vmatpush.msra.mxu0 0.0
        %2211 = vmatpush.msra.mxu0 0.0
        %2212 = vmatpush.msra.mxu0 0.0
        %2213 = vmatpush.msra.mxu0 0.0
        %2214 = vmatpush.msra.mxu0 0.0
        %2215 = vmatpush.msra.mxu0 0.0
        %2216 = vmatpush.msra.mxu0 0.0
        %2217 = vmatpush.msra.mxu0 0.0
        %2218 = vmatpush.msra.mxu0 0.0
        %2219 = vmatpush.msra.mxu0 0.0
        %2220 = vmatpush.msra.mxu0 0.0
        %2221 = vmatpush.msra.mxu0 0.0
        %2222 = vmatpush.msra.mxu0 0.0
        %2223 = vmatpush.msra.mxu0 0.0
        %2224 = vmatpush.msra.mxu0 0.0
        %2225 = vmatpush.msra.mxu0 %v2188
        %2226 = vmatmul.f32.gmra.mxu0 %v2182
        %v2227 = vpop.f32.mrf.mxu0
        %v2228 = vadd.f32 %v2179, %v2227
        %2229 = vdwg.mxu0
        %2230 = vrot.lane.b32.xlu0 %v2094, 75
        %v2231 = vpop.permute.xlu0 %2230
        %2232 = vrot.lane.b32.xlu0 %v2095, 75
        %v2233 = vpop.permute.xlu0 %2232
        %vm2234 = vcmp.lt.s32.totalorder %v494, 75
        %v2235 = vsel %vm2234, %v2231, %v2233
        %v2236 = vsel %vm2234, %v2233, %v2231
        %vm2237 = vcmp.lt.s32.totalorder %v496, 11
        %vm2238 = vcmp.lt.s32.totalorder %v497, 11
        %vm2239 = vmand %vm2105, %vm2237
        %vm2240 = vmand %vm2106, %vm2238
        %v2241 = vsel %vm2239, 1, 0
        %v2242 = vsel %vm2240, 1, 0
        %vm2243 = vcmp.eq.s32.totalorder %v2241, 1
        %vm2244 = vcmp.eq.s32.totalorder %v2242, 1
        %v2245 = vsel %vm2243, %v2236, 0.0
        %v2246 = vsel %vm2244, %v2235, 0.0
        %s2247 = scalar_lea.vmem %s11, 8
        %v2248 = vld [vmem:[%s2247] sm:$0xf]
        %v2250 = vsel %vm1547, %v2248, 0
        %v2253 = vsel %vm788, %v2245, 0
        %v2256 = vsel %vm788, %v2246, 0
        %2258 = vmatpush.msra.mxu0 0.0
        %2259 = vmatpush.msra.mxu0 0.0
        %2260 = vmatpush.msra.mxu0 0.0
        %2261 = vmatpush.msra.mxu0 0.0
        %2262 = vmatpush.msra.mxu0 0.0
        %2263 = vmatpush.msra.mxu0 0.0
        %2264 = vmatpush.msra.mxu0 0.0
        %2265 = vmatpush.msra.mxu0 0.0
        %2266 = vmatpush.msra.mxu0 0.0
        %2267 = vmatpush.msra.mxu0 0.0
        %2268 = vmatpush.msra.mxu0 0.0
        %2269 = vmatpush.msra.mxu0 0.0
        %2270 = vmatpush.msra.mxu0 0.0
        %2271 = vmatpush.msra.mxu0 0.0
        %2272 = vmatpush.msra.mxu0 0.0
        %2273 = vmatpush.msra.mxu0 %v2253
        %2274 = vmatmul.f32.gmra.mxu0 %v2250
        %v2275 = vpop.f32.mrf.mxu0
        %v2276 = vadd.f32 0.0, %v2275
        %2277 = vdwg.mxu0
        %2278 = vmatpush.msra.mxu0 0.0
        %2279 = vmatpush.msra.mxu0 0.0
        %2280 = vmatpush.msra.mxu0 0.0
        %2281 = vmatpush.msra.mxu0 0.0
        %2282 = vmatpush.msra.mxu0 0.0
        %2283 = vmatpush.msra.mxu0 0.0
        %2284 = vmatpush.msra.mxu0 0.0
        %2285 = vmatpush.msra.mxu0 0.0
        %2286 = vmatpush.msra.mxu0 0.0
        %2287 = vmatpush.msra.mxu0 0.0
        %2288 = vmatpush.msra.mxu0 0.0
        %2289 = vmatpush.msra.mxu0 0.0
        %2290 = vmatpush.msra.mxu0 0.0
        %2291 = vmatpush.msra.mxu0 0.0
        %2292 = vmatpush.msra.mxu0 0.0
        %2293 = vmatpush.msra.mxu0 %v2256
        %2294 = vmatmul.f32.gmra.mxu0 %v2250
        %v2295 = vpop.f32.mrf.mxu0
        %v2296 = vadd.f32 0.0, %v2295
        %2297 = vdwg.mxu0
        %v2298 = vadd.f32 %v2208, %v2276
        %v2299 = vadd.f32 %v2228, %v2296
        %2300 = vrot.lane.b32.xlu0 %v2094, 5
        %v2301 = vpop.permute.xlu0 %2300
        %2302 = vrot.lane.b32.xlu0 %v2095, 5
        %v2303 = vpop.permute.xlu0 %2302
        %vm2304 = vcmp.lt.s32.totalorder %v494, 5
        %v2305 = vsel %vm2304, %v2301, %v2303
        %v2306 = vsel %vm2304, %v2303, %v2301
        %v2307 = vsel %vm2107, 1, 0
        %v2308 = vsel %vm2108, 1, 0
        %vm2309 = vcmp.eq.s32.totalorder %v2307, 1
        %vm2310 = vcmp.eq.s32.totalorder %v2308, 1
        %v2311 = vsel %vm2309, %v2306, 0.0
        %v2312 = vsel %vm2310, %v2305, 0.0
        %s2313 = scalar_lea.vmem %s11, 12
        %v2314 = vld [vmem:[%s2313] sm:$0xf]
        %v2316 = vsel %vm1547, %v2314, 0
        %v2319 = vsel %vm788, %v2311, 0
        %v2322 = vsel %vm788, %v2312, 0
        %2324 = vmatpush.msra.mxu0 0.0
        %2325 = vmatpush.msra.mxu0 0.0
        %2326 = vmatpush.msra.mxu0 0.0
        %2327 = vmatpush.msra.mxu0 0.0
        %2328 = vmatpush.msra.mxu0 0.0
        %2329 = vmatpush.msra.mxu0 0.0
        %2330 = vmatpush.msra.mxu0 0.0
        %2331 = vmatpush.msra.mxu0 0.0
        %2332 = vmatpush.msra.mxu0 0.0
        %2333 = vmatpush.msra.mxu0 0.0
        %2334 = vmatpush.msra.mxu0 0.0
        %2335 = vmatpush.msra.mxu0 0.0
        %2336 = vmatpush.msra.mxu0 0.0
        %2337 = vmatpush.msra.mxu0 0.0
        %2338 = vmatpush.msra.mxu0 0.0
        %2339 = vmatpush.msra.mxu0 %v2319
        %2340 = vmatmul.f32.gmra.mxu0 %v2316
        %v2341 = vpop.f32.mrf.mxu0
        %v2342 = vadd.f32 0.0, %v2341
        %2343 = vdwg.mxu0
        %2344 = vmatpush.msra.mxu0 0.0
        %2345 = vmatpush.msra.mxu0 0.0
        %2346 = vmatpush.msra.mxu0 0.0
        %2347 = vmatpush.msra.mxu0 0.0
        %2348 = vmatpush.msra.mxu0 0.0
        %2349 = vmatpush.msra.mxu0 0.0
        %2350 = vmatpush.msra.mxu0 0.0
        %2351 = vmatpush.msra.mxu0 0.0
        %2352 = vmatpush.msra.mxu0 0.0
        %2353 = vmatpush.msra.mxu0 0.0
        %2354 = vmatpush.msra.mxu0 0.0
        %2355 = vmatpush.msra.mxu0 0.0
        %2356 = vmatpush.msra.mxu0 0.0
        %2357 = vmatpush.msra.mxu0 0.0
        %2358 = vmatpush.msra.mxu0 0.0
        %2359 = vmatpush.msra.mxu0 %v2322
        %2360 = vmatmul.f32.gmra.mxu0 %v2316
        %v2361 = vpop.f32.mrf.mxu0
        %v2362 = vadd.f32 0.0, %v2361
        %2363 = vdwg.mxu0
        %v2364 = vadd.f32 %v2298, %v2342
        %v2365 = vadd.f32 %v2299, %v2362
        %s2366 = scalar_lea.vmem %s11, 16
        %v2367 = vld [vmem:[%s2366] sm:$0xf]
        %v2369 = vsel %vm1547, %v2367, 0
        %v2371 = vsel %vm788, %v2094, 0
        %v2373 = vsel %vm788, %v2095, 0
        %2375 = vmatpush.msra.mxu0 0.0
        %2376 = vmatpush.msra.mxu0 0.0
        %2377 = vmatpush.msra.mxu0 0.0
        %2378 = vmatpush.msra.mxu0 0.0
        %2379 = vmatpush.msra.mxu0 0.0
        %2380 = vmatpush.msra.mxu0 0.0
        %2381 = vmatpush.msra.mxu0 0.0
        %2382 = vmatpush.msra.mxu0 0.0
        %2383 = vmatpush.msra.mxu0 0.0
        %2384 = vmatpush.msra.mxu0 0.0
        %2385 = vmatpush.msra.mxu0 0.0
        %2386 = vmatpush.msra.mxu0 0.0
        %2387 = vmatpush.msra.mxu0 0.0
        %2388 = vmatpush.msra.mxu0 0.0
        %2389 = vmatpush.msra.mxu0 0.0
        %2390 = vmatpush.msra.mxu0 %v2371
        %2391 = vmatmul.f32.gmra.mxu0 %v2369
        %v2392 = vpop.f32.mrf.mxu0
        %v2393 = vadd.f32 0.0, %v2392
        %2394 = vdwg.mxu0
        %2395 = vmatpush.msra.mxu0 0.0
        %2396 = vmatpush.msra.mxu0 0.0
        %2397 = vmatpush.msra.mxu0 0.0
        %2398 = vmatpush.msra.mxu0 0.0
        %2399 = vmatpush.msra.mxu0 0.0
        %2400 = vmatpush.msra.mxu0 0.0
        %2401 = vmatpush.msra.mxu0 0.0
        %2402 = vmatpush.msra.mxu0 0.0
        %2403 = vmatpush.msra.mxu0 0.0
        %2404 = vmatpush.msra.mxu0 0.0
        %2405 = vmatpush.msra.mxu0 0.0
        %2406 = vmatpush.msra.mxu0 0.0
        %2407 = vmatpush.msra.mxu0 0.0
        %2408 = vmatpush.msra.mxu0 0.0
        %2409 = vmatpush.msra.mxu0 0.0
        %2410 = vmatpush.msra.mxu0 %v2373
        %2411 = vmatmul.f32.gmra.mxu0 %v2369
        %v2412 = vpop.f32.mrf.mxu0
        %v2413 = vadd.f32 0.0, %v2412
        %2414 = vdwg.mxu0
        %v2415 = vadd.f32 %v2364, %v2393
        %v2416 = vadd.f32 %v2365, %v2413
        %2417 = vrot.lane.b32.xlu0 %v2094, 123
        %v2418 = vpop.permute.xlu0 %2417
        %2419 = vrot.lane.b32.xlu0 %v2095, 123
        %v2420 = vpop.permute.xlu0 %2419
        %vm2421 = vcmp.lt.s32.totalorder %v494, 123
        %v2422 = vsel %vm2421, %v2418, %v2420
        %v2423 = vsel %vm2421, %v2420, %v2418
        %v2424 = vsel %vm2237, 1, 0
        %v2425 = vsel %vm2238, 1, 0
        %vm2426 = vcmp.eq.s32.totalorder %v2424, 1
        %vm2427 = vcmp.eq.s32.totalorder %v2425, 1
        %v2428 = vsel %vm2426, %v2422, 0.0
        %v2429 = vsel %vm2427, %v2423, 0.0
        %s2430 = scalar_lea.vmem %s11, 20
        %v2431 = vld [vmem:[%s2430] sm:$0xf]
        %v2433 = vsel %vm1547, %v2431, 0
        %v2436 = vsel %vm788, %v2428, 0
        %v2439 = vsel %vm788, %v2429, 0
        %2441 = vmatpush.msra.mxu0 0.0
        %2442 = vmatpush.msra.mxu0 0.0
        %2443 = vmatpush.msra.mxu0 0.0
        %2444 = vmatpush.msra.mxu0 0.0
        %2445 = vmatpush.msra.mxu0 0.0
        %2446 = vmatpush.msra.mxu0 0.0
        %2447 = vmatpush.msra.mxu0 0.0
        %2448 = vmatpush.msra.mxu0 0.0
        %2449 = vmatpush.msra.mxu0 0.0
        %2450 = vmatpush.msra.mxu0 0.0
        %2451 = vmatpush.msra.mxu0 0.0
        %2452 = vmatpush.msra.mxu0 0.0
        %2453 = vmatpush.msra.mxu0 0.0
        %2454 = vmatpush.msra.mxu0 0.0
        %2455 = vmatpush.msra.mxu0 0.0
        %2456 = vmatpush.msra.mxu0 %v2436
        %2457 = vmatmul.f32.gmra.mxu0 %v2433
        %v2458 = vpop.f32.mrf.mxu0
        %v2459 = vadd.f32 0.0, %v2458
        %2460 = vdwg.mxu0
        %2461 = vmatpush.msra.mxu0 0.0
        %2462 = vmatpush.msra.mxu0 0.0
        %2463 = vmatpush.msra.mxu0 0.0
        %2464 = vmatpush.msra.mxu0 0.0
        %2465 = vmatpush.msra.mxu0 0.0
        %2466 = vmatpush.msra.mxu0 0.0
        %2467 = vmatpush.msra.mxu0 0.0
        %2468 = vmatpush.msra.mxu0 0.0
        %2469 = vmatpush.msra.mxu0 0.0
        %2470 = vmatpush.msra.mxu0 0.0
        %2471 = vmatpush.msra.mxu0 0.0
        %2472 = vmatpush.msra.mxu0 0.0
        %2473 = vmatpush.msra.mxu0 0.0
        %2474 = vmatpush.msra.mxu0 0.0
        %2475 = vmatpush.msra.mxu0 0.0
        %2476 = vmatpush.msra.mxu0 %v2439
        %2477 = vmatmul.f32.gmra.mxu0 %v2433
        %v2478 = vpop.f32.mrf.mxu0
        %v2479 = vadd.f32 0.0, %v2478
        %2480 = vdwg.mxu0
        %v2481 = vadd.f32 %v2415, %v2459
        %v2482 = vadd.f32 %v2416, %v2479
        %2483 = vrot.lane.b32.xlu0 %v2094, 53
        %v2484 = vpop.permute.xlu0 %2483
        %2485 = vrot.lane.b32.xlu0 %v2095, 53
        %v2486 = vpop.permute.xlu0 %2485
        %vm2487 = vcmp.lt.s32.totalorder %v494, 53
        %v2488 = vsel %vm2487, %v2484, %v2486
        %v2489 = vsel %vm2487, %v2486, %v2484
        %vm2490 = vcmp.lt.s32.totalorder %v494, 176
        %vm2491 = vcmp.lt.s32.totalorder %v495, 176
        %vm2492 = vmand %vm2490, %vm2107
        %vm2493 = vmand %vm2491, %vm2108
        %v2494 = vsel %vm2492, 1, 0
        %v2495 = vsel %vm2493, 1, 0
        %vm2496 = vcmp.eq.s32.totalorder %v2494, 1
        %vm2497 = vcmp.eq.s32.totalorder %v2495, 1
        %v2498 = vsel %vm2496, %v2488, 0.0
        %v2499 = vsel %vm2497, %v2489, 0.0
        %s2500 = scalar_lea.vmem %s11, 24
        %v2501 = vld [vmem:[%s2500] sm:$0xf]
        %v2503 = vsel %vm1547, %v2501, 0
        %v2506 = vsel %vm788, %v2498, 0
        %v2509 = vsel %vm788, %v2499, 0
        %2511 = vmatpush.msra.mxu0 0.0
        %2512 = vmatpush.msra.mxu0 0.0
        %2513 = vmatpush.msra.mxu0 0.0
        %2514 = vmatpush.msra.mxu0 0.0
        %2515 = vmatpush.msra.mxu0 0.0
        %2516 = vmatpush.msra.mxu0 0.0
        %2517 = vmatpush.msra.mxu0 0.0
        %2518 = vmatpush.msra.mxu0 0.0
        %2519 = vmatpush.msra.mxu0 0.0
        %2520 = vmatpush.msra.mxu0 0.0
        %2521 = vmatpush.msra.mxu0 0.0
        %2522 = vmatpush.msra.mxu0 0.0
        %2523 = vmatpush.msra.mxu0 0.0
        %2524 = vmatpush.msra.mxu0 0.0
        %2525 = vmatpush.msra.mxu0 0.0
        %2526 = vmatpush.msra.mxu0 %v2506
        %2527 = vmatmul.f32.gmra.mxu0 %v2503
        %v2528 = vpop.f32.mrf.mxu0
        %v2529 = vadd.f32 0.0, %v2528
        %2530 = vdwg.mxu0
        %2531 = vmatpush.msra.mxu0 0.0
        %2532 = vmatpush.msra.mxu0 0.0
        %2533 = vmatpush.msra.mxu0 0.0
        %2534 = vmatpush.msra.mxu0 0.0
        %2535 = vmatpush.msra.mxu0 0.0
        %2536 = vmatpush.msra.mxu0 0.0
        %2537 = vmatpush.msra.mxu0 0.0
        %2538 = vmatpush.msra.mxu0 0.0
        %2539 = vmatpush.msra.mxu0 0.0
        %2540 = vmatpush.msra.mxu0 0.0
        %2541 = vmatpush.msra.mxu0 0.0
        %2542 = vmatpush.msra.mxu0 0.0
        %2543 = vmatpush.msra.mxu0 0.0
        %2544 = vmatpush.msra.mxu0 0.0
        %2545 = vmatpush.msra.mxu0 0.0
        %2546 = vmatpush.msra.mxu0 %v2509
        %2547 = vmatmul.f32.gmra.mxu0 %v2503
        %v2548 = vpop.f32.mrf.mxu0
        %v2549 = vadd.f32 0.0, %v2548
        %2550 = vdwg.mxu0
        %v2551 = vadd.f32 %v2481, %v2529
        %v2552 = vadd.f32 %v2482, %v2549
        %2553 = vrot.lane.b32.xlu0 %v2094, 48
        %v2554 = vpop.permute.xlu0 %2553
        %2555 = vrot.lane.b32.xlu0 %v2095, 48
        %v2556 = vpop.permute.xlu0 %2555
        %v2557 = vsel %vm999, %v2554, %v2556
        %v2558 = vsel %vm999, %v2556, %v2554
        %v2559 = vsel %vm2490, 1, 0
        %v2560 = vsel %vm2491, 1, 0
        %vm2561 = vcmp.eq.s32.totalorder %v2559, 1
        %vm2562 = vcmp.eq.s32.totalorder %v2560, 1
        %v2563 = vsel %vm2561, %v2557, 0.0
        %v2564 = vsel %vm2562, %v2558, 0.0
        %s2565 = scalar_lea.vmem %s11, 28
        %v2566 = vld [vmem:[%s2565] sm:$0xf]
        %v2568 = vsel %vm1547, %v2566, 0
        %v2571 = vsel %vm788, %v2563, 0
        %v2574 = vsel %vm788, %v2564, 0
        %2576 = vmatpush.msra.mxu0 0.0
        %2577 = vmatpush.msra.mxu0 0.0
        %2578 = vmatpush.msra.mxu0 0.0
        %2579 = vmatpush.msra.mxu0 0.0
        %2580 = vmatpush.msra.mxu0 0.0
        %2581 = vmatpush.msra.mxu0 0.0
        %2582 = vmatpush.msra.mxu0 0.0
        %2583 = vmatpush.msra.mxu0 0.0
        %2584 = vmatpush.msra.mxu0 0.0
        %2585 = vmatpush.msra.mxu0 0.0
        %2586 = vmatpush.msra.mxu0 0.0
        %2587 = vmatpush.msra.mxu0 0.0
        %2588 = vmatpush.msra.mxu0 0.0
        %2589 = vmatpush.msra.mxu0 0.0
        %2590 = vmatpush.msra.mxu0 0.0
        %2591 = vmatpush.msra.mxu0 %v2571
        %2592 = vmatmul.f32.gmra.mxu0 %v2568
        %v2593 = vpop.f32.mrf.mxu0
        %v2594 = vadd.f32 0.0, %v2593
        %2595 = vdwg.mxu0
        %2596 = vmatpush.msra.mxu0 0.0
        %2597 = vmatpush.msra.mxu0 0.0
        %2598 = vmatpush.msra.mxu0 0.0
        %2599 = vmatpush.msra.mxu0 0.0
        %2600 = vmatpush.msra.mxu0 0.0
        %2601 = vmatpush.msra.mxu0 0.0
        %2602 = vmatpush.msra.mxu0 0.0
        %2603 = vmatpush.msra.mxu0 0.0
        %2604 = vmatpush.msra.mxu0 0.0
        %2605 = vmatpush.msra.mxu0 0.0
        %2606 = vmatpush.msra.mxu0 0.0
        %2607 = vmatpush.msra.mxu0 0.0
        %2608 = vmatpush.msra.mxu0 0.0
        %2609 = vmatpush.msra.mxu0 0.0
        %2610 = vmatpush.msra.mxu0 0.0
        %2611 = vmatpush.msra.mxu0 %v2574
        %2612 = vmatmul.f32.gmra.mxu0 %v2568
        %v2613 = vpop.f32.mrf.mxu0
        %v2614 = vadd.f32 0.0, %v2613
        %2615 = vdwg.mxu0
        %v2616 = vadd.f32 %v2551, %v2594
        %v2617 = vadd.f32 %v2552, %v2614
        %2618 = vrot.lane.b32.xlu0 %v2094, 43
        %v2619 = vpop.permute.xlu0 %2618
        %2620 = vrot.lane.b32.xlu0 %v2095, 43
        %v2621 = vpop.permute.xlu0 %2620
        %vm2622 = vcmp.lt.s32.totalorder %v494, 43
        %v2623 = vsel %vm2622, %v2619, %v2621
        %v2624 = vsel %vm2622, %v2621, %v2619
        %vm2625 = vmand %vm2490, %vm2237
        %vm2626 = vmand %vm2491, %vm2238
        %v2627 = vsel %vm2625, 1, 0
        %v2628 = vsel %vm2626, 1, 0
        %vm2629 = vcmp.eq.s32.totalorder %v2627, 1
        %vm2630 = vcmp.eq.s32.totalorder %v2628, 1
        %v2631 = vsel %vm2629, %v2623, 0.0
        %v2632 = vsel %vm2630, %v2624, 0.0
        %s2633 = scalar_lea.vmem %s11, 32
        %v2634 = vld [vmem:[%s2633] sm:$0xf]
        %v2636 = vsel %vm1547, %v2634, 0
        %v2639 = vsel %vm788, %v2631, 0
        %v2642 = vsel %vm788, %v2632, 0
        %2644 = vmatpush.msra.mxu0 0.0
        %2645 = vmatpush.msra.mxu0 0.0
        %2646 = vmatpush.msra.mxu0 0.0
        %2647 = vmatpush.msra.mxu0 0.0
        %2648 = vmatpush.msra.mxu0 0.0
        %2649 = vmatpush.msra.mxu0 0.0
        %2650 = vmatpush.msra.mxu0 0.0
        %2651 = vmatpush.msra.mxu0 0.0
        %2652 = vmatpush.msra.mxu0 0.0
        %2653 = vmatpush.msra.mxu0 0.0
        %2654 = vmatpush.msra.mxu0 0.0
        %2655 = vmatpush.msra.mxu0 0.0
        %2656 = vmatpush.msra.mxu0 0.0
        %2657 = vmatpush.msra.mxu0 0.0
        %2658 = vmatpush.msra.mxu0 0.0
        %2659 = vmatpush.msra.mxu0 %v2639
        %2660 = vmatmul.f32.gmra.mxu0 %v2636
        %v2661 = vpop.f32.mrf.mxu0
        %v2662 = vadd.f32 0.0, %v2661
        %2663 = vdwg.mxu0
        %2664 = vmatpush.msra.mxu0 0.0
        %2665 = vmatpush.msra.mxu0 0.0
        %2666 = vmatpush.msra.mxu0 0.0
        %2667 = vmatpush.msra.mxu0 0.0
        %2668 = vmatpush.msra.mxu0 0.0
        %2669 = vmatpush.msra.mxu0 0.0
        %2670 = vmatpush.msra.mxu0 0.0
        %2671 = vmatpush.msra.mxu0 0.0
        %2672 = vmatpush.msra.mxu0 0.0
        %2673 = vmatpush.msra.mxu0 0.0
        %2674 = vmatpush.msra.mxu0 0.0
        %2675 = vmatpush.msra.mxu0 0.0
        %2676 = vmatpush.msra.mxu0 0.0
        %2677 = vmatpush.msra.mxu0 0.0
        %2678 = vmatpush.msra.mxu0 0.0
        %2679 = vmatpush.msra.mxu0 %v2642
        %2680 = vmatmul.f32.gmra.mxu0 %v2636
        %v2681 = vpop.f32.mrf.mxu0
        %v2682 = vadd.f32 0.0, %v2681
        %2683 = vdwg.mxu0
        %v2684 = vadd.f32 %v2616, %v2662
        %v2685 = vadd.f32 %v2617, %v2682
        %v2686 = vld [vmem:[%s12] sm:$0xf]
        %2688 = vset.pattern.permute.xlu0 0
        %2689 = vperm.xlu0 %2688, %v2686
        %v2690 = vpop.permute.xlu0 %2689
        %v2692 = vadd.f32 %v2684, %v2690
        %v2693 = vadd.f32 %v2685, %v2690
        %v2696 = vrot.slane %v1519, 4
        %v2697 = vrot.slane %v1520, 4
        %v2702 = vrot.slane %v2692, 4
        %v2703 = vrot.slane %v2693, 4
        %v2706 = vsel %vm788, %v2090, %v2696
        %v2707 = vsel %vm788, %v2091, %v2697
        %v2708 = vsel %vm788, %v2696, %v2702
        %v2709 = vsel %vm788, %v2697, %v2703
        %v2710 = vld [vmem:[%s13] sm:$0xff]
        %v2711 = vld [vmem:[%s13 + $0x8] sm:$0xff]
        %v2712 = vld [vmem:[%s14] sm:$0xff]
        %v2713 = vld [vmem:[%s14 + $0x8] sm:$0xff]
        %2715 = vset.pattern.permute.xlu0 0
        %2716 = vperm.xlu0 %2715, %v2712
        %v2717 = vpop.permute.xlu0 %2716
        %2720 = vset.pattern.permute.xlu0 0
        %2721 = vperm.xlu0 %2720, %v2713
        %v2722 = vpop.permute.xlu0 %2721
        %v2725 = vsel %vm530, %v2710, 0
        %v2728 = vsel %vm530, %v2711, 0
        %2730 = vmatpush.msra.mxu0 0.0
        %2731 = vmatpush.msra.mxu0 0.0
        %2732 = vmatpush.msra.mxu0 0.0
        %2733 = vmatpush.msra.mxu0 0.0
        %2734 = vmatpush.msra.mxu0 0.0
        %2735 = vmatpush.msra.mxu0 0.0
        %2736 = vmatpush.msra.mxu0 0.0
        %2737 = vmatpush.msra.mxu0 0.0
        %2738 = vmatpush.msra.mxu0 0.0
        %2739 = vmatpush.msra.mxu0 0.0
        %2740 = vmatpush.msra.mxu0 0.0
        %2741 = vmatpush.msra.mxu0 0.0
        %2742 = vmatpush.msra.mxu0 0.0
        %2743 = vmatpush.msra.mxu0 0.0
        %2744 = vmatpush.msra.mxu0 %v2708
        %2745 = vmatpush.msra.mxu0 %v2706
        %2746 = vmatmul.f32.gmra.mxu0 %v2725
        %v2747 = vpop.f32.mrf.mxu0
        %v2748 = vadd.f32 %v2717, %v2747
        %2749 = vmatmul.f32.gmra.mxu0 %v2728
        %v2750 = vpop.f32.mrf.mxu0
        %v2751 = vadd.f32 %v2722, %v2750
        %2752 = vdwg.mxu0
        %2753 = vmatpush.msra.mxu0 0.0
        %2754 = vmatpush.msra.mxu0 0.0
        %2755 = vmatpush.msra.mxu0 0.0
        %2756 = vmatpush.msra.mxu0 0.0
        %2757 = vmatpush.msra.mxu0 0.0
        %2758 = vmatpush.msra.mxu0 0.0
        %2759 = vmatpush.msra.mxu0 0.0
        %2760 = vmatpush.msra.mxu0 0.0
        %2761 = vmatpush.msra.mxu0 0.0
        %2762 = vmatpush.msra.mxu0 0.0
        %2763 = vmatpush.msra.mxu0 0.0
        %2764 = vmatpush.msra.mxu0 0.0
        %2765 = vmatpush.msra.mxu0 0.0
        %2766 = vmatpush.msra.mxu0 0.0
        %2767 = vmatpush.msra.mxu0 %v2709
        %2768 = vmatpush.msra.mxu0 %v2707
        %2769 = vmatmul.f32.gmra.mxu0 %v2725
        %v2770 = vpop.f32.mrf.mxu0
        %v2771 = vadd.f32 %v2717, %v2770
        %2772 = vmatmul.f32.gmra.mxu0 %v2728
        %v2773 = vpop.f32.mrf.mxu0
        %v2774 = vadd.f32 %v2722, %v2773
        %2775 = vdwg.mxu0
        %v2776 = vadd.f32 %v2748, %v567
        %v2777 = vadd.f32 %v2771, %v596
        %v2778 = vadd.f32 %v2751, %v570
        %v2779 = vadd.f32 %v2774, %v599
        %v2780 = vmax.f32 %v2776, 0.0
        %v2781 = vmax.f32 %v2777, 0.0
        %v2782 = vmax.f32 %v2778, 0.0
        %v2783 = vmax.f32 %v2779, 0.0
        %2784 = vst [vmem:[%s487] sm:$0xff] %v2780
        %2785 = vst [vmem:[%s487 + $0x8] sm:$0xff] %v2781
        %2786 = vst [vmem:[%s487 + $0x10] sm:$0xff] %v2782
        %2787 = vst [vmem:[%s487 + $0x18] sm:$0xff] %v2783
        %s2788 = sand.u32 %s357, 1
        %s2789 = scalar_lea.sflag [#allocation3], %s2788
        %s2790 = sand.u32 %s357, 1
        %s2791 = smul.addr %s2790, 32
        %s2792 = scalar_lea.vmem [#allocation2], %s2791
        // Predicated region
        $region81: #{tpu_custom_call.1} parent=79 // pred_check
          %p2793 = pneg %p367
        $region82: #{tpu_custom_call.1} parent=79 // pred_check_branch
          %2795 = sbr.rel (%p2793) target = $region84
        $region83: #{tpu_custom_call.1} parent=79 // pred_region
          %2797 = vsyncadd %s2789, 0
          %s2798 = smul.addr %s29, 4
          %s2799 = smul.addr %s2798, 8
          %s2800 = scalar_lea.hbm %s15, %s2799
          %s2801 = sshll.u32 %s2792, 4
          %s2802 = int_to_ptr.vmem [resolvable:$true] %s2801
          %s2803 = sshll.u32 %s2800, 4
          %s2804 = int_to_ptr.hbm [resolvable:$true] %s2803
          %2809 = dma.vmem_to_hbm [thread:$0]  %s2802, 512, %s2804, %s2789, 256, 256, 16
        $region84: #{tpu_custom_call.1} parent=79 // pred_fallthru
          _
      $region80: #{tpu_custom_call.1} parent=5 // pred_fallthru
        _
      %p2810 = scmp.le.s32.totalorder 2, %s24
      // Predicated region
      $region85: #{tpu_custom_call.1} parent=5 // pred_check
        %p2811 = pneg %p2810
      $region86: #{tpu_custom_call.1} parent=5 // pred_check_branch
        %2813 = sbr.rel (%p2811) target = $region88
      $region87: #{tpu_custom_call.1} parent=5 // pred_region
        %s2814 = ssub.s32 %s24, 2
        // Predicated region
        $region89: #{tpu_custom_call.1} parent=87 // pred_check
          %p2815 = pneg %p373
        $region90: #{tpu_custom_call.1} parent=87 // pred_check_branch
          %2817 = sbr.rel (%p2815) target = $region92
        $region91: #{tpu_custom_call.1} parent=87 // pred_region
          %s2818 = sand.u32 %s358, 1
          %s2819 = scalar_lea.sflag [#allocation3], %s2818
          %s2820 = sand.u32 %s358, 1
          %s2821 = smul.addr %s2820, 32
          %s2822 = scalar_lea.vmem [#allocation2], %s2821
          %2824 = dma.done %s2819, 512
        $region92: #{tpu_custom_call.1} parent=87 // pred_fallthru
          _
      $region88: #{tpu_custom_call.1} parent=5 // pred_fallthru
        _
    $region6: #{tpu_custom_call.1} parent=1 // loop_footer
      %s28 = sadd.s32 1, %s24
    $region7: #{tpu_custom_call.1} parent=1 // loop_footer_branch
      %23 = sbr.rel target = $region3
    $region8: #{tpu_custom_call.1} parent=1 // loop_exit
      _
    %2825 = vsyncpa [#allocation3], 1
    %s2826 = scalar_lea.sflag [#allocation3], 1
    %2827 = vsyncpa %s2826, 1

</llo_original>
